<compile_context>
chip_gen: v6e
topology: v6e:2x2x1
jax: 0.10.0
libtpu: 0.0.40
codegen_flags: <defaults>
</compile_context>

<pallas_src>
import math

import jax
import jax.numpy as jnp
from jax.experimental import pallas as pl
from jax.experimental.pallas import tpu as pltpu

# ---------------- small BERT-style config ----------------
NUM_MODELS = 3
NUM_LABELS = 3
VOCAB = 100
TYPE_VOCAB = 2
MAX_POS = 16
HIDDEN = 32
NUM_HEADS = 2
HEAD_DIM = HIDDEN // NUM_HEADS
INTERMEDIATE = 64
NUM_LAYERS = 2
LN_EPS = 1e-12
LOGIT_PAD = 128          # lane-dense classifier output width (sliced to NUM_LABELS outside)
LVEC_W = 3 * HIDDEN      # per-layer packed-vector slab width (96)


# ---------------- in-kernel helpers (all f32 elementwise math) ----------------
def _layernorm(x, g, b):
    mu = jnp.mean(x, axis=-1, keepdims=True)
    var = jnp.mean(jnp.square(x - mu), axis=-1, keepdims=True)
    return (x - mu) * jax.lax.rsqrt(var + LN_EPS) * g + b


def _gelu(x):
    # TODO(synk): HF BERT uses exact (erf) GELU; tanh approximation kept for robust
    # Mosaic lowering (numerically ~1e-3 close).
    c = math.sqrt(2.0 / math.pi)
    return 0.5 * x * (1.0 + jnp.tanh(c * (x + 0.044715 * x * x * x)))


# ---------------- fused ensemble kernel (single step, loops unrolled) ----------------
def _ensemble_kernel(emb_ref, mask_ref, wqkv_ref, wo_ref, wi_ref, wf_ref,
                     lvec_ref, pool_w_ref, cls_w_ref, hvec_ref, out_ref):
    mask = mask_ref[...]                                   # (BS, BS) additive mask, f32

    for m in range(NUM_MODELS):                            # fully unrolled: one grid step total
        hv = hvec_ref[m]                                   # (8, 128) per-model vector slab
        eg, eb = hv[0:1, :HIDDEN], hv[1:2, :HIDDEN]        # embedding LayerNorm gamma/beta
        pb, cb = hv[2:3, :HIDDEN], hv[3:4, :]              # pooler bias, classifier bias (128)

        # embeddings LayerNorm (no fake residual); activation stays a live value
        h = _layernorm(emb_ref[m], eg, eb)                 # (BS, H) f32

        for l in range(NUM_LAYERS):
            ml = m * NUM_LAYERS + l
            lv = lvec_ref[ml]                              # (8, 96) per-layer vector slab
            bqkv = lv[0:1, :]                              # packed QKV bias (Q pre-scaled)
            bo = lv[1:2, :HIDDEN]
            g1, b1 = lv[2:3, :HIDDEN], lv[3:4, :HIDDEN]
            bi = lv[4:5, :INTERMEDIATE]
            bf = lv[5:6, :HIDDEN]
            g2, b2 = lv[6:7, :HIDDEN], lv[7:8, :HIDDEN]

            # --- self-attention: packed QKV (bf16 MXU in, f32 acc), no transposes ---
            qkv = jnp.dot(h.astype(jnp.bfloat16), wqkv_ref[ml],
                          preferred_element_type=jnp.float32) + bqkv        # (BS, 3H)

            ctx_heads = []
            for hd in range(NUM_HEADS):
                c0 = hd * HEAD_DIM
                q_h = qkv[:, c0:c0 + HEAD_DIM].astype(jnp.bfloat16)
                k_h = qkv[:, HIDDEN + c0:HIDDEN + c0 + HEAD_DIM].astype(jnp.bfloat16)
                v_h = qkv[:, 2 * HIDDEN + c0:2 * HIDDEN + c0 + HEAD_DIM].astype(jnp.bfloat16)
                # q @ k^T with the transpose folded into the MXU op (no XLU vxpose)
                s = jax.lax.dot_general(q_h, k_h, (((1,), (1,)), ((), ())),
                                        preferred_element_type=jnp.float32) + mask
                s = s - jnp.max(s, axis=-1, keepdims=True)
                p = jnp.exp(s)
                p = p / jnp.sum(p, axis=-1, keepdims=True)                  # exact softmax
                ctx_heads.append(jnp.dot(p.astype(jnp.bfloat16), v_h,
                                         preferred_element_type=jnp.float32))
            # fuse the per-head output projections: one lane-merge + one (BS,H)@(H,H) dot
            ctx = jnp.concatenate(ctx_heads, axis=1)                        # (BS, H)
            attn = jnp.dot(ctx.astype(jnp.bfloat16), wo_ref[ml],
                           preferred_element_type=jnp.float32) + bo
            h1 = _layernorm(attn + h, g1, b1)

            # --- feed-forward ---
            inter = _gelu(jnp.dot(h1.astype(jnp.bfloat16), wi_ref[ml],
                                  preferred_element_type=jnp.float32) + bi)
            ffn = jnp.dot(inter.astype(jnp.bfloat16), wf_ref[ml],
                          preferred_element_type=jnp.float32) + bf
            h = _layernorm(ffn + h1, g2, b2)

        # --- pooler + classifier, lane-dense (BS, 128) write, once per model ---
        pooled = jnp.tanh(jnp.dot(h.astype(jnp.bfloat16), pool_w_ref[m],
                                  preferred_element_type=jnp.float32) + pb)
        out_ref[m] = (jnp.dot(pooled.astype(jnp.bfloat16), cls_w_ref[m],
                              preferred_element_type=jnp.float32) + cb)


# ---------------- parameter construction (deterministic, synthetic) ----------------
def init_bert_params(key):
    ks = iter(jax.random.split(key, 8 + 8 * NUM_LAYERS))

    def nrm(shape):
        return 0.02 * jax.random.normal(next(ks), shape, dtype=jnp.float32)

    params = {
        "word_emb": nrm((VOCAB, HIDDEN)),
        "pos_emb": nrm((MAX_POS, HIDDEN)),
        "type_emb": nrm((TYPE_VOCAB, HIDDEN)),
        "emb_ln_g": jnp.ones((HIDDEN,), jnp.float32),
        "emb_ln_b": jnp.zeros((HIDDEN,), jnp.float32),
        "pool_w": nrm((HIDDEN, HIDDEN)),
        "pool_b": jnp.zeros((HIDDEN,), jnp.float32),
        "cls_w": nrm((HIDDEN, NUM_LABELS)),
        "cls_b": jnp.zeros((NUM_LABELS,), jnp.float32),
        "layers": [],
    }
    for _ in range(NUM_LAYERS):
        params["layers"].append({
            "wq": nrm((HIDDEN, HIDDEN)), "bq": jnp.zeros((HIDDEN,), jnp.float32),
            "wk": nrm((HIDDEN, HIDDEN)), "bk": jnp.zeros((HIDDEN,), jnp.float32),
            "wv": nrm((HIDDEN, HIDDEN)), "bv": jnp.zeros((HIDDEN,), jnp.float32),
            "wo": nrm((HIDDEN, HIDDEN)), "bo": jnp.zeros((HIDDEN,), jnp.float32),
            "ln1_g": jnp.ones((HIDDEN,), jnp.float32),
            "ln1_b": jnp.zeros((HIDDEN,), jnp.float32),
            "wi": nrm((HIDDEN, INTERMEDIATE)), "bi": jnp.zeros((INTERMEDIATE,), jnp.float32),
            "wf": nrm((INTERMEDIATE, HIDDEN)), "bf": jnp.zeros((HIDDEN,), jnp.float32),
            "ln2_g": jnp.ones((HIDDEN,), jnp.float32),
            "ln2_b": jnp.zeros((HIDDEN,), jnp.float32),
        })
    return params


def _row_pad(v, width):
    v = v.reshape(1, -1)
    return jnp.pad(v, ((0, 0), (0, width - v.shape[1])))


def pack_params(all_params):
    """Stack per-model / per-layer weights for the fused kernel:
       * QKV packed into (H, 3H) with 1/sqrt(dh) folded into the Q columns,
       * matmul weights stored in bf16 (MXU-native, half the DMA bytes),
       * the per-layer 1-row vectors packed into one (M*L, 8, 96) slab and the
         per-model vectors into one (M, 8, 128) slab,
       * classifier padded to a lane-dense 128-wide output."""
    scale = 1.0 / math.sqrt(HEAD_DIM)

    def stack_m(fn):
        return jnp.stack([fn(p) for p in all_params], axis=0)

    def stack_ml(fn):
        return jnp.stack([fn(lyr) for p in all_params for lyr in p["layers"]], axis=0)

    def layer_vec_slab(l):
        rows = [
            _row_pad(jnp.concatenate([l["bq"] * scale, l["bk"], l["bv"]]), LVEC_W),  # 0 bqkv
            _row_pad(l["bo"], LVEC_W),      # 1
            _row_pad(l["ln1_g"], LVEC_W),   # 2
            _row_pad(l["ln1_b"], LVEC_W),   # 3
            _row_pad(l["bi"], LVEC_W),      # 4
            _row_pad(l["bf"], LVEC_W),      # 5
            _row_pad(l["ln2_g"], LVEC_W),   # 6
            _row_pad(l["ln2_b"], LVEC_W),   # 7
        ]
        return jnp.concatenate(rows, axis=0)                                # (8, 96)

    def model_vec_slab(p):
        rows = [
            _row_pad(p["emb_ln_g"], LOGIT_PAD),   # 0
            _row_pad(p["emb_ln_b"], LOGIT_PAD),   # 1
            _row_pad(p["pool_b"], LOGIT_PAD),     # 2
            _row_pad(p["cls_b"], LOGIT_PAD),      # 3
        ] + [jnp.zeros((1, LOGIT_PAD), jnp.float32)] * 4
        return jnp.concatenate(rows, axis=0)                                # (8, 128)

    bf16 = jnp.bfloat16
    return {
        # embedding tables stay f32 for the JAX-side gather
        "word_emb": stack_m(lambda p: p["word_emb"]),                       # (M, V, H)
        "pos_emb": stack_m(lambda p: p["pos_emb"]),                         # (M, P, H)
        "type_emb": stack_m(lambda p: p["type_emb"]),                       # (M, T, H)
        # matmul weights (bf16), model*layer flattened on the leading axis
        "wqkv": stack_ml(lambda l: jnp.concatenate(
            [l["wq"] * scale, l["wk"], l["wv"]], axis=1)).astype(bf16),     # (M*L, H, 3H)
        "wo": stack_ml(lambda l: l["wo"]).astype(bf16),                     # (M*L, H, H)
        "wi": stack_ml(lambda l: l["wi"]).astype(bf16),                     # (M*L, H, I)
        "wf": stack_ml(lambda l: l["wf"]).astype(bf16),                     # (M*L, I, H)
        "pool_w": stack_m(lambda p: p["pool_w"]).astype(bf16),              # (M, H, H)
        "cls_w": stack_m(lambda p: jnp.pad(
            p["cls_w"], ((0, 0), (0, LOGIT_PAD - NUM_LABELS)))).astype(bf16),  # (M, H, 128)
        # packed bias / LayerNorm vector slabs (f32 elementwise math)
        "layer_vecs": stack_ml(layer_vec_slab),                             # (M*L, 8, 96)
        "head_vecs": stack_m(model_vec_slab),                               # (M, 8, 128)
    }


# ---------------- ensemble forward: ONE grid-less pallas_call for everything ----------------
def multiple_bert_forward(packed, input_ids, attention_mask=None, token_type_ids=None):
    """MultipleBERT.forward with inference=False (as set in __init__): returns the list
    of per-model logits (loss / hidden_states / attentions stay empty)."""
    B, S = input_ids.shape
    BS = B * S
    if attention_mask is None:
        attention_mask = jnp.ones((B, S), jnp.int32)
    if token_type_ids is None:
        token_type_ids = jnp.zeros((B, S), jnp.int32)

    # Glue: embedding-table lookups + additive mask construction (everything else in-kernel).
    pos_ids = jnp.arange(S)
    emb = (packed["word_emb"][:, input_ids, :]
           + packed["pos_emb"][:, pos_ids, :][:, None]
           + packed["type_emb"][:, token_type_ids, :]).reshape(NUM_MODELS, BS, HIDDEN)

    # HF additive padding mask (-10000) + block-diagonal batch-separation mask.
    pad = ((1.0 - attention_mask.astype(jnp.float32)) * -10000.0).reshape(BS)
    batch_of = jnp.arange(BS) // S
    same_batch = batch_of[:, None] == batch_of[None, :]
    big_mask = jnp.where(same_batch, pad[None, :], -1e9).astype(jnp.float32)   # (BS, BS)

    # No grid: one kernel step; every operand is a whole-array VMEM-resident block
    # (total footprint < 0.5 MiB), DMA'd exactly once, output written once per model.
    out = pl.pallas_call(
        _ensemble_kernel,
        out_shape=jax.ShapeDtypeStruct((NUM_MODELS, BS, LOGIT_PAD), jnp.float32),
        compiler_params=pltpu.CompilerParams(vmem_limit_bytes=32 * 1024 * 1024),
    )(emb, big_mask,
      packed["wqkv"], packed["wo"], packed["wi"], packed["wf"],
      packed["layer_vecs"], packed["pool_w"], packed["cls_w"], packed["head_vecs"])

    # CLS rows (row b*S) and un-pad the classifier width.
    logits = out[:, ::S, :NUM_LABELS]                                          # (M, B, NUM_LABELS)
    return [logits[i] for i in range(NUM_MODELS)]


# ---------------- main ----------------
if __name__ == "__main__":
    root = jax.random.PRNGKey(0)
    k_models, k_ids, _ = jax.random.split(root, 3)

    # three independent deterministic parameter sets (ensemble members)
    model_keys = jax.random.split(k_models, NUM_MODELS)
    all_params = [init_bert_params(mk) for mk in model_keys]
    packed = pack_params(all_params)

    B, S = 2, 8
    input_ids = jax.random.randint(k_ids, (B, S), 0, VOCAB, dtype=jnp.int32)
    attention_mask = jnp.ones((B, S), jnp.int32)
    token_type_ids = jnp.zeros((B, S), jnp.int32)

    fwd = jax.jit(multiple_bert_forward)
    all_logits = fwd(packed, input_ids, attention_mask, token_type_ids)
    all_logits = jax.block_until_ready(all_logits)

    assert len(all_logits) == NUM_MODELS
    for lg in all_logits:
        assert lg.shape == (B, NUM_LABELS)
        assert bool(jnp.all(jnp.isfinite(lg)))

    print("KERNEL_OK")
</pallas_src>

<mosaic_0001>
module attributes {stable_mosaic.version = 11 : i64} {
  func.func @_ensemble_kernel(%arg0: memref<3x16x32xf32, #tpu.memory_space<vmem>>, %arg1: memref<16x16xf32, #tpu.memory_space<vmem>>, %arg2: memref<6x32x96xbf16, #tpu.memory_space<vmem>>, %arg3: memref<6x32x32xbf16, #tpu.memory_space<vmem>>, %arg4: memref<6x32x64xbf16, #tpu.memory_space<vmem>>, %arg5: memref<6x64x32xbf16, #tpu.memory_space<vmem>>, %arg6: memref<6x8x96xf32, #tpu.memory_space<vmem>>, %arg7: memref<3x32x32xbf16, #tpu.memory_space<vmem>>, %arg8: memref<3x32x128xbf16, #tpu.memory_space<vmem>>, %arg9: memref<3x8x128xf32, #tpu.memory_space<vmem>>, %arg10: memref<3x16x128xf32, #tpu.memory_space<vmem>>) attributes {dimension_semantics = [], scalar_prefetch = 0 : i64, scratch_operands = 0 : i64, tpu.core_type = #tpu.core_type<tc>} {
    %c0 = arith.constant 0 : index
    %c0_0 = arith.constant 0 : index
    %0 = vector.load %arg1[%c0, %c0_0] : memref<16x16xf32, #tpu.memory_space<vmem>>, vector<16x16xf32>
    %c0_1 = arith.constant 0 : index
    %c0_2 = arith.constant 0 : index
    %c0_3 = arith.constant 0 : index
    %1 = vector.load %arg9[%c0_1, %c0_2, %c0_3] : memref<3x8x128xf32, #tpu.memory_space<vmem>>, vector<1x8x128xf32>
    %2 = vector.shape_cast %1 : vector<1x8x128xf32> to vector<8x128xf32>
    %3 = vector.extract_strided_slice %2 {offsets = [0, 0], sizes = [1, 32], strides = [1, 1]} : vector<8x128xf32> to vector<1x32xf32>
    %4 = vector.extract_strided_slice %2 {offsets = [1, 0], sizes = [1, 32], strides = [1, 1]} : vector<8x128xf32> to vector<1x32xf32>
    %5 = vector.extract_strided_slice %2 {offsets = [2, 0], sizes = [1, 32], strides = [1, 1]} : vector<8x128xf32> to vector<1x32xf32>
    %6 = vector.extract_strided_slice %2 {offsets = [3, 0], sizes = [1, 128], strides = [1, 1]} : vector<8x128xf32> to vector<1x128xf32>
    %c0_4 = arith.constant 0 : index
    %c0_5 = arith.constant 0 : index
    %c0_6 = arith.constant 0 : index
    %7 = vector.load %arg0[%c0_4, %c0_5, %c0_6] : memref<3x16x32xf32, #tpu.memory_space<vmem>>, vector<1x16x32xf32>
    %8 = vector.shape_cast %7 : vector<1x16x32xf32> to vector<16x32xf32>
    %cst = arith.constant dense<0.000000e+00> : vector<16xf32>
    %9 = vector.multi_reduction <add>, %8, %cst [1] : vector<16x32xf32> to vector<16xf32>
    %10 = vector.shape_cast %9 : vector<16xf32> to vector<16x1xf32>
    %cst_7 = arith.constant 3.200000e+01 : f32
    %11 = vector.broadcast %cst_7 : f32 to vector<16x1xf32>
    %12 = arith.divf %10, %11 : vector<16x1xf32>
    %13 = vector.broadcast %12 : vector<16x1xf32> to vector<16x32xf32>
    %14 = arith.subf %8, %13 : vector<16x32xf32>
    %15 = arith.mulf %14, %14 : vector<16x32xf32>
    %cst_8 = arith.constant dense<0.000000e+00> : vector<16xf32>
    %16 = vector.multi_reduction <add>, %15, %cst_8 [1] : vector<16x32xf32> to vector<16xf32>
    %17 = vector.shape_cast %16 : vector<16xf32> to vector<16x1xf32>
    %cst_9 = arith.constant 3.200000e+01 : f32
    %18 = vector.broadcast %cst_9 : f32 to vector<16x1xf32>
    %19 = arith.divf %17, %18 : vector<16x1xf32>
    %20 = vector.broadcast %12 : vector<16x1xf32> to vector<16x32xf32>
    %21 = arith.subf %8, %20 : vector<16x32xf32>
    %cst_10 = arith.constant 9.99999996E-13 : f32
    %22 = vector.broadcast %cst_10 : f32 to vector<16x1xf32>
    %23 = arith.addf %19, %22 : vector<16x1xf32>
    %24 = math.rsqrt %23 : vector<16x1xf32>
    %25 = vector.broadcast %24 : vector<16x1xf32> to vector<16x32xf32>
    %26 = arith.mulf %21, %25 : vector<16x32xf32>
    %27 = vector.broadcast %3 : vector<1x32xf32> to vector<16x32xf32>
    %28 = arith.mulf %26, %27 : vector<16x32xf32>
    %29 = vector.broadcast %4 : vector<1x32xf32> to vector<16x32xf32>
    %30 = arith.addf %28, %29 : vector<16x32xf32>
    %c0_11 = arith.constant 0 : index
    %c0_12 = arith.constant 0 : index
    %c0_13 = arith.constant 0 : index
    %31 = vector.load %arg6[%c0_11, %c0_12, %c0_13] : memref<6x8x96xf32, #tpu.memory_space<vmem>>, vector<1x8x96xf32>
    %32 = vector.shape_cast %31 : vector<1x8x96xf32> to vector<8x96xf32>
    %33 = vector.extract_strided_slice %32 {offsets = [0, 0], sizes = [1, 96], strides = [1, 1]} : vector<8x96xf32> to vector<1x96xf32>
    %34 = vector.extract_strided_slice %32 {offsets = [1, 0], sizes = [1, 32], strides = [1, 1]} : vector<8x96xf32> to vector<1x32xf32>
    %35 = vector.extract_strided_slice %32 {offsets = [2, 0], sizes = [1, 32], strides = [1, 1]} : vector<8x96xf32> to vector<1x32xf32>
    %36 = vector.extract_strided_slice %32 {offsets = [3, 0], sizes = [1, 32], strides = [1, 1]} : vector<8x96xf32> to vector<1x32xf32>
    %37 = vector.extract_strided_slice %32 {offsets = [4, 0], sizes = [1, 64], strides = [1, 1]} : vector<8x96xf32> to vector<1x64xf32>
    %38 = vector.extract_strided_slice %32 {offsets = [5, 0], sizes = [1, 32], strides = [1, 1]} : vector<8x96xf32> to vector<1x32xf32>
    %39 = vector.extract_strided_slice %32 {offsets = [6, 0], sizes = [1, 32], strides = [1, 1]} : vector<8x96xf32> to vector<1x32xf32>
    %40 = vector.extract_strided_slice %32 {offsets = [7, 0], sizes = [1, 32], strides = [1, 1]} : vector<8x96xf32> to vector<1x32xf32>
    %41 = arith.truncf %30 : vector<16x32xf32> to vector<16x32xbf16>
    %c0_14 = arith.constant 0 : index
    %c0_15 = arith.constant 0 : index
    %c0_16 = arith.constant 0 : index
    %42 = vector.load %arg2[%c0_14, %c0_15, %c0_16] : memref<6x32x96xbf16, #tpu.memory_space<vmem>>, vector<1x32x96xbf16>
    %43 = vector.shape_cast %42 : vector<1x32x96xbf16> to vector<32x96xbf16>
    %cst_17 = arith.constant dense<0.000000e+00> : vector<16x96xf32>
    %44 = tpu.matmul %41, %43, %cst_17 {dimension_numbers = #tpu.dot_dimension_numbers<[1], [0], [0], [1], [0, 0, 1, 1], [], []>} : vector<16x32xbf16>, vector<32x96xbf16>, vector<16x96xf32> -> vector<16x96xf32>
    %45 = vector.broadcast %33 : vector<1x96xf32> to vector<16x96xf32>
    %46 = arith.addf %44, %45 : vector<16x96xf32>
    %47 = vector.extract_strided_slice %46 {offsets = [0, 0], sizes = [16, 16], strides = [1, 1]} : vector<16x96xf32> to vector<16x16xf32>
    %48 = arith.truncf %47 : vector<16x16xf32> to vector<16x16xbf16>
    %49 = vector.extract_strided_slice %46 {offsets = [0, 32], sizes = [16, 16], strides = [1, 1]} : vector<16x96xf32> to vector<16x16xf32>
    %50 = arith.truncf %49 : vector<16x16xf32> to vector<16x16xbf16>
    %51 = vector.extract_strided_slice %46 {offsets = [0, 64], sizes = [16, 16], strides = [1, 1]} : vector<16x96xf32> to vector<16x16xf32>
    %52 = arith.truncf %51 : vector<16x16xf32> to vector<16x16xbf16>
    %cst_18 = arith.constant dense<0.000000e+00> : vector<16x16xf32>
    %53 = tpu.matmul %48, %50, %cst_18 {dimension_numbers = #tpu.dot_dimension_numbers<[1], [1], [0], [0], [0, 0, 1, 0], [], []>} : vector<16x16xbf16>, vector<16x16xbf16>, vector<16x16xf32> -> vector<16x16xf32>
    %54 = arith.addf %53, %0 : vector<16x16xf32>
    %cst_19 = arith.constant dense<0xFF800000> : vector<16xf32>
    %55 = vector.multi_reduction <maximumf>, %54, %cst_19 [1] : vector<16x16xf32> to vector<16xf32>
    %56 = vector.shape_cast %55 : vector<16xf32> to vector<16x1xf32>
    %57 = vector.broadcast %56 : vector<16x1xf32> to vector<16x16xf32>
    %58 = arith.subf %54, %57 : vector<16x16xf32>
    %59 = math.exp %58 : vector<16x16xf32>
    %cst_20 = arith.constant dense<0.000000e+00> : vector<16xf32>
    %60 = vector.multi_reduction <add>, %59, %cst_20 [1] : vector<16x16xf32> to vector<16xf32>
    %61 = vector.shape_cast %60 : vector<16xf32> to vector<16x1xf32>
    %62 = vector.broadcast %61 : vector<16x1xf32> to vector<16x16xf32>
    %63 = arith.divf %59, %62 : vector<16x16xf32>
    %64 = arith.truncf %63 : vector<16x16xf32> to vector<16x16xbf16>
    %cst_21 = arith.constant dense<0.000000e+00> : vector<16x16xf32>
    %65 = tpu.matmul %64, %52, %cst_21 {dimension_numbers = #tpu.dot_dimension_numbers<[1], [0], [0], [1], [0, 0, 1, 1], [], []>} : vector<16x16xbf16>, vector<16x16xbf16>, vector<16x16xf32> -> vector<16x16xf32>
    %66 = vector.extract_strided_slice %46 {offsets = [0, 16], sizes = [16, 16], strides = [1, 1]} : vector<16x96xf32> to vector<16x16xf32>
    %67 = arith.truncf %66 : vector<16x16xf32> to vector<16x16xbf16>
    %68 = vector.extract_strided_slice %46 {offsets = [0, 48], sizes = [16, 16], strides = [1, 1]} : vector<16x96xf32> to vector<16x16xf32>
    %69 = arith.truncf %68 : vector<16x16xf32> to vector<16x16xbf16>
    %70 = vector.extract_strided_slice %46 {offsets = [0, 80], sizes = [16, 16], strides = [1, 1]} : vector<16x96xf32> to vector<16x16xf32>
    %71 = arith.truncf %70 : vector<16x16xf32> to vector<16x16xbf16>
    %cst_22 = arith.constant dense<0.000000e+00> : vector<16x16xf32>
    %72 = tpu.matmul %67, %69, %cst_22 {dimension_numbers = #tpu.dot_dimension_numbers<[1], [1], [0], [0], [0, 0, 1, 0], [], []>} : vector<16x16xbf16>, vector<16x16xbf16>, vector<16x16xf32> -> vector<16x16xf32>
    %73 = arith.addf %72, %0 : vector<16x16xf32>
    %cst_23 = arith.constant dense<0xFF800000> : vector<16xf32>
    %74 = vector.multi_reduction <maximumf>, %73, %cst_23 [1] : vector<16x16xf32> to vector<16xf32>
    %75 = vector.shape_cast %74 : vector<16xf32> to vector<16x1xf32>
    %76 = vector.broadcast %75 : vector<16x1xf32> to vector<16x16xf32>
    %77 = arith.subf %73, %76 : vector<16x16xf32>
    %78 = math.exp %77 : vector<16x16xf32>
    %cst_24 = arith.constant dense<0.000000e+00> : vector<16xf32>
    %79 = vector.multi_reduction <add>, %78, %cst_24 [1] : vector<16x16xf32> to vector<16xf32>
    %80 = vector.shape_cast %79 : vector<16xf32> to vector<16x1xf32>
    %81 = vector.broadcast %80 : vector<16x1xf32> to vector<16x16xf32>
    %82 = arith.divf %78, %81 : vector<16x16xf32>
    %83 = arith.truncf %82 : vector<16x16xf32> to vector<16x16xbf16>
    %cst_25 = arith.constant dense<0.000000e+00> : vector<16x16xf32>
    %84 = tpu.matmul %83, %71, %cst_25 {dimension_numbers = #tpu.dot_dimension_numbers<[1], [0], [0], [1], [0, 0, 1, 1], [], []>} : vector<16x16xbf16>, vector<16x16xbf16>, vector<16x16xf32> -> vector<16x16xf32>
    %85 = tpu.concatenate %65, %84 in 1 : vector<16x16xf32>, vector<16x16xf32> -> vector<16x32xf32>
    %86 = arith.truncf %85 : vector<16x32xf32> to vector<16x32xbf16>
    %c0_26 = arith.constant 0 : index
    %c0_27 = arith.constant 0 : index
    %c0_28 = arith.constant 0 : index
    %87 = vector.load %arg3[%c0_26, %c0_27, %c0_28] : memref<6x32x32xbf16, #tpu.memory_space<vmem>>, vector<1x32x32xbf16>
    %88 = vector.shape_cast %87 : vector<1x32x32xbf16> to vector<32x32xbf16>
    %cst_29 = arith.constant dense<0.000000e+00> : vector<16x32xf32>
    %89 = tpu.matmul %86, %88, %cst_29 {dimension_numbers = #tpu.dot_dimension_numbers<[1], [0], [0], [1], [0, 0, 1, 1], [], []>} : vector<16x32xbf16>, vector<32x32xbf16>, vector<16x32xf32> -> vector<16x32xf32>
    %90 = vector.broadcast %34 : vector<1x32xf32> to vector<16x32xf32>
    %91 = arith.addf %89, %90 : vector<16x32xf32>
    %92 = arith.addf %91, %30 : vector<16x32xf32>
    %cst_30 = arith.constant dense<0.000000e+00> : vector<16xf32>
    %93 = vector.multi_reduction <add>, %92, %cst_30 [1] : vector<16x32xf32> to vector<16xf32>
    %94 = vector.shape_cast %93 : vector<16xf32> to vector<16x1xf32>
    %cst_31 = arith.constant 3.200000e+01 : f32
    %95 = vector.broadcast %cst_31 : f32 to vector<16x1xf32>
    %96 = arith.divf %94, %95 : vector<16x1xf32>
    %97 = vector.broadcast %96 : vector<16x1xf32> to vector<16x32xf32>
    %98 = arith.subf %92, %97 : vector<16x32xf32>
    %99 = arith.mulf %98, %98 : vector<16x32xf32>
    %cst_32 = arith.constant dense<0.000000e+00> : vector<16xf32>
    %100 = vector.multi_reduction <add>, %99, %cst_32 [1] : vector<16x32xf32> to vector<16xf32>
    %101 = vector.shape_cast %100 : vector<16xf32> to vector<16x1xf32>
    %cst_33 = arith.constant 3.200000e+01 : f32
    %102 = vector.broadcast %cst_33 : f32 to vector<16x1xf32>
    %103 = arith.divf %101, %102 : vector<16x1xf32>
    %104 = vector.broadcast %96 : vector<16x1xf32> to vector<16x32xf32>
    %105 = arith.subf %92, %104 : vector<16x32xf32>
    %cst_34 = arith.constant 9.99999996E-13 : f32
    %106 = vector.broadcast %cst_34 : f32 to vector<16x1xf32>
    %107 = arith.addf %103, %106 : vector<16x1xf32>
    %108 = math.rsqrt %107 : vector<16x1xf32>
    %109 = vector.broadcast %108 : vector<16x1xf32> to vector<16x32xf32>
    %110 = arith.mulf %105, %109 : vector<16x32xf32>
    %111 = vector.broadcast %35 : vector<1x32xf32> to vector<16x32xf32>
    %112 = arith.mulf %110, %111 : vector<16x32xf32>
    %113 = vector.broadcast %36 : vector<1x32xf32> to vector<16x32xf32>
    %114 = arith.addf %112, %113 : vector<16x32xf32>
    %115 = arith.truncf %114 : vector<16x32xf32> to vector<16x32xbf16>
    %c0_35 = arith.constant 0 : index
    %c0_36 = arith.constant 0 : index
    %c0_37 = arith.constant 0 : index
    %116 = vector.load %arg4[%c0_35, %c0_36, %c0_37] : memref<6x32x64xbf16, #tpu.memory_space<vmem>>, vector<1x32x64xbf16>
    %117 = vector.shape_cast %116 : vector<1x32x64xbf16> to vector<32x64xbf16>
    %cst_38 = arith.constant dense<0.000000e+00> : vector<16x64xf32>
    %118 = tpu.matmul %115, %117, %cst_38 {dimension_numbers = #tpu.dot_dimension_numbers<[1], [0], [0], [1], [0, 0, 1, 1], [], []>} : vector<16x32xbf16>, vector<32x64xbf16>, vector<16x64xf32> -> vector<16x64xf32>
    %119 = vector.broadcast %37 : vector<1x64xf32> to vector<16x64xf32>
    %120 = arith.addf %118, %119 : vector<16x64xf32>
    %cst_39 = arith.constant 5.000000e-01 : f32
    %121 = vector.broadcast %cst_39 : f32 to vector<16x64xf32>
    %122 = arith.mulf %121, %120 : vector<16x64xf32>
    %cst_40 = arith.constant 4.471500e-02 : f32
    %123 = vector.broadcast %cst_40 : f32 to vector<16x64xf32>
    %124 = arith.mulf %123, %120 : vector<16x64xf32>
    %125 = arith.mulf %124, %120 : vector<16x64xf32>
    %126 = arith.mulf %125, %120 : vector<16x64xf32>
    %127 = arith.addf %120, %126 : vector<16x64xf32>
    %cst_41 = arith.constant 0.797884583 : f32
    %128 = vector.broadcast %cst_41 : f32 to vector<16x64xf32>
    %129 = arith.mulf %128, %127 : vector<16x64xf32>
    %130 = math.tanh %129 : vector<16x64xf32>
    %cst_42 = arith.constant 1.000000e+00 : f32
    %131 = vector.broadcast %cst_42 : f32 to vector<16x64xf32>
    %132 = arith.addf %131, %130 : vector<16x64xf32>
    %133 = arith.mulf %122, %132 : vector<16x64xf32>
    %134 = arith.truncf %133 : vector<16x64xf32> to vector<16x64xbf16>
    %c0_43 = arith.constant 0 : index
    %c0_44 = arith.constant 0 : index
    %c0_45 = arith.constant 0 : index
    %135 = vector.load %arg5[%c0_43, %c0_44, %c0_45] : memref<6x64x32xbf16, #tpu.memory_space<vmem>>, vector<1x64x32xbf16>
    %136 = vector.shape_cast %135 : vector<1x64x32xbf16> to vector<64x32xbf16>
    %cst_46 = arith.constant dense<0.000000e+00> : vector<16x32xf32>
    %137 = tpu.matmul %134, %136, %cst_46 {dimension_numbers = #tpu.dot_dimension_numbers<[1], [0], [0], [1], [0, 0, 1, 1], [], []>} : vector<16x64xbf16>, vector<64x32xbf16>, vector<16x32xf32> -> vector<16x32xf32>
    %138 = vector.broadcast %38 : vector<1x32xf32> to vector<16x32xf32>
    %139 = arith.addf %137, %138 : vector<16x32xf32>
    %140 = arith.addf %139, %114 : vector<16x32xf32>
    %cst_47 = arith.constant dense<0.000000e+00> : vector<16xf32>
    %141 = vector.multi_reduction <add>, %140, %cst_47 [1] : vector<16x32xf32> to vector<16xf32>
    %142 = vector.shape_cast %141 : vector<16xf32> to vector<16x1xf32>
    %cst_48 = arith.constant 3.200000e+01 : f32
    %143 = vector.broadcast %cst_48 : f32 to vector<16x1xf32>
    %144 = arith.divf %142, %143 : vector<16x1xf32>
    %145 = vector.broadcast %144 : vector<16x1xf32> to vector<16x32xf32>
    %146 = arith.subf %140, %145 : vector<16x32xf32>
    %147 = arith.mulf %146, %146 : vector<16x32xf32>
    %cst_49 = arith.constant dense<0.000000e+00> : vector<16xf32>
    %148 = vector.multi_reduction <add>, %147, %cst_49 [1] : vector<16x32xf32> to vector<16xf32>
    %149 = vector.shape_cast %148 : vector<16xf32> to vector<16x1xf32>
    %cst_50 = arith.constant 3.200000e+01 : f32
    %150 = vector.broadcast %cst_50 : f32 to vector<16x1xf32>
    %151 = arith.divf %149, %150 : vector<16x1xf32>
    %152 = vector.broadcast %144 : vector<16x1xf32> to vector<16x32xf32>
    %153 = arith.subf %140, %152 : vector<16x32xf32>
    %cst_51 = arith.constant 9.99999996E-13 : f32
    %154 = vector.broadcast %cst_51 : f32 to vector<16x1xf32>
    %155 = arith.addf %151, %154 : vector<16x1xf32>
    %156 = math.rsqrt %155 : vector<16x1xf32>
    %157 = vector.broadcast %156 : vector<16x1xf32> to vector<16x32xf32>
    %158 = arith.mulf %153, %157 : vector<16x32xf32>
    %159 = vector.broadcast %39 : vector<1x32xf32> to vector<16x32xf32>
    %160 = arith.mulf %158, %159 : vector<16x32xf32>
    %161 = vector.broadcast %40 : vector<1x32xf32> to vector<16x32xf32>
    %162 = arith.addf %160, %161 : vector<16x32xf32>
    %c1 = arith.constant 1 : index
    %c0_52 = arith.constant 0 : index
    %c0_53 = arith.constant 0 : index
    %163 = vector.load %arg6[%c1, %c0_52, %c0_53] : memref<6x8x96xf32, #tpu.memory_space<vmem>>, vector<1x8x96xf32>
    %164 = vector.shape_cast %163 : vector<1x8x96xf32> to vector<8x96xf32>
    %165 = vector.extract_strided_slice %164 {offsets = [0, 0], sizes = [1, 96], strides = [1, 1]} : vector<8x96xf32> to vector<1x96xf32>
    %166 = vector.extract_strided_slice %164 {offsets = [1, 0], sizes = [1, 32], strides = [1, 1]} : vector<8x96xf32> to vector<1x32xf32>
    %167 = vector.extract_strided_slice %164 {offsets = [2, 0], sizes = [1, 32], strides = [1, 1]} : vector<8x96xf32> to vector<1x32xf32>
    %168 = vector.extract_strided_slice %164 {offsets = [3, 0], sizes = [1, 32], strides = [1, 1]} : vector<8x96xf32> to vector<1x32xf32>
    %169 = vector.extract_strided_slice %164 {offsets = [4, 0], sizes = [1, 64], strides = [1, 1]} : vector<8x96xf32> to vector<1x64xf32>
    %170 = vector.extract_strided_slice %164 {offsets = [5, 0], sizes = [1, 32], strides = [1, 1]} : vector<8x96xf32> to vector<1x32xf32>
    %171 = vector.extract_strided_slice %164 {offsets = [6, 0], sizes = [1, 32], strides = [1, 1]} : vector<8x96xf32> to vector<1x32xf32>
    %172 = vector.extract_strided_slice %164 {offsets = [7, 0], sizes = [1, 32], strides = [1, 1]} : vector<8x96xf32> to vector<1x32xf32>
    %173 = arith.truncf %162 : vector<16x32xf32> to vector<16x32xbf16>
    %c1_54 = arith.constant 1 : index
    %c0_55 = arith.constant 0 : index
    %c0_56 = arith.constant 0 : index
    %174 = vector.load %arg2[%c1_54, %c0_55, %c0_56] : memref<6x32x96xbf16, #tpu.memory_space<vmem>>, vector<1x32x96xbf16>
    %175 = vector.shape_cast %174 : vector<1x32x96xbf16> to vector<32x96xbf16>
    %cst_57 = arith.constant dense<0.000000e+00> : vector<16x96xf32>
    %176 = tpu.matmul %173, %175, %cst_57 {dimension_numbers = #tpu.dot_dimension_numbers<[1], [0], [0], [1], [0, 0, 1, 1], [], []>} : vector<16x32xbf16>, vector<32x96xbf16>, vector<16x96xf32> -> vector<16x96xf32>
    %177 = vector.broadcast %165 : vector<1x96xf32> to vector<16x96xf32>
    %178 = arith.addf %176, %177 : vector<16x96xf32>
    %179 = vector.extract_strided_slice %178 {offsets = [0, 0], sizes = [16, 16], strides = [1, 1]} : vector<16x96xf32> to vector<16x16xf32>
    %180 = arith.truncf %179 : vector<16x16xf32> to vector<16x16xbf16>
    %181 = vector.extract_strided_slice %178 {offsets = [0, 32], sizes = [16, 16], strides = [1, 1]} : vector<16x96xf32> to vector<16x16xf32>
    %182 = arith.truncf %181 : vector<16x16xf32> to vector<16x16xbf16>
    %183 = vector.extract_strided_slice %178 {offsets = [0, 64], sizes = [16, 16], strides = [1, 1]} : vector<16x96xf32> to vector<16x16xf32>
    %184 = arith.truncf %183 : vector<16x16xf32> to vector<16x16xbf16>
    %cst_58 = arith.constant dense<0.000000e+00> : vector<16x16xf32>
    %185 = tpu.matmul %180, %182, %cst_58 {dimension_numbers = #tpu.dot_dimension_numbers<[1], [1], [0], [0], [0, 0, 1, 0], [], []>} : vector<16x16xbf16>, vector<16x16xbf16>, vector<16x16xf32> -> vector<16x16xf32>
    %186 = arith.addf %185, %0 : vector<16x16xf32>
    %cst_59 = arith.constant dense<0xFF800000> : vector<16xf32>
    %187 = vector.multi_reduction <maximumf>, %186, %cst_59 [1] : vector<16x16xf32> to vector<16xf32>
    %188 = vector.shape_cast %187 : vector<16xf32> to vector<16x1xf32>
    %189 = vector.broadcast %188 : vector<16x1xf32> to vector<16x16xf32>
    %190 = arith.subf %186, %189 : vector<16x16xf32>
    %191 = math.exp %190 : vector<16x16xf32>
    %cst_60 = arith.constant dense<0.000000e+00> : vector<16xf32>
    %192 = vector.multi_reduction <add>, %191, %cst_60 [1] : vector<16x16xf32> to vector<16xf32>
    %193 = vector.shape_cast %192 : vector<16xf32> to vector<16x1xf32>
    %194 = vector.broadcast %193 : vector<16x1xf32> to vector<16x16xf32>
    %195 = arith.divf %191, %194 : vector<16x16xf32>
    %196 = arith.truncf %195 : vector<16x16xf32> to vector<16x16xbf16>
    %cst_61 = arith.constant dense<0.000000e+00> : vector<16x16xf32>
    %197 = tpu.matmul %196, %184, %cst_61 {dimension_numbers = #tpu.dot_dimension_numbers<[1], [0], [0], [1], [0, 0, 1, 1], [], []>} : vector<16x16xbf16>, vector<16x16xbf16>, vector<16x16xf32> -> vector<16x16xf32>
    %198 = vector.extract_strided_slice %178 {offsets = [0, 16], sizes = [16, 16], strides = [1, 1]} : vector<16x96xf32> to vector<16x16xf32>
    %199 = arith.truncf %198 : vector<16x16xf32> to vector<16x16xbf16>
    %200 = vector.extract_strided_slice %178 {offsets = [0, 48], sizes = [16, 16], strides = [1, 1]} : vector<16x96xf32> to vector<16x16xf32>
    %201 = arith.truncf %200 : vector<16x16xf32> to vector<16x16xbf16>
    %202 = vector.extract_strided_slice %178 {offsets = [0, 80], sizes = [16, 16], strides = [1, 1]} : vector<16x96xf32> to vector<16x16xf32>
    %203 = arith.truncf %202 : vector<16x16xf32> to vector<16x16xbf16>
    %cst_62 = arith.constant dense<0.000000e+00> : vector<16x16xf32>
    %204 = tpu.matmul %199, %201, %cst_62 {dimension_numbers = #tpu.dot_dimension_numbers<[1], [1], [0], [0], [0, 0, 1, 0], [], []>} : vector<16x16xbf16>, vector<16x16xbf16>, vector<16x16xf32> -> vector<16x16xf32>
    %205 = arith.addf %204, %0 : vector<16x16xf32>
    %cst_63 = arith.constant dense<0xFF800000> : vector<16xf32>
    %206 = vector.multi_reduction <maximumf>, %205, %cst_63 [1] : vector<16x16xf32> to vector<16xf32>
    %207 = vector.shape_cast %206 : vector<16xf32> to vector<16x1xf32>
    %208 = vector.broadcast %207 : vector<16x1xf32> to vector<16x16xf32>
    %209 = arith.subf %205, %208 : vector<16x16xf32>
    %210 = math.exp %209 : vector<16x16xf32>
    %cst_64 = arith.constant dense<0.000000e+00> : vector<16xf32>
    %211 = vector.multi_reduction <add>, %210, %cst_64 [1] : vector<16x16xf32> to vector<16xf32>
    %212 = vector.shape_cast %211 : vector<16xf32> to vector<16x1xf32>
    %213 = vector.broadcast %212 : vector<16x1xf32> to vector<16x16xf32>
    %214 = arith.divf %210, %213 : vector<16x16xf32>
    %215 = arith.truncf %214 : vector<16x16xf32> to vector<16x16xbf16>
    %cst_65 = arith.constant dense<0.000000e+00> : vector<16x16xf32>
    %216 = tpu.matmul %215, %203, %cst_65 {dimension_numbers = #tpu.dot_dimension_numbers<[1], [0], [0], [1], [0, 0, 1, 1], [], []>} : vector<16x16xbf16>, vector<16x16xbf16>, vector<16x16xf32> -> vector<16x16xf32>
    %217 = tpu.concatenate %197, %216 in 1 : vector<16x16xf32>, vector<16x16xf32> -> vector<16x32xf32>
    %218 = arith.truncf %217 : vector<16x32xf32> to vector<16x32xbf16>
    %c1_66 = arith.constant 1 : index
    %c0_67 = arith.constant 0 : index
    %c0_68 = arith.constant 0 : index
    %219 = vector.load %arg3[%c1_66, %c0_67, %c0_68] : memref<6x32x32xbf16, #tpu.memory_space<vmem>>, vector<1x32x32xbf16>
    %220 = vector.shape_cast %219 : vector<1x32x32xbf16> to vector<32x32xbf16>
    %cst_69 = arith.constant dense<0.000000e+00> : vector<16x32xf32>
    %221 = tpu.matmul %218, %220, %cst_69 {dimension_numbers = #tpu.dot_dimension_numbers<[1], [0], [0], [1], [0, 0, 1, 1], [], []>} : vector<16x32xbf16>, vector<32x32xbf16>, vector<16x32xf32> -> vector<16x32xf32>
    %222 = vector.broadcast %166 : vector<1x32xf32> to vector<16x32xf32>
    %223 = arith.addf %221, %222 : vector<16x32xf32>
    %224 = arith.addf %223, %162 : vector<16x32xf32>
    %cst_70 = arith.constant dense<0.000000e+00> : vector<16xf32>
    %225 = vector.multi_reduction <add>, %224, %cst_70 [1] : vector<16x32xf32> to vector<16xf32>
    %226 = vector.shape_cast %225 : vector<16xf32> to vector<16x1xf32>
    %cst_71 = arith.constant 3.200000e+01 : f32
    %227 = vector.broadcast %cst_71 : f32 to vector<16x1xf32>
    %228 = arith.divf %226, %227 : vector<16x1xf32>
    %229 = vector.broadcast %228 : vector<16x1xf32> to vector<16x32xf32>
    %230 = arith.subf %224, %229 : vector<16x32xf32>
    %231 = arith.mulf %230, %230 : vector<16x32xf32>
    %cst_72 = arith.constant dense<0.000000e+00> : vector<16xf32>
    %232 = vector.multi_reduction <add>, %231, %cst_72 [1] : vector<16x32xf32> to vector<16xf32>
    %233 = vector.shape_cast %232 : vector<16xf32> to vector<16x1xf32>
    %cst_73 = arith.constant 3.200000e+01 : f32
    %234 = vector.broadcast %cst_73 : f32 to vector<16x1xf32>
    %235 = arith.divf %233, %234 : vector<16x1xf32>
    %236 = vector.broadcast %228 : vector<16x1xf32> to vector<16x32xf32>
    %237 = arith.subf %224, %236 : vector<16x32xf32>
    %cst_74 = arith.constant 9.99999996E-13 : f32
    %238 = vector.broadcast %cst_74 : f32 to vector<16x1xf32>
    %239 = arith.addf %235, %238 : vector<16x1xf32>
    %240 = math.rsqrt %239 : vector<16x1xf32>
    %241 = vector.broadcast %240 : vector<16x1xf32> to vector<16x32xf32>
    %242 = arith.mulf %237, %241 : vector<16x32xf32>
    %243 = vector.broadcast %167 : vector<1x32xf32> to vector<16x32xf32>
    %244 = arith.mulf %242, %243 : vector<16x32xf32>
    %245 = vector.broadcast %168 : vector<1x32xf32> to vector<16x32xf32>
    %246 = arith.addf %244, %245 : vector<16x32xf32>
    %247 = arith.truncf %246 : vector<16x32xf32> to vector<16x32xbf16>
    %c1_75 = arith.constant 1 : index
    %c0_76 = arith.constant 0 : index
    %c0_77 = arith.constant 0 : index
    %248 = vector.load %arg4[%c1_75, %c0_76, %c0_77] : memref<6x32x64xbf16, #tpu.memory_space<vmem>>, vector<1x32x64xbf16>
    %249 = vector.shape_cast %248 : vector<1x32x64xbf16> to vector<32x64xbf16>
    %cst_78 = arith.constant dense<0.000000e+00> : vector<16x64xf32>
    %250 = tpu.matmul %247, %249, %cst_78 {dimension_numbers = #tpu.dot_dimension_numbers<[1], [0], [0], [1], [0, 0, 1, 1], [], []>} : vector<16x32xbf16>, vector<32x64xbf16>, vector<16x64xf32> -> vector<16x64xf32>
    %251 = vector.broadcast %169 : vector<1x64xf32> to vector<16x64xf32>
    %252 = arith.addf %250, %251 : vector<16x64xf32>
    %cst_79 = arith.constant 5.000000e-01 : f32
    %253 = vector.broadcast %cst_79 : f32 to vector<16x64xf32>
    %254 = arith.mulf %253, %252 : vector<16x64xf32>
    %cst_80 = arith.constant 4.471500e-02 : f32
    %255 = vector.broadcast %cst_80 : f32 to vector<16x64xf32>
    %256 = arith.mulf %255, %252 : vector<16x64xf32>
    %257 = arith.mulf %256, %252 : vector<16x64xf32>
    %258 = arith.mulf %257, %252 : vector<16x64xf32>
    %259 = arith.addf %252, %258 : vector<16x64xf32>
    %cst_81 = arith.constant 0.797884583 : f32
    %260 = vector.broadcast %cst_81 : f32 to vector<16x64xf32>
    %261 = arith.mulf %260, %259 : vector<16x64xf32>
    %262 = math.tanh %261 : vector<16x64xf32>
    %cst_82 = arith.constant 1.000000e+00 : f32
    %263 = vector.broadcast %cst_82 : f32 to vector<16x64xf32>
    %264 = arith.addf %263, %262 : vector<16x64xf32>
    %265 = arith.mulf %254, %264 : vector<16x64xf32>
    %266 = arith.truncf %265 : vector<16x64xf32> to vector<16x64xbf16>
    %c1_83 = arith.constant 1 : index
    %c0_84 = arith.constant 0 : index
    %c0_85 = arith.constant 0 : index
    %267 = vector.load %arg5[%c1_83, %c0_84, %c0_85] : memref<6x64x32xbf16, #tpu.memory_space<vmem>>, vector<1x64x32xbf16>
    %268 = vector.shape_cast %267 : vector<1x64x32xbf16> to vector<64x32xbf16>
    %cst_86 = arith.constant dense<0.000000e+00> : vector<16x32xf32>
    %269 = tpu.matmul %266, %268, %cst_86 {dimension_numbers = #tpu.dot_dimension_numbers<[1], [0], [0], [1], [0, 0, 1, 1], [], []>} : vector<16x64xbf16>, vector<64x32xbf16>, vector<16x32xf32> -> vector<16x32xf32>
    %270 = vector.broadcast %170 : vector<1x32xf32> to vector<16x32xf32>
    %271 = arith.addf %269, %270 : vector<16x32xf32>
    %272 = arith.addf %271, %246 : vector<16x32xf32>
    %cst_87 = arith.constant dense<0.000000e+00> : vector<16xf32>
    %273 = vector.multi_reduction <add>, %272, %cst_87 [1] : vector<16x32xf32> to vector<16xf32>
    %274 = vector.shape_cast %273 : vector<16xf32> to vector<16x1xf32>
    %cst_88 = arith.constant 3.200000e+01 : f32
    %275 = vector.broadcast %cst_88 : f32 to vector<16x1xf32>
    %276 = arith.divf %274, %275 : vector<16x1xf32>
    %277 = vector.broadcast %276 : vector<16x1xf32> to vector<16x32xf32>
    %278 = arith.subf %272, %277 : vector<16x32xf32>
    %279 = arith.mulf %278, %278 : vector<16x32xf32>
    %cst_89 = arith.constant dense<0.000000e+00> : vector<16xf32>
    %280 = vector.multi_reduction <add>, %279, %cst_89 [1] : vector<16x32xf32> to vector<16xf32>
    %281 = vector.shape_cast %280 : vector<16xf32> to vector<16x1xf32>
    %cst_90 = arith.constant 3.200000e+01 : f32
    %282 = vector.broadcast %cst_90 : f32 to vector<16x1xf32>
    %283 = arith.divf %281, %282 : vector<16x1xf32>
    %284 = vector.broadcast %276 : vector<16x1xf32> to vector<16x32xf32>
    %285 = arith.subf %272, %284 : vector<16x32xf32>
    %cst_91 = arith.constant 9.99999996E-13 : f32
    %286 = vector.broadcast %cst_91 : f32 to vector<16x1xf32>
    %287 = arith.addf %283, %286 : vector<16x1xf32>
    %288 = math.rsqrt %287 : vector<16x1xf32>
    %289 = vector.broadcast %288 : vector<16x1xf32> to vector<16x32xf32>
    %290 = arith.mulf %285, %289 : vector<16x32xf32>
    %291 = vector.broadcast %171 : vector<1x32xf32> to vector<16x32xf32>
    %292 = arith.mulf %290, %291 : vector<16x32xf32>
    %293 = vector.broadcast %172 : vector<1x32xf32> to vector<16x32xf32>
    %294 = arith.addf %292, %293 : vector<16x32xf32>
    %295 = arith.truncf %294 : vector<16x32xf32> to vector<16x32xbf16>
    %c0_92 = arith.constant 0 : index
    %c0_93 = arith.constant 0 : index
    %c0_94 = arith.constant 0 : index
    %296 = vector.load %arg7[%c0_92, %c0_93, %c0_94] : memref<3x32x32xbf16, #tpu.memory_space<vmem>>, vector<1x32x32xbf16>
    %297 = vector.shape_cast %296 : vector<1x32x32xbf16> to vector<32x32xbf16>
    %cst_95 = arith.constant dense<0.000000e+00> : vector<16x32xf32>
    %298 = tpu.matmul %295, %297, %cst_95 {dimension_numbers = #tpu.dot_dimension_numbers<[1], [0], [0], [1], [0, 0, 1, 1], [], []>} : vector<16x32xbf16>, vector<32x32xbf16>, vector<16x32xf32> -> vector<16x32xf32>
    %299 = vector.broadcast %5 : vector<1x32xf32> to vector<16x32xf32>
    %300 = arith.addf %298, %299 : vector<16x32xf32>
    %301 = math.tanh %300 : vector<16x32xf32>
    %302 = arith.truncf %301 : vector<16x32xf32> to vector<16x32xbf16>
    %c0_96 = arith.constant 0 : index
    %c0_97 = arith.constant 0 : index
    %c0_98 = arith.constant 0 : index
    %303 = vector.load %arg8[%c0_96, %c0_97, %c0_98] : memref<3x32x128xbf16, #tpu.memory_space<vmem>>, vector<1x32x128xbf16>
    %304 = vector.shape_cast %303 : vector<1x32x128xbf16> to vector<32x128xbf16>
    %cst_99 = arith.constant dense<0.000000e+00> : vector<16x128xf32>
    %305 = tpu.matmul %302, %304, %cst_99 {dimension_numbers = #tpu.dot_dimension_numbers<[1], [0], [0], [1], [0, 0, 1, 1], [], []>} : vector<16x32xbf16>, vector<32x128xbf16>, vector<16x128xf32> -> vector<16x128xf32>
    %306 = vector.broadcast %6 : vector<1x128xf32> to vector<16x128xf32>
    %307 = arith.addf %305, %306 : vector<16x128xf32>
    %c0_100 = arith.constant 0 : index
    %c0_101 = arith.constant 0 : index
    %c0_102 = arith.constant 0 : index
    %308 = vector.load %arg10[%c0_100, %c0_101, %c0_102] : memref<3x16x128xf32, #tpu.memory_space<vmem>>, vector<1x16x128xf32>
    %309 = vector.shape_cast %308 : vector<1x16x128xf32> to vector<16x128xf32>
    %310 = vector.shape_cast %307 : vector<16x128xf32> to vector<1x16x128xf32>
    tpu.vector_store %arg10[%c0_100, %c0_101, %c0_102], %310 {strides = array<i32>} : memref<3x16x128xf32, #tpu.memory_space<vmem>>, vector<1x16x128xf32>,
    %c1_103 = arith.constant 1 : index
    %c0_104 = arith.constant 0 : index
    %c0_105 = arith.constant 0 : index
    %311 = vector.load %arg9[%c1_103, %c0_104, %c0_105] : memref<3x8x128xf32, #tpu.memory_space<vmem>>, vector<1x8x128xf32>
    %312 = vector.shape_cast %311 : vector<1x8x128xf32> to vector<8x128xf32>
    %313 = vector.extract_strided_slice %312 {offsets = [0, 0], sizes = [1, 32], strides = [1, 1]} : vector<8x128xf32> to vector<1x32xf32>
    %314 = vector.extract_strided_slice %312 {offsets = [1, 0], sizes = [1, 32], strides = [1, 1]} : vector<8x128xf32> to vector<1x32xf32>
    %315 = vector.extract_strided_slice %312 {offsets = [2, 0], sizes = [1, 32], strides = [1, 1]} : vector<8x128xf32> to vector<1x32xf32>
    %316 = vector.extract_strided_slice %312 {offsets = [3, 0], sizes = [1, 128], strides = [1, 1]} : vector<8x128xf32> to vector<1x128xf32>
    %c1_106 = arith.constant 1 : index
    %c0_107 = arith.constant 0 : index
    %c0_108 = arith.constant 0 : index
    %317 = vector.load %arg0[%c1_106, %c0_107, %c0_108] : memref<3x16x32xf32, #tpu.memory_space<vmem>>, vector<1x16x32xf32>
    %318 = vector.shape_cast %317 : vector<1x16x32xf32> to vector<16x32xf32>
    %cst_109 = arith.constant dense<0.000000e+00> : vector<16xf32>
    %319 = vector.multi_reduction <add>, %318, %cst_109 [1] : vector<16x32xf32> to vector<16xf32>
    %320 = vector.shape_cast %319 : vector<16xf32> to vector<16x1xf32>
    %cst_110 = arith.constant 3.200000e+01 : f32
    %321 = vector.broadcast %cst_110 : f32 to vector<16x1xf32>
    %322 = arith.divf %320, %321 : vector<16x1xf32>
    %323 = vector.broadcast %322 : vector<16x1xf32> to vector<16x32xf32>
    %324 = arith.subf %318, %323 : vector<16x32xf32>
    %325 = arith.mulf %324, %324 : vector<16x32xf32>
    %cst_111 = arith.constant dense<0.000000e+00> : vector<16xf32>
    %326 = vector.multi_reduction <add>, %325, %cst_111 [1] : vector<16x32xf32> to vector<16xf32>
    %327 = vector.shape_cast %326 : vector<16xf32> to vector<16x1xf32>
    %cst_112 = arith.constant 3.200000e+01 : f32
    %328 = vector.broadcast %cst_112 : f32 to vector<16x1xf32>
    %329 = arith.divf %327, %328 : vector<16x1xf32>
    %330 = vector.broadcast %322 : vector<16x1xf32> to vector<16x32xf32>
    %331 = arith.subf %318, %330 : vector<16x32xf32>
    %cst_113 = arith.constant 9.99999996E-13 : f32
    %332 = vector.broadcast %cst_113 : f32 to vector<16x1xf32>
    %333 = arith.addf %329, %332 : vector<16x1xf32>
    %334 = math.rsqrt %333 : vector<16x1xf32>
    %335 = vector.broadcast %334 : vector<16x1xf32> to vector<16x32xf32>
    %336 = arith.mulf %331, %335 : vector<16x32xf32>
    %337 = vector.broadcast %313 : vector<1x32xf32> to vector<16x32xf32>
    %338 = arith.mulf %336, %337 : vector<16x32xf32>
    %339 = vector.broadcast %314 : vector<1x32xf32> to vector<16x32xf32>
    %340 = arith.addf %338, %339 : vector<16x32xf32>
    %c2 = arith.constant 2 : index
    %c0_114 = arith.constant 0 : index
    %c0_115 = arith.constant 0 : index
    %341 = vector.load %arg6[%c2, %c0_114, %c0_115] : memref<6x8x96xf32, #tpu.memory_space<vmem>>, vector<1x8x96xf32>
    %342 = vector.shape_cast %341 : vector<1x8x96xf32> to vector<8x96xf32>
    %343 = vector.extract_strided_slice %342 {offsets = [0, 0], sizes = [1, 96], strides = [1, 1]} : vector<8x96xf32> to vector<1x96xf32>
    %344 = vector.extract_strided_slice %342 {offsets = [1, 0], sizes = [1, 32], strides = [1, 1]} : vector<8x96xf32> to vector<1x32xf32>
    %345 = vector.extract_strided_slice %342 {offsets = [2, 0], sizes = [1, 32], strides = [1, 1]} : vector<8x96xf32> to vector<1x32xf32>
    %346 = vector.extract_strided_slice %342 {offsets = [3, 0], sizes = [1, 32], strides = [1, 1]} : vector<8x96xf32> to vector<1x32xf32>
    %347 = vector.extract_strided_slice %342 {offsets = [4, 0], sizes = [1, 64], strides = [1, 1]} : vector<8x96xf32> to vector<1x64xf32>
    %348 = vector.extract_strided_slice %342 {offsets = [5, 0], sizes = [1, 32], strides = [1, 1]} : vector<8x96xf32> to vector<1x32xf32>
    %349 = vector.extract_strided_slice %342 {offsets = [6, 0], sizes = [1, 32], strides = [1, 1]} : vector<8x96xf32> to vector<1x32xf32>
    %350 = vector.extract_strided_slice %342 {offsets = [7, 0], sizes = [1, 32], strides = [1, 1]} : vector<8x96xf32> to vector<1x32xf32>
    %351 = arith.truncf %340 : vector<16x32xf32> to vector<16x32xbf16>
    %c2_116 = arith.constant 2 : index
    %c0_117 = arith.constant 0 : index
    %c0_118 = arith.constant 0 : index
    %352 = vector.load %arg2[%c2_116, %c0_117, %c0_118] : memref<6x32x96xbf16, #tpu.memory_space<vmem>>, vector<1x32x96xbf16>
    %353 = vector.shape_cast %352 : vector<1x32x96xbf16> to vector<32x96xbf16>
    %cst_119 = arith.constant dense<0.000000e+00> : vector<16x96xf32>
    %354 = tpu.matmul %351, %353, %cst_119 {dimension_numbers = #tpu.dot_dimension_numbers<[1], [0], [0], [1], [0, 0, 1, 1], [], []>} : vector<16x32xbf16>, vector<32x96xbf16>, vector<16x96xf32> -> vector<16x96xf32>
    %355 = vector.broadcast %343 : vector<1x96xf32> to vector<16x96xf32>
    %356 = arith.addf %354, %355 : vector<16x96xf32>
    %357 = vector.extract_strided_slice %356 {offsets = [0, 0], sizes = [16, 16], strides = [1, 1]} : vector<16x96xf32> to vector<16x16xf32>
    %358 = arith.truncf %357 : vector<16x16xf32> to vector<16x16xbf16>
    %359 = vector.extract_strided_slice %356 {offsets = [0, 32], sizes = [16, 16], strides = [1, 1]} : vector<16x96xf32> to vector<16x16xf32>
    %360 = arith.truncf %359 : vector<16x16xf32> to vector<16x16xbf16>
    %361 = vector.extract_strided_slice %356 {offsets = [0, 64], sizes = [16, 16], strides = [1, 1]} : vector<16x96xf32> to vector<16x16xf32>
    %362 = arith.truncf %361 : vector<16x16xf32> to vector<16x16xbf16>
    %cst_120 = arith.constant dense<0.000000e+00> : vector<16x16xf32>
    %363 = tpu.matmul %358, %360, %cst_120 {dimension_numbers = #tpu.dot_dimension_numbers<[1], [1], [0], [0], [0, 0, 1, 0], [], []>} : vector<16x16xbf16>, vector<16x16xbf16>, vector<16x16xf32> -> vector<16x16xf32>
    %364 = arith.addf %363, %0 : vector<16x16xf32>
    %cst_121 = arith.constant dense<0xFF800000> : vector<16xf32>
    %365 = vector.multi_reduction <maximumf>, %364, %cst_121 [1] : vector<16x16xf32> to vector<16xf32>
    %366 = vector.shape_cast %365 : vector<16xf32> to vector<16x1xf32>
    %367 = vector.broadcast %366 : vector<16x1xf32> to vector<16x16xf32>
    %368 = arith.subf %364, %367 : vector<16x16xf32>
    %369 = math.exp %368 : vector<16x16xf32>
    %cst_122 = arith.constant dense<0.000000e+00> : vector<16xf32>
    %370 = vector.multi_reduction <add>, %369, %cst_122 [1] : vector<16x16xf32> to vector<16xf32>
    %371 = vector.shape_cast %370 : vector<16xf32> to vector<16x1xf32>
    %372 = vector.broadcast %371 : vector<16x1xf32> to vector<16x16xf32>
    %373 = arith.divf %369, %372 : vector<16x16xf32>
    %374 = arith.truncf %373 : vector<16x16xf32> to vector<16x16xbf16>
    %cst_123 = arith.constant dense<0.000000e+00> : vector<16x16xf32>
    %375 = tpu.matmul %374, %362, %cst_123 {dimension_numbers = #tpu.dot_dimension_numbers<[1], [0], [0], [1], [0, 0, 1, 1], [], []>} : vector<16x16xbf16>, vector<16x16xbf16>, vector<16x16xf32> -> vector<16x16xf32>
    %376 = vector.extract_strided_slice %356 {offsets = [0, 16], sizes = [16, 16], strides = [1, 1]} : vector<16x96xf32> to vector<16x16xf32>
    %377 = arith.truncf %376 : vector<16x16xf32> to vector<16x16xbf16>
    %378 = vector.extract_strided_slice %356 {offsets = [0, 48], sizes = [16, 16], strides = [1, 1]} : vector<16x96xf32> to vector<16x16xf32>
    %379 = arith.truncf %378 : vector<16x16xf32> to vector<16x16xbf16>
    %380 = vector.extract_strided_slice %356 {offsets = [0, 80], sizes = [16, 16], strides = [1, 1]} : vector<16x96xf32> to vector<16x16xf32>
    %381 = arith.truncf %380 : vector<16x16xf32> to vector<16x16xbf16>
    %cst_124 = arith.constant dense<0.000000e+00> : vector<16x16xf32>
    %382 = tpu.matmul %377, %379, %cst_124 {dimension_numbers = #tpu.dot_dimension_numbers<[1], [1], [0], [0], [0, 0, 1, 0], [], []>} : vector<16x16xbf16>, vector<16x16xbf16>, vector<16x16xf32> -> vector<16x16xf32>
    %383 = arith.addf %382, %0 : vector<16x16xf32>
    %cst_125 = arith.constant dense<0xFF800000> : vector<16xf32>
    %384 = vector.multi_reduction <maximumf>, %383, %cst_125 [1] : vector<16x16xf32> to vector<16xf32>
    %385 = vector.shape_cast %384 : vector<16xf32> to vector<16x1xf32>
    %386 = vector.broadcast %385 : vector<16x1xf32> to vector<16x16xf32>
    %387 = arith.subf %383, %386 : vector<16x16xf32>
    %388 = math.exp %387 : vector<16x16xf32>
    %cst_126 = arith.constant dense<0.000000e+00> : vector<16xf32>
    %389 = vector.multi_reduction <add>, %388, %cst_126 [1] : vector<16x16xf32> to vector<16xf32>
    %390 = vector.shape_cast %389 : vector<16xf32> to vector<16x1xf32>
    %391 = vector.broadcast %390 : vector<16x1xf32> to vector<16x16xf32>
    %392 = arith.divf %388, %391 : vector<16x16xf32>
    %393 = arith.truncf %392 : vector<16x16xf32> to vector<16x16xbf16>
    %cst_127 = arith.constant dense<0.000000e+00> : vector<16x16xf32>
    %394 = tpu.matmul %393, %381, %cst_127 {dimension_numbers = #tpu.dot_dimension_numbers<[1], [0], [0], [1], [0, 0, 1, 1], [], []>} : vector<16x16xbf16>, vector<16x16xbf16>, vector<16x16xf32> -> vector<16x16xf32>
    %395 = tpu.concatenate %375, %394 in 1 : vector<16x16xf32>, vector<16x16xf32> -> vector<16x32xf32>
    %396 = arith.truncf %395 : vector<16x32xf32> to vector<16x32xbf16>
    %c2_128 = arith.constant 2 : index
    %c0_129 = arith.constant 0 : index
    %c0_130 = arith.constant 0 : index
    %397 = vector.load %arg3[%c2_128, %c0_129, %c0_130] : memref<6x32x32xbf16, #tpu.memory_space<vmem>>, vector<1x32x32xbf16>
    %398 = vector.shape_cast %397 : vector<1x32x32xbf16> to vector<32x32xbf16>
    %cst_131 = arith.constant dense<0.000000e+00> : vector<16x32xf32>
    %399 = tpu.matmul %396, %398, %cst_131 {dimension_numbers = #tpu.dot_dimension_numbers<[1], [0], [0], [1], [0, 0, 1, 1], [], []>} : vector<16x32xbf16>, vector<32x32xbf16>, vector<16x32xf32> -> vector<16x32xf32>
    %400 = vector.broadcast %344 : vector<1x32xf32> to vector<16x32xf32>
    %401 = arith.addf %399, %400 : vector<16x32xf32>
    %402 = arith.addf %401, %340 : vector<16x32xf32>
    %cst_132 = arith.constant dense<0.000000e+00> : vector<16xf32>
    %403 = vector.multi_reduction <add>, %402, %cst_132 [1] : vector<16x32xf32> to vector<16xf32>
    %404 = vector.shape_cast %403 : vector<16xf32> to vector<16x1xf32>
    %cst_133 = arith.constant 3.200000e+01 : f32
    %405 = vector.broadcast %cst_133 : f32 to vector<16x1xf32>
    %406 = arith.divf %404, %405 : vector<16x1xf32>
    %407 = vector.broadcast %406 : vector<16x1xf32> to vector<16x32xf32>
    %408 = arith.subf %402, %407 : vector<16x32xf32>
    %409 = arith.mulf %408, %408 : vector<16x32xf32>
    %cst_134 = arith.constant dense<0.000000e+00> : vector<16xf32>
    %410 = vector.multi_reduction <add>, %409, %cst_134 [1] : vector<16x32xf32> to vector<16xf32>
    %411 = vector.shape_cast %410 : vector<16xf32> to vector<16x1xf32>
    %cst_135 = arith.constant 3.200000e+01 : f32
    %412 = vector.broadcast %cst_135 : f32 to vector<16x1xf32>
    %413 = arith.divf %411, %412 : vector<16x1xf32>
    %414 = vector.broadcast %406 : vector<16x1xf32> to vector<16x32xf32>
    %415 = arith.subf %402, %414 : vector<16x32xf32>
    %cst_136 = arith.constant 9.99999996E-13 : f32
    %416 = vector.broadcast %cst_136 : f32 to vector<16x1xf32>
    %417 = arith.addf %413, %416 : vector<16x1xf32>
    %418 = math.rsqrt %417 : vector<16x1xf32>
    %419 = vector.broadcast %418 : vector<16x1xf32> to vector<16x32xf32>
    %420 = arith.mulf %415, %419 : vector<16x32xf32>
    %421 = vector.broadcast %345 : vector<1x32xf32> to vector<16x32xf32>
    %422 = arith.mulf %420, %421 : vector<16x32xf32>
    %423 = vector.broadcast %346 : vector<1x32xf32> to vector<16x32xf32>
    %424 = arith.addf %422, %423 : vector<16x32xf32>
    %425 = arith.truncf %424 : vector<16x32xf32> to vector<16x32xbf16>
    %c2_137 = arith.constant 2 : index
    %c0_138 = arith.constant 0 : index
    %c0_139 = arith.constant 0 : index
    %426 = vector.load %arg4[%c2_137, %c0_138, %c0_139] : memref<6x32x64xbf16, #tpu.memory_space<vmem>>, vector<1x32x64xbf16>
    %427 = vector.shape_cast %426 : vector<1x32x64xbf16> to vector<32x64xbf16>
    %cst_140 = arith.constant dense<0.000000e+00> : vector<16x64xf32>
    %428 = tpu.matmul %425, %427, %cst_140 {dimension_numbers = #tpu.dot_dimension_numbers<[1], [0], [0], [1], [0, 0, 1, 1], [], []>} : vector<16x32xbf16>, vector<32x64xbf16>, vector<16x64xf32> -> vector<16x64xf32>
    %429 = vector.broadcast %347 : vector<1x64xf32> to vector<16x64xf32>
    %430 = arith.addf %428, %429 : vector<16x64xf32>
    %cst_141 = arith.constant 5.000000e-01 : f32
    %431 = vector.broadcast %cst_141 : f32 to vector<16x64xf32>
    %432 = arith.mulf %431, %430 : vector<16x64xf32>
    %cst_142 = arith.constant 4.471500e-02 : f32
    %433 = vector.broadcast %cst_142 : f32 to vector<16x64xf32>
    %434 = arith.mulf %433, %430 : vector<16x64xf32>
    %435 = arith.mulf %434, %430 : vector<16x64xf32>
    %436 = arith.mulf %435, %430 : vector<16x64xf32>
    %437 = arith.addf %430, %436 : vector<16x64xf32>
    %cst_143 = arith.constant 0.797884583 : f32
    %438 = vector.broadcast %cst_143 : f32 to vector<16x64xf32>
    %439 = arith.mulf %438, %437 : vector<16x64xf32>
    %440 = math.tanh %439 : vector<16x64xf32>
    %cst_144 = arith.constant 1.000000e+00 : f32
    %441 = vector.broadcast %cst_144 : f32 to vector<16x64xf32>
    %442 = arith.addf %441, %440 : vector<16x64xf32>
    %443 = arith.mulf %432, %442 : vector<16x64xf32>
    %444 = arith.truncf %443 : vector<16x64xf32> to vector<16x64xbf16>
    %c2_145 = arith.constant 2 : index
    %c0_146 = arith.constant 0 : index
    %c0_147 = arith.constant 0 : index
    %445 = vector.load %arg5[%c2_145, %c0_146, %c0_147] : memref<6x64x32xbf16, #tpu.memory_space<vmem>>, vector<1x64x32xbf16>
    %446 = vector.shape_cast %445 : vector<1x64x32xbf16> to vector<64x32xbf16>
    %cst_148 = arith.constant dense<0.000000e+00> : vector<16x32xf32>
    %447 = tpu.matmul %444, %446, %cst_148 {dimension_numbers = #tpu.dot_dimension_numbers<[1], [0], [0], [1], [0, 0, 1, 1], [], []>} : vector<16x64xbf16>, vector<64x32xbf16>, vector<16x32xf32> -> vector<16x32xf32>
    %448 = vector.broadcast %348 : vector<1x32xf32> to vector<16x32xf32>
    %449 = arith.addf %447, %448 : vector<16x32xf32>
    %450 = arith.addf %449, %424 : vector<16x32xf32>
    %cst_149 = arith.constant dense<0.000000e+00> : vector<16xf32>
    %451 = vector.multi_reduction <add>, %450, %cst_149 [1] : vector<16x32xf32> to vector<16xf32>
    %452 = vector.shape_cast %451 : vector<16xf32> to vector<16x1xf32>
    %cst_150 = arith.constant 3.200000e+01 : f32
    %453 = vector.broadcast %cst_150 : f32 to vector<16x1xf32>
    %454 = arith.divf %452, %453 : vector<16x1xf32>
    %455 = vector.broadcast %454 : vector<16x1xf32> to vector<16x32xf32>
    %456 = arith.subf %450, %455 : vector<16x32xf32>
    %457 = arith.mulf %456, %456 : vector<16x32xf32>
    %cst_151 = arith.constant dense<0.000000e+00> : vector<16xf32>
    %458 = vector.multi_reduction <add>, %457, %cst_151 [1] : vector<16x32xf32> to vector<16xf32>
    %459 = vector.shape_cast %458 : vector<16xf32> to vector<16x1xf32>
    %cst_152 = arith.constant 3.200000e+01 : f32
    %460 = vector.broadcast %cst_152 : f32 to vector<16x1xf32>
    %461 = arith.divf %459, %460 : vector<16x1xf32>
    %462 = vector.broadcast %454 : vector<16x1xf32> to vector<16x32xf32>
    %463 = arith.subf %450, %462 : vector<16x32xf32>
    %cst_153 = arith.constant 9.99999996E-13 : f32
    %464 = vector.broadcast %cst_153 : f32 to vector<16x1xf32>
    %465 = arith.addf %461, %464 : vector<16x1xf32>
    %466 = math.rsqrt %465 : vector<16x1xf32>
    %467 = vector.broadcast %466 : vector<16x1xf32> to vector<16x32xf32>
    %468 = arith.mulf %463, %467 : vector<16x32xf32>
    %469 = vector.broadcast %349 : vector<1x32xf32> to vector<16x32xf32>
    %470 = arith.mulf %468, %469 : vector<16x32xf32>
    %471 = vector.broadcast %350 : vector<1x32xf32> to vector<16x32xf32>
    %472 = arith.addf %470, %471 : vector<16x32xf32>
    %c3 = arith.constant 3 : index
    %c0_154 = arith.constant 0 : index
    %c0_155 = arith.constant 0 : index
    %473 = vector.load %arg6[%c3, %c0_154, %c0_155] : memref<6x8x96xf32, #tpu.memory_space<vmem>>, vector<1x8x96xf32>
    %474 = vector.shape_cast %473 : vector<1x8x96xf32> to vector<8x96xf32>
    %475 = vector.extract_strided_slice %474 {offsets = [0, 0], sizes = [1, 96], strides = [1, 1]} : vector<8x96xf32> to vector<1x96xf32>
    %476 = vector.extract_strided_slice %474 {offsets = [1, 0], sizes = [1, 32], strides = [1, 1]} : vector<8x96xf32> to vector<1x32xf32>
    %477 = vector.extract_strided_slice %474 {offsets = [2, 0], sizes = [1, 32], strides = [1, 1]} : vector<8x96xf32> to vector<1x32xf32>
    %478 = vector.extract_strided_slice %474 {offsets = [3, 0], sizes = [1, 32], strides = [1, 1]} : vector<8x96xf32> to vector<1x32xf32>
    %479 = vector.extract_strided_slice %474 {offsets = [4, 0], sizes = [1, 64], strides = [1, 1]} : vector<8x96xf32> to vector<1x64xf32>
    %480 = vector.extract_strided_slice %474 {offsets = [5, 0], sizes = [1, 32], strides = [1, 1]} : vector<8x96xf32> to vector<1x32xf32>
    %481 = vector.extract_strided_slice %474 {offsets = [6, 0], sizes = [1, 32], strides = [1, 1]} : vector<8x96xf32> to vector<1x32xf32>
    %482 = vector.extract_strided_slice %474 {offsets = [7, 0], sizes = [1, 32], strides = [1, 1]} : vector<8x96xf32> to vector<1x32xf32>
    %483 = arith.truncf %472 : vector<16x32xf32> to vector<16x32xbf16>
    %c3_156 = arith.constant 3 : index
    %c0_157 = arith.constant 0 : index
    %c0_158 = arith.constant 0 : index
    %484 = vector.load %arg2[%c3_156, %c0_157, %c0_158] : memref<6x32x96xbf16, #tpu.memory_space<vmem>>, vector<1x32x96xbf16>
    %485 = vector.shape_cast %484 : vector<1x32x96xbf16> to vector<32x96xbf16>
    %cst_159 = arith.constant dense<0.000000e+00> : vector<16x96xf32>
    %486 = tpu.matmul %483, %485, %cst_159 {dimension_numbers = #tpu.dot_dimension_numbers<[1], [0], [0], [1], [0, 0, 1, 1], [], []>} : vector<16x32xbf16>, vector<32x96xbf16>, vector<16x96xf32> -> vector<16x96xf32>
    %487 = vector.broadcast %475 : vector<1x96xf32> to vector<16x96xf32>
    %488 = arith.addf %486, %487 : vector<16x96xf32>
    %489 = vector.extract_strided_slice %488 {offsets = [0, 0], sizes = [16, 16], strides = [1, 1]} : vector<16x96xf32> to vector<16x16xf32>
    %490 = arith.truncf %489 : vector<16x16xf32> to vector<16x16xbf16>
    %491 = vector.extract_strided_slice %488 {offsets = [0, 32], sizes = [16, 16], strides = [1, 1]} : vector<16x96xf32> to vector<16x16xf32>
    %492 = arith.truncf %491 : vector<16x16xf32> to vector<16x16xbf16>
    %493 = vector.extract_strided_slice %488 {offsets = [0, 64], sizes = [16, 16], strides = [1, 1]} : vector<16x96xf32> to vector<16x16xf32>
    %494 = arith.truncf %493 : vector<16x16xf32> to vector<16x16xbf16>
    %cst_160 = arith.constant dense<0.000000e+00> : vector<16x16xf32>
    %495 = tpu.matmul %490, %492, %cst_160 {dimension_numbers = #tpu.dot_dimension_numbers<[1], [1], [0], [0], [0, 0, 1, 0], [], []>} : vector<16x16xbf16>, vector<16x16xbf16>, vector<16x16xf32> -> vector<16x16xf32>
    %496 = arith.addf %495, %0 : vector<16x16xf32>
    %cst_161 = arith.constant dense<0xFF800000> : vector<16xf32>
    %497 = vector.multi_reduction <maximumf>, %496, %cst_161 [1] : vector<16x16xf32> to vector<16xf32>
    %498 = vector.shape_cast %497 : vector<16xf32> to vector<16x1xf32>
    %499 = vector.broadcast %498 : vector<16x1xf32> to vector<16x16xf32>
    %500 = arith.subf %496, %499 : vector<16x16xf32>
    %501 = math.exp %500 : vector<16x16xf32>
    %cst_162 = arith.constant dense<0.000000e+00> : vector<16xf32>
    %502 = vector.multi_reduction <add>, %501, %cst_162 [1] : vector<16x16xf32> to vector<16xf32>
    %503 = vector.shape_cast %502 : vector<16xf32> to vector<16x1xf32>
    %504 = vector.broadcast %503 : vector<16x1xf32> to vector<16x16xf32>
    %505 = arith.divf %501, %504 : vector<16x16xf32>
    %506 = arith.truncf %505 : vector<16x16xf32> to vector<16x16xbf16>
    %cst_163 = arith.constant dense<0.000000e+00> : vector<16x16xf32>
    %507 = tpu.matmul %506, %494, %cst_163 {dimension_numbers = #tpu.dot_dimension_numbers<[1], [0], [0], [1], [0, 0, 1, 1], [], []>} : vector<16x16xbf16>, vector<16x16xbf16>, vector<16x16xf32> -> vector<16x16xf32>
    %508 = vector.extract_strided_slice %488 {offsets = [0, 16], sizes = [16, 16], strides = [1, 1]} : vector<16x96xf32> to vector<16x16xf32>
    %509 = arith.truncf %508 : vector<16x16xf32> to vector<16x16xbf16>
    %510 = vector.extract_strided_slice %488 {offsets = [0, 48], sizes = [16, 16], strides = [1, 1]} : vector<16x96xf32> to vector<16x16xf32>
    %511 = arith.truncf %510 : vector<16x16xf32> to vector<16x16xbf16>
    %512 = vector.extract_strided_slice %488 {offsets = [0, 80], sizes = [16, 16], strides = [1, 1]} : vector<16x96xf32> to vector<16x16xf32>
    %513 = arith.truncf %512 : vector<16x16xf32> to vector<16x16xbf16>
    %cst_164 = arith.constant dense<0.000000e+00> : vector<16x16xf32>
    %514 = tpu.matmul %509, %511, %cst_164 {dimension_numbers = #tpu.dot_dimension_numbers<[1], [1], [0], [0], [0, 0, 1, 0], [], []>} : vector<16x16xbf16>, vector<16x16xbf16>, vector<16x16xf32> -> vector<16x16xf32>
    %515 = arith.addf %514, %0 : vector<16x16xf32>
    %cst_165 = arith.constant dense<0xFF800000> : vector<16xf32>
    %516 = vector.multi_reduction <maximumf>, %515, %cst_165 [1] : vector<16x16xf32> to vector<16xf32>
    %517 = vector.shape_cast %516 : vector<16xf32> to vector<16x1xf32>
    %518 = vector.broadcast %517 : vector<16x1xf32> to vector<16x16xf32>
    %519 = arith.subf %515, %518 : vector<16x16xf32>
    %520 = math.exp %519 : vector<16x16xf32>
    %cst_166 = arith.constant dense<0.000000e+00> : vector<16xf32>
    %521 = vector.multi_reduction <add>, %520, %cst_166 [1] : vector<16x16xf32> to vector<16xf32>
    %522 = vector.shape_cast %521 : vector<16xf32> to vector<16x1xf32>
    %523 = vector.broadcast %522 : vector<16x1xf32> to vector<16x16xf32>
    %524 = arith.divf %520, %523 : vector<16x16xf32>
    %525 = arith.truncf %524 : vector<16x16xf32> to vector<16x16xbf16>
    %cst_167 = arith.constant dense<0.000000e+00> : vector<16x16xf32>
    %526 = tpu.matmul %525, %513, %cst_167 {dimension_numbers = #tpu.dot_dimension_numbers<[1], [0], [0], [1], [0, 0, 1, 1], [], []>} : vector<16x16xbf16>, vector<16x16xbf16>, vector<16x16xf32> -> vector<16x16xf32>
    %527 = tpu.concatenate %507, %526 in 1 : vector<16x16xf32>, vector<16x16xf32> -> vector<16x32xf32>
    %528 = arith.truncf %527 : vector<16x32xf32> to vector<16x32xbf16>
    %c3_168 = arith.constant 3 : index
    %c0_169 = arith.constant 0 : index
    %c0_170 = arith.constant 0 : index
    %529 = vector.load %arg3[%c3_168, %c0_169, %c0_170] : memref<6x32x32xbf16, #tpu.memory_space<vmem>>, vector<1x32x32xbf16>
    %530 = vector.shape_cast %529 : vector<1x32x32xbf16> to vector<32x32xbf16>
    %cst_171 = arith.constant dense<0.000000e+00> : vector<16x32xf32>
    %531 = tpu.matmul %528, %530, %cst_171 {dimension_numbers = #tpu.dot_dimension_numbers<[1], [0], [0], [1], [0, 0, 1, 1], [], []>} : vector<16x32xbf16>, vector<32x32xbf16>, vector<16x32xf32> -> vector<16x32xf32>
    %532 = vector.broadcast %476 : vector<1x32xf32> to vector<16x32xf32>
    %533 = arith.addf %531, %532 : vector<16x32xf32>
    %534 = arith.addf %533, %472 : vector<16x32xf32>
    %cst_172 = arith.constant dense<0.000000e+00> : vector<16xf32>
    %535 = vector.multi_reduction <add>, %534, %cst_172 [1] : vector<16x32xf32> to vector<16xf32>
    %536 = vector.shape_cast %535 : vector<16xf32> to vector<16x1xf32>
    %cst_173 = arith.constant 3.200000e+01 : f32
    %537 = vector.broadcast %cst_173 : f32 to vector<16x1xf32>
    %538 = arith.divf %536, %537 : vector<16x1xf32>
    %539 = vector.broadcast %538 : vector<16x1xf32> to vector<16x32xf32>
    %540 = arith.subf %534, %539 : vector<16x32xf32>
    %541 = arith.mulf %540, %540 : vector<16x32xf32>
    %cst_174 = arith.constant dense<0.000000e+00> : vector<16xf32>
    %542 = vector.multi_reduction <add>, %541, %cst_174 [1] : vector<16x32xf32> to vector<16xf32>
    %543 = vector.shape_cast %542 : vector<16xf32> to vector<16x1xf32>
    %cst_175 = arith.constant 3.200000e+01 : f32
    %544 = vector.broadcast %cst_175 : f32 to vector<16x1xf32>
    %545 = arith.divf %543, %544 : vector<16x1xf32>
    %546 = vector.broadcast %538 : vector<16x1xf32> to vector<16x32xf32>
    %547 = arith.subf %534, %546 : vector<16x32xf32>
    %cst_176 = arith.constant 9.99999996E-13 : f32
    %548 = vector.broadcast %cst_176 : f32 to vector<16x1xf32>
    %549 = arith.addf %545, %548 : vector<16x1xf32>
    %550 = math.rsqrt %549 : vector<16x1xf32>
    %551 = vector.broadcast %550 : vector<16x1xf32> to vector<16x32xf32>
    %552 = arith.mulf %547, %551 : vector<16x32xf32>
    %553 = vector.broadcast %477 : vector<1x32xf32> to vector<16x32xf32>
    %554 = arith.mulf %552, %553 : vector<16x32xf32>
    %555 = vector.broadcast %478 : vector<1x32xf32> to vector<16x32xf32>
    %556 = arith.addf %554, %555 : vector<16x32xf32>
    %557 = arith.truncf %556 : vector<16x32xf32> to vector<16x32xbf16>
    %c3_177 = arith.constant 3 : index
    %c0_178 = arith.constant 0 : index
    %c0_179 = arith.constant 0 : index
    %558 = vector.load %arg4[%c3_177, %c0_178, %c0_179] : memref<6x32x64xbf16, #tpu.memory_space<vmem>>, vector<1x32x64xbf16>
    %559 = vector.shape_cast %558 : vector<1x32x64xbf16> to vector<32x64xbf16>
    %cst_180 = arith.constant dense<0.000000e+00> : vector<16x64xf32>
    %560 = tpu.matmul %557, %559, %cst_180 {dimension_numbers = #tpu.dot_dimension_numbers<[1], [0], [0], [1], [0, 0, 1, 1], [], []>} : vector<16x32xbf16>, vector<32x64xbf16>, vector<16x64xf32> -> vector<16x64xf32>
    %561 = vector.broadcast %479 : vector<1x64xf32> to vector<16x64xf32>
    %562 = arith.addf %560, %561 : vector<16x64xf32>
    %cst_181 = arith.constant 5.000000e-01 : f32
    %563 = vector.broadcast %cst_181 : f32 to vector<16x64xf32>
    %564 = arith.mulf %563, %562 : vector<16x64xf32>
    %cst_182 = arith.constant 4.471500e-02 : f32
    %565 = vector.broadcast %cst_182 : f32 to vector<16x64xf32>
    %566 = arith.mulf %565, %562 : vector<16x64xf32>
    %567 = arith.mulf %566, %562 : vector<16x64xf32>
    %568 = arith.mulf %567, %562 : vector<16x64xf32>
    %569 = arith.addf %562, %568 : vector<16x64xf32>
    %cst_183 = arith.constant 0.797884583 : f32
    %570 = vector.broadcast %cst_183 : f32 to vector<16x64xf32>
    %571 = arith.mulf %570, %569 : vector<16x64xf32>
    %572 = math.tanh %571 : vector<16x64xf32>
    %cst_184 = arith.constant 1.000000e+00 : f32
    %573 = vector.broadcast %cst_184 : f32 to vector<16x64xf32>
    %574 = arith.addf %573, %572 : vector<16x64xf32>
    %575 = arith.mulf %564, %574 : vector<16x64xf32>
    %576 = arith.truncf %575 : vector<16x64xf32> to vector<16x64xbf16>
    %c3_185 = arith.constant 3 : index
    %c0_186 = arith.constant 0 : index
    %c0_187 = arith.constant 0 : index
    %577 = vector.load %arg5[%c3_185, %c0_186, %c0_187] : memref<6x64x32xbf16, #tpu.memory_space<vmem>>, vector<1x64x32xbf16>
    %578 = vector.shape_cast %577 : vector<1x64x32xbf16> to vector<64x32xbf16>
    %cst_188 = arith.constant dense<0.000000e+00> : vector<16x32xf32>
    %579 = tpu.matmul %576, %578, %cst_188 {dimension_numbers = #tpu.dot_dimension_numbers<[1], [0], [0], [1], [0, 0, 1, 1], [], []>} : vector<16x64xbf16>, vector<64x32xbf16>, vector<16x32xf32> -> vector<16x32xf32>
    %580 = vector.broadcast %480 : vector<1x32xf32> to vector<16x32xf32>
    %581 = arith.addf %579, %580 : vector<16x32xf32>
    %582 = arith.addf %581, %556 : vector<16x32xf32>
    %cst_189 = arith.constant dense<0.000000e+00> : vector<16xf32>
    %583 = vector.multi_reduction <add>, %582, %cst_189 [1] : vector<16x32xf32> to vector<16xf32>
    %584 = vector.shape_cast %583 : vector<16xf32> to vector<16x1xf32>
    %cst_190 = arith.constant 3.200000e+01 : f32
    %585 = vector.broadcast %cst_190 : f32 to vector<16x1xf32>
    %586 = arith.divf %584, %585 : vector<16x1xf32>
    %587 = vector.broadcast %586 : vector<16x1xf32> to vector<16x32xf32>
    %588 = arith.subf %582, %587 : vector<16x32xf32>
    %589 = arith.mulf %588, %588 : vector<16x32xf32>
    %cst_191 = arith.constant dense<0.000000e+00> : vector<16xf32>
    %590 = vector.multi_reduction <add>, %589, %cst_191 [1] : vector<16x32xf32> to vector<16xf32>
    %591 = vector.shape_cast %590 : vector<16xf32> to vector<16x1xf32>
    %cst_192 = arith.constant 3.200000e+01 : f32
    %592 = vector.broadcast %cst_192 : f32 to vector<16x1xf32>
    %593 = arith.divf %591, %592 : vector<16x1xf32>
    %594 = vector.broadcast %586 : vector<16x1xf32> to vector<16x32xf32>
    %595 = arith.subf %582, %594 : vector<16x32xf32>
    %cst_193 = arith.constant 9.99999996E-13 : f32
    %596 = vector.broadcast %cst_193 : f32 to vector<16x1xf32>
    %597 = arith.addf %593, %596 : vector<16x1xf32>
    %598 = math.rsqrt %597 : vector<16x1xf32>
    %599 = vector.broadcast %598 : vector<16x1xf32> to vector<16x32xf32>
    %600 = arith.mulf %595, %599 : vector<16x32xf32>
    %601 = vector.broadcast %481 : vector<1x32xf32> to vector<16x32xf32>
    %602 = arith.mulf %600, %601 : vector<16x32xf32>
    %603 = vector.broadcast %482 : vector<1x32xf32> to vector<16x32xf32>
    %604 = arith.addf %602, %603 : vector<16x32xf32>
    %605 = arith.truncf %604 : vector<16x32xf32> to vector<16x32xbf16>
    %c1_194 = arith.constant 1 : index
    %c0_195 = arith.constant 0 : index
    %c0_196 = arith.constant 0 : index
    %606 = vector.load %arg7[%c1_194, %c0_195, %c0_196] : memref<3x32x32xbf16, #tpu.memory_space<vmem>>, vector<1x32x32xbf16>
    %607 = vector.shape_cast %606 : vector<1x32x32xbf16> to vector<32x32xbf16>
    %cst_197 = arith.constant dense<0.000000e+00> : vector<16x32xf32>
    %608 = tpu.matmul %605, %607, %cst_197 {dimension_numbers = #tpu.dot_dimension_numbers<[1], [0], [0], [1], [0, 0, 1, 1], [], []>} : vector<16x32xbf16>, vector<32x32xbf16>, vector<16x32xf32> -> vector<16x32xf32>
    %609 = vector.broadcast %315 : vector<1x32xf32> to vector<16x32xf32>
    %610 = arith.addf %608, %609 : vector<16x32xf32>
    %611 = math.tanh %610 : vector<16x32xf32>
    %612 = arith.truncf %611 : vector<16x32xf32> to vector<16x32xbf16>
    %c1_198 = arith.constant 1 : index
    %c0_199 = arith.constant 0 : index
    %c0_200 = arith.constant 0 : index
    %613 = vector.load %arg8[%c1_198, %c0_199, %c0_200] : memref<3x32x128xbf16, #tpu.memory_space<vmem>>, vector<1x32x128xbf16>
    %614 = vector.shape_cast %613 : vector<1x32x128xbf16> to vector<32x128xbf16>
    %cst_201 = arith.constant dense<0.000000e+00> : vector<16x128xf32>
    %615 = tpu.matmul %612, %614, %cst_201 {dimension_numbers = #tpu.dot_dimension_numbers<[1], [0], [0], [1], [0, 0, 1, 1], [], []>} : vector<16x32xbf16>, vector<32x128xbf16>, vector<16x128xf32> -> vector<16x128xf32>
    %616 = vector.broadcast %316 : vector<1x128xf32> to vector<16x128xf32>
    %617 = arith.addf %615, %616 : vector<16x128xf32>
    %c1_202 = arith.constant 1 : index
    %c0_203 = arith.constant 0 : index
    %c0_204 = arith.constant 0 : index
    %618 = vector.load %arg10[%c1_202, %c0_203, %c0_204] : memref<3x16x128xf32, #tpu.memory_space<vmem>>, vector<1x16x128xf32>
    %619 = vector.shape_cast %618 : vector<1x16x128xf32> to vector<16x128xf32>
    %620 = vector.shape_cast %617 : vector<16x128xf32> to vector<1x16x128xf32>
    tpu.vector_store %arg10[%c1_202, %c0_203, %c0_204], %620 {strides = array<i32>} : memref<3x16x128xf32, #tpu.memory_space<vmem>>, vector<1x16x128xf32>,
    %c2_205 = arith.constant 2 : index
    %c0_206 = arith.constant 0 : index
    %c0_207 = arith.constant 0 : index
    %621 = vector.load %arg9[%c2_205, %c0_206, %c0_207] : memref<3x8x128xf32, #tpu.memory_space<vmem>>, vector<1x8x128xf32>
    %622 = vector.shape_cast %621 : vector<1x8x128xf32> to vector<8x128xf32>
    %623 = vector.extract_strided_slice %622 {offsets = [0, 0], sizes = [1, 32], strides = [1, 1]} : vector<8x128xf32> to vector<1x32xf32>
    %624 = vector.extract_strided_slice %622 {offsets = [1, 0], sizes = [1, 32], strides = [1, 1]} : vector<8x128xf32> to vector<1x32xf32>
    %625 = vector.extract_strided_slice %622 {offsets = [2, 0], sizes = [1, 32], strides = [1, 1]} : vector<8x128xf32> to vector<1x32xf32>
    %626 = vector.extract_strided_slice %622 {offsets = [3, 0], sizes = [1, 128], strides = [1, 1]} : vector<8x128xf32> to vector<1x128xf32>
    %c2_208 = arith.constant 2 : index
    %c0_209 = arith.constant 0 : index
    %c0_210 = arith.constant 0 : index
    %627 = vector.load %arg0[%c2_208, %c0_209, %c0_210] : memref<3x16x32xf32, #tpu.memory_space<vmem>>, vector<1x16x32xf32>
    %628 = vector.shape_cast %627 : vector<1x16x32xf32> to vector<16x32xf32>
    %cst_211 = arith.constant dense<0.000000e+00> : vector<16xf32>
    %629 = vector.multi_reduction <add>, %628, %cst_211 [1] : vector<16x32xf32> to vector<16xf32>
    %630 = vector.shape_cast %629 : vector<16xf32> to vector<16x1xf32>
    %cst_212 = arith.constant 3.200000e+01 : f32
    %631 = vector.broadcast %cst_212 : f32 to vector<16x1xf32>
    %632 = arith.divf %630, %631 : vector<16x1xf32>
    %633 = vector.broadcast %632 : vector<16x1xf32> to vector<16x32xf32>
    %634 = arith.subf %628, %633 : vector<16x32xf32>
    %635 = arith.mulf %634, %634 : vector<16x32xf32>
    %cst_213 = arith.constant dense<0.000000e+00> : vector<16xf32>
    %636 = vector.multi_reduction <add>, %635, %cst_213 [1] : vector<16x32xf32> to vector<16xf32>
    %637 = vector.shape_cast %636 : vector<16xf32> to vector<16x1xf32>
    %cst_214 = arith.constant 3.200000e+01 : f32
    %638 = vector.broadcast %cst_214 : f32 to vector<16x1xf32>
    %639 = arith.divf %637, %638 : vector<16x1xf32>
    %640 = vector.broadcast %632 : vector<16x1xf32> to vector<16x32xf32>
    %641 = arith.subf %628, %640 : vector<16x32xf32>
    %cst_215 = arith.constant 9.99999996E-13 : f32
    %642 = vector.broadcast %cst_215 : f32 to vector<16x1xf32>
    %643 = arith.addf %639, %642 : vector<16x1xf32>
    %644 = math.rsqrt %643 : vector<16x1xf32>
    %645 = vector.broadcast %644 : vector<16x1xf32> to vector<16x32xf32>
    %646 = arith.mulf %641, %645 : vector<16x32xf32>
    %647 = vector.broadcast %623 : vector<1x32xf32> to vector<16x32xf32>
    %648 = arith.mulf %646, %647 : vector<16x32xf32>
    %649 = vector.broadcast %624 : vector<1x32xf32> to vector<16x32xf32>
    %650 = arith.addf %648, %649 : vector<16x32xf32>
    %c4 = arith.constant 4 : index
    %c0_216 = arith.constant 0 : index
    %c0_217 = arith.constant 0 : index
    %651 = vector.load %arg6[%c4, %c0_216, %c0_217] : memref<6x8x96xf32, #tpu.memory_space<vmem>>, vector<1x8x96xf32>
    %652 = vector.shape_cast %651 : vector<1x8x96xf32> to vector<8x96xf32>
    %653 = vector.extract_strided_slice %652 {offsets = [0, 0], sizes = [1, 96], strides = [1, 1]} : vector<8x96xf32> to vector<1x96xf32>
    %654 = vector.extract_strided_slice %652 {offsets = [1, 0], sizes = [1, 32], strides = [1, 1]} : vector<8x96xf32> to vector<1x32xf32>
    %655 = vector.extract_strided_slice %652 {offsets = [2, 0], sizes = [1, 32], strides = [1, 1]} : vector<8x96xf32> to vector<1x32xf32>
    %656 = vector.extract_strided_slice %652 {offsets = [3, 0], sizes = [1, 32], strides = [1, 1]} : vector<8x96xf32> to vector<1x32xf32>
    %657 = vector.extract_strided_slice %652 {offsets = [4, 0], sizes = [1, 64], strides = [1, 1]} : vector<8x96xf32> to vector<1x64xf32>
    %658 = vector.extract_strided_slice %652 {offsets = [5, 0], sizes = [1, 32], strides = [1, 1]} : vector<8x96xf32> to vector<1x32xf32>
    %659 = vector.extract_strided_slice %652 {offsets = [6, 0], sizes = [1, 32], strides = [1, 1]} : vector<8x96xf32> to vector<1x32xf32>
    %660 = vector.extract_strided_slice %652 {offsets = [7, 0], sizes = [1, 32], strides = [1, 1]} : vector<8x96xf32> to vector<1x32xf32>
    %661 = arith.truncf %650 : vector<16x32xf32> to vector<16x32xbf16>
    %c4_218 = arith.constant 4 : index
    %c0_219 = arith.constant 0 : index
    %c0_220 = arith.constant 0 : index
    %662 = vector.load %arg2[%c4_218, %c0_219, %c0_220] : memref<6x32x96xbf16, #tpu.memory_space<vmem>>, vector<1x32x96xbf16>
    %663 = vector.shape_cast %662 : vector<1x32x96xbf16> to vector<32x96xbf16>
    %cst_221 = arith.constant dense<0.000000e+00> : vector<16x96xf32>
    %664 = tpu.matmul %661, %663, %cst_221 {dimension_numbers = #tpu.dot_dimension_numbers<[1], [0], [0], [1], [0, 0, 1, 1], [], []>} : vector<16x32xbf16>, vector<32x96xbf16>, vector<16x96xf32> -> vector<16x96xf32>
    %665 = vector.broadcast %653 : vector<1x96xf32> to vector<16x96xf32>
    %666 = arith.addf %664, %665 : vector<16x96xf32>
    %667 = vector.extract_strided_slice %666 {offsets = [0, 0], sizes = [16, 16], strides = [1, 1]} : vector<16x96xf32> to vector<16x16xf32>
    %668 = arith.truncf %667 : vector<16x16xf32> to vector<16x16xbf16>
    %669 = vector.extract_strided_slice %666 {offsets = [0, 32], sizes = [16, 16], strides = [1, 1]} : vector<16x96xf32> to vector<16x16xf32>
    %670 = arith.truncf %669 : vector<16x16xf32> to vector<16x16xbf16>
    %671 = vector.extract_strided_slice %666 {offsets = [0, 64], sizes = [16, 16], strides = [1, 1]} : vector<16x96xf32> to vector<16x16xf32>
    %672 = arith.truncf %671 : vector<16x16xf32> to vector<16x16xbf16>
    %cst_222 = arith.constant dense<0.000000e+00> : vector<16x16xf32>
    %673 = tpu.matmul %668, %670, %cst_222 {dimension_numbers = #tpu.dot_dimension_numbers<[1], [1], [0], [0], [0, 0, 1, 0], [], []>} : vector<16x16xbf16>, vector<16x16xbf16>, vector<16x16xf32> -> vector<16x16xf32>
    %674 = arith.addf %673, %0 : vector<16x16xf32>
    %cst_223 = arith.constant dense<0xFF800000> : vector<16xf32>
    %675 = vector.multi_reduction <maximumf>, %674, %cst_223 [1] : vector<16x16xf32> to vector<16xf32>
    %676 = vector.shape_cast %675 : vector<16xf32> to vector<16x1xf32>
    %677 = vector.broadcast %676 : vector<16x1xf32> to vector<16x16xf32>
    %678 = arith.subf %674, %677 : vector<16x16xf32>
    %679 = math.exp %678 : vector<16x16xf32>
    %cst_224 = arith.constant dense<0.000000e+00> : vector<16xf32>
    %680 = vector.multi_reduction <add>, %679, %cst_224 [1] : vector<16x16xf32> to vector<16xf32>
    %681 = vector.shape_cast %680 : vector<16xf32> to vector<16x1xf32>
    %682 = vector.broadcast %681 : vector<16x1xf32> to vector<16x16xf32>
    %683 = arith.divf %679, %682 : vector<16x16xf32>
    %684 = arith.truncf %683 : vector<16x16xf32> to vector<16x16xbf16>
    %cst_225 = arith.constant dense<0.000000e+00> : vector<16x16xf32>
    %685 = tpu.matmul %684, %672, %cst_225 {dimension_numbers = #tpu.dot_dimension_numbers<[1], [0], [0], [1], [0, 0, 1, 1], [], []>} : vector<16x16xbf16>, vector<16x16xbf16>, vector<16x16xf32> -> vector<16x16xf32>
    %686 = vector.extract_strided_slice %666 {offsets = [0, 16], sizes = [16, 16], strides = [1, 1]} : vector<16x96xf32> to vector<16x16xf32>
    %687 = arith.truncf %686 : vector<16x16xf32> to vector<16x16xbf16>
    %688 = vector.extract_strided_slice %666 {offsets = [0, 48], sizes = [16, 16], strides = [1, 1]} : vector<16x96xf32> to vector<16x16xf32>
    %689 = arith.truncf %688 : vector<16x16xf32> to vector<16x16xbf16>
    %690 = vector.extract_strided_slice %666 {offsets = [0, 80], sizes = [16, 16], strides = [1, 1]} : vector<16x96xf32> to vector<16x16xf32>
    %691 = arith.truncf %690 : vector<16x16xf32> to vector<16x16xbf16>
    %cst_226 = arith.constant dense<0.000000e+00> : vector<16x16xf32>
    %692 = tpu.matmul %687, %689, %cst_226 {dimension_numbers = #tpu.dot_dimension_numbers<[1], [1], [0], [0], [0, 0, 1, 0], [], []>} : vector<16x16xbf16>, vector<16x16xbf16>, vector<16x16xf32> -> vector<16x16xf32>
    %693 = arith.addf %692, %0 : vector<16x16xf32>
    %cst_227 = arith.constant dense<0xFF800000> : vector<16xf32>
    %694 = vector.multi_reduction <maximumf>, %693, %cst_227 [1] : vector<16x16xf32> to vector<16xf32>
    %695 = vector.shape_cast %694 : vector<16xf32> to vector<16x1xf32>
    %696 = vector.broadcast %695 : vector<16x1xf32> to vector<16x16xf32>
    %697 = arith.subf %693, %696 : vector<16x16xf32>
    %698 = math.exp %697 : vector<16x16xf32>
    %cst_228 = arith.constant dense<0.000000e+00> : vector<16xf32>
    %699 = vector.multi_reduction <add>, %698, %cst_228 [1] : vector<16x16xf32> to vector<16xf32>
    %700 = vector.shape_cast %699 : vector<16xf32> to vector<16x1xf32>
    %701 = vector.broadcast %700 : vector<16x1xf32> to vector<16x16xf32>
    %702 = arith.divf %698, %701 : vector<16x16xf32>
    %703 = arith.truncf %702 : vector<16x16xf32> to vector<16x16xbf16>
    %cst_229 = arith.constant dense<0.000000e+00> : vector<16x16xf32>
    %704 = tpu.matmul %703, %691, %cst_229 {dimension_numbers = #tpu.dot_dimension_numbers<[1], [0], [0], [1], [0, 0, 1, 1], [], []>} : vector<16x16xbf16>, vector<16x16xbf16>, vector<16x16xf32> -> vector<16x16xf32>
    %705 = tpu.concatenate %685, %704 in 1 : vector<16x16xf32>, vector<16x16xf32> -> vector<16x32xf32>
    %706 = arith.truncf %705 : vector<16x32xf32> to vector<16x32xbf16>
    %c4_230 = arith.constant 4 : index
    %c0_231 = arith.constant 0 : index
    %c0_232 = arith.constant 0 : index
    %707 = vector.load %arg3[%c4_230, %c0_231, %c0_232] : memref<6x32x32xbf16, #tpu.memory_space<vmem>>, vector<1x32x32xbf16>
    %708 = vector.shape_cast %707 : vector<1x32x32xbf16> to vector<32x32xbf16>
    %cst_233 = arith.constant dense<0.000000e+00> : vector<16x32xf32>
    %709 = tpu.matmul %706, %708, %cst_233 {dimension_numbers = #tpu.dot_dimension_numbers<[1], [0], [0], [1], [0, 0, 1, 1], [], []>} : vector<16x32xbf16>, vector<32x32xbf16>, vector<16x32xf32> -> vector<16x32xf32>
    %710 = vector.broadcast %654 : vector<1x32xf32> to vector<16x32xf32>
    %711 = arith.addf %709, %710 : vector<16x32xf32>
    %712 = arith.addf %711, %650 : vector<16x32xf32>
    %cst_234 = arith.constant dense<0.000000e+00> : vector<16xf32>
    %713 = vector.multi_reduction <add>, %712, %cst_234 [1] : vector<16x32xf32> to vector<16xf32>
    %714 = vector.shape_cast %713 : vector<16xf32> to vector<16x1xf32>
    %cst_235 = arith.constant 3.200000e+01 : f32
    %715 = vector.broadcast %cst_235 : f32 to vector<16x1xf32>
    %716 = arith.divf %714, %715 : vector<16x1xf32>
    %717 = vector.broadcast %716 : vector<16x1xf32> to vector<16x32xf32>
    %718 = arith.subf %712, %717 : vector<16x32xf32>
    %719 = arith.mulf %718, %718 : vector<16x32xf32>
    %cst_236 = arith.constant dense<0.000000e+00> : vector<16xf32>
    %720 = vector.multi_reduction <add>, %719, %cst_236 [1] : vector<16x32xf32> to vector<16xf32>
    %721 = vector.shape_cast %720 : vector<16xf32> to vector<16x1xf32>
    %cst_237 = arith.constant 3.200000e+01 : f32
    %722 = vector.broadcast %cst_237 : f32 to vector<16x1xf32>
    %723 = arith.divf %721, %722 : vector<16x1xf32>
    %724 = vector.broadcast %716 : vector<16x1xf32> to vector<16x32xf32>
    %725 = arith.subf %712, %724 : vector<16x32xf32>
    %cst_238 = arith.constant 9.99999996E-13 : f32
    %726 = vector.broadcast %cst_238 : f32 to vector<16x1xf32>
    %727 = arith.addf %723, %726 : vector<16x1xf32>
    %728 = math.rsqrt %727 : vector<16x1xf32>
    %729 = vector.broadcast %728 : vector<16x1xf32> to vector<16x32xf32>
    %730 = arith.mulf %725, %729 : vector<16x32xf32>
    %731 = vector.broadcast %655 : vector<1x32xf32> to vector<16x32xf32>
    %732 = arith.mulf %730, %731 : vector<16x32xf32>
    %733 = vector.broadcast %656 : vector<1x32xf32> to vector<16x32xf32>
    %734 = arith.addf %732, %733 : vector<16x32xf32>
    %735 = arith.truncf %734 : vector<16x32xf32> to vector<16x32xbf16>
    %c4_239 = arith.constant 4 : index
    %c0_240 = arith.constant 0 : index
    %c0_241 = arith.constant 0 : index
    %736 = vector.load %arg4[%c4_239, %c0_240, %c0_241] : memref<6x32x64xbf16, #tpu.memory_space<vmem>>, vector<1x32x64xbf16>
    %737 = vector.shape_cast %736 : vector<1x32x64xbf16> to vector<32x64xbf16>
    %cst_242 = arith.constant dense<0.000000e+00> : vector<16x64xf32>
    %738 = tpu.matmul %735, %737, %cst_242 {dimension_numbers = #tpu.dot_dimension_numbers<[1], [0], [0], [1], [0, 0, 1, 1], [], []>} : vector<16x32xbf16>, vector<32x64xbf16>, vector<16x64xf32> -> vector<16x64xf32>
    %739 = vector.broadcast %657 : vector<1x64xf32> to vector<16x64xf32>
    %740 = arith.addf %738, %739 : vector<16x64xf32>
    %cst_243 = arith.constant 5.000000e-01 : f32
    %741 = vector.broadcast %cst_243 : f32 to vector<16x64xf32>
    %742 = arith.mulf %741, %740 : vector<16x64xf32>
    %cst_244 = arith.constant 4.471500e-02 : f32
    %743 = vector.broadcast %cst_244 : f32 to vector<16x64xf32>
    %744 = arith.mulf %743, %740 : vector<16x64xf32>
    %745 = arith.mulf %744, %740 : vector<16x64xf32>
    %746 = arith.mulf %745, %740 : vector<16x64xf32>
    %747 = arith.addf %740, %746 : vector<16x64xf32>
    %cst_245 = arith.constant 0.797884583 : f32
    %748 = vector.broadcast %cst_245 : f32 to vector<16x64xf32>
    %749 = arith.mulf %748, %747 : vector<16x64xf32>
    %750 = math.tanh %749 : vector<16x64xf32>
    %cst_246 = arith.constant 1.000000e+00 : f32
    %751 = vector.broadcast %cst_246 : f32 to vector<16x64xf32>
    %752 = arith.addf %751, %750 : vector<16x64xf32>
    %753 = arith.mulf %742, %752 : vector<16x64xf32>
    %754 = arith.truncf %753 : vector<16x64xf32> to vector<16x64xbf16>
    %c4_247 = arith.constant 4 : index
    %c0_248 = arith.constant 0 : index
    %c0_249 = arith.constant 0 : index
    %755 = vector.load %arg5[%c4_247, %c0_248, %c0_249] : memref<6x64x32xbf16, #tpu.memory_space<vmem>>, vector<1x64x32xbf16>
    %756 = vector.shape_cast %755 : vector<1x64x32xbf16> to vector<64x32xbf16>
    %cst_250 = arith.constant dense<0.000000e+00> : vector<16x32xf32>
    %757 = tpu.matmul %754, %756, %cst_250 {dimension_numbers = #tpu.dot_dimension_numbers<[1], [0], [0], [1], [0, 0, 1, 1], [], []>} : vector<16x64xbf16>, vector<64x32xbf16>, vector<16x32xf32> -> vector<16x32xf32>
    %758 = vector.broadcast %658 : vector<1x32xf32> to vector<16x32xf32>
    %759 = arith.addf %757, %758 : vector<16x32xf32>
    %760 = arith.addf %759, %734 : vector<16x32xf32>
    %cst_251 = arith.constant dense<0.000000e+00> : vector<16xf32>
    %761 = vector.multi_reduction <add>, %760, %cst_251 [1] : vector<16x32xf32> to vector<16xf32>
    %762 = vector.shape_cast %761 : vector<16xf32> to vector<16x1xf32>
    %cst_252 = arith.constant 3.200000e+01 : f32
    %763 = vector.broadcast %cst_252 : f32 to vector<16x1xf32>
    %764 = arith.divf %762, %763 : vector<16x1xf32>
    %765 = vector.broadcast %764 : vector<16x1xf32> to vector<16x32xf32>
    %766 = arith.subf %760, %765 : vector<16x32xf32>
    %767 = arith.mulf %766, %766 : vector<16x32xf32>
    %cst_253 = arith.constant dense<0.000000e+00> : vector<16xf32>
    %768 = vector.multi_reduction <add>, %767, %cst_253 [1] : vector<16x32xf32> to vector<16xf32>
    %769 = vector.shape_cast %768 : vector<16xf32> to vector<16x1xf32>
    %cst_254 = arith.constant 3.200000e+01 : f32
    %770 = vector.broadcast %cst_254 : f32 to vector<16x1xf32>
    %771 = arith.divf %769, %770 : vector<16x1xf32>
    %772 = vector.broadcast %764 : vector<16x1xf32> to vector<16x32xf32>
    %773 = arith.subf %760, %772 : vector<16x32xf32>
    %cst_255 = arith.constant 9.99999996E-13 : f32
    %774 = vector.broadcast %cst_255 : f32 to vector<16x1xf32>
    %775 = arith.addf %771, %774 : vector<16x1xf32>
    %776 = math.rsqrt %775 : vector<16x1xf32>
    %777 = vector.broadcast %776 : vector<16x1xf32> to vector<16x32xf32>
    %778 = arith.mulf %773, %777 : vector<16x32xf32>
    %779 = vector.broadcast %659 : vector<1x32xf32> to vector<16x32xf32>
    %780 = arith.mulf %778, %779 : vector<16x32xf32>
    %781 = vector.broadcast %660 : vector<1x32xf32> to vector<16x32xf32>
    %782 = arith.addf %780, %781 : vector<16x32xf32>
    %c5 = arith.constant 5 : index
    %c0_256 = arith.constant 0 : index
    %c0_257 = arith.constant 0 : index
    %783 = vector.load %arg6[%c5, %c0_256, %c0_257] : memref<6x8x96xf32, #tpu.memory_space<vmem>>, vector<1x8x96xf32>
    %784 = vector.shape_cast %783 : vector<1x8x96xf32> to vector<8x96xf32>
    %785 = vector.extract_strided_slice %784 {offsets = [0, 0], sizes = [1, 96], strides = [1, 1]} : vector<8x96xf32> to vector<1x96xf32>
    %786 = vector.extract_strided_slice %784 {offsets = [1, 0], sizes = [1, 32], strides = [1, 1]} : vector<8x96xf32> to vector<1x32xf32>
    %787 = vector.extract_strided_slice %784 {offsets = [2, 0], sizes = [1, 32], strides = [1, 1]} : vector<8x96xf32> to vector<1x32xf32>
    %788 = vector.extract_strided_slice %784 {offsets = [3, 0], sizes = [1, 32], strides = [1, 1]} : vector<8x96xf32> to vector<1x32xf32>
    %789 = vector.extract_strided_slice %784 {offsets = [4, 0], sizes = [1, 64], strides = [1, 1]} : vector<8x96xf32> to vector<1x64xf32>
    %790 = vector.extract_strided_slice %784 {offsets = [5, 0], sizes = [1, 32], strides = [1, 1]} : vector<8x96xf32> to vector<1x32xf32>
    %791 = vector.extract_strided_slice %784 {offsets = [6, 0], sizes = [1, 32], strides = [1, 1]} : vector<8x96xf32> to vector<1x32xf32>
    %792 = vector.extract_strided_slice %784 {offsets = [7, 0], sizes = [1, 32], strides = [1, 1]} : vector<8x96xf32> to vector<1x32xf32>
    %793 = arith.truncf %782 : vector<16x32xf32> to vector<16x32xbf16>
    %c5_258 = arith.constant 5 : index
    %c0_259 = arith.constant 0 : index
    %c0_260 = arith.constant 0 : index
    %794 = vector.load %arg2[%c5_258, %c0_259, %c0_260] : memref<6x32x96xbf16, #tpu.memory_space<vmem>>, vector<1x32x96xbf16>
    %795 = vector.shape_cast %794 : vector<1x32x96xbf16> to vector<32x96xbf16>
    %cst_261 = arith.constant dense<0.000000e+00> : vector<16x96xf32>
    %796 = tpu.matmul %793, %795, %cst_261 {dimension_numbers = #tpu.dot_dimension_numbers<[1], [0], [0], [1], [0, 0, 1, 1], [], []>} : vector<16x32xbf16>, vector<32x96xbf16>, vector<16x96xf32> -> vector<16x96xf32>
    %797 = vector.broadcast %785 : vector<1x96xf32> to vector<16x96xf32>
    %798 = arith.addf %796, %797 : vector<16x96xf32>
    %799 = vector.extract_strided_slice %798 {offsets = [0, 0], sizes = [16, 16], strides = [1, 1]} : vector<16x96xf32> to vector<16x16xf32>
    %800 = arith.truncf %799 : vector<16x16xf32> to vector<16x16xbf16>
    %801 = vector.extract_strided_slice %798 {offsets = [0, 32], sizes = [16, 16], strides = [1, 1]} : vector<16x96xf32> to vector<16x16xf32>
    %802 = arith.truncf %801 : vector<16x16xf32> to vector<16x16xbf16>
    %803 = vector.extract_strided_slice %798 {offsets = [0, 64], sizes = [16, 16], strides = [1, 1]} : vector<16x96xf32> to vector<16x16xf32>
    %804 = arith.truncf %803 : vector<16x16xf32> to vector<16x16xbf16>
    %cst_262 = arith.constant dense<0.000000e+00> : vector<16x16xf32>
    %805 = tpu.matmul %800, %802, %cst_262 {dimension_numbers = #tpu.dot_dimension_numbers<[1], [1], [0], [0], [0, 0, 1, 0], [], []>} : vector<16x16xbf16>, vector<16x16xbf16>, vector<16x16xf32> -> vector<16x16xf32>
    %806 = arith.addf %805, %0 : vector<16x16xf32>
    %cst_263 = arith.constant dense<0xFF800000> : vector<16xf32>
    %807 = vector.multi_reduction <maximumf>, %806, %cst_263 [1] : vector<16x16xf32> to vector<16xf32>
    %808 = vector.shape_cast %807 : vector<16xf32> to vector<16x1xf32>
    %809 = vector.broadcast %808 : vector<16x1xf32> to vector<16x16xf32>
    %810 = arith.subf %806, %809 : vector<16x16xf32>
    %811 = math.exp %810 : vector<16x16xf32>
    %cst_264 = arith.constant dense<0.000000e+00> : vector<16xf32>
    %812 = vector.multi_reduction <add>, %811, %cst_264 [1] : vector<16x16xf32> to vector<16xf32>
    %813 = vector.shape_cast %812 : vector<16xf32> to vector<16x1xf32>
    %814 = vector.broadcast %813 : vector<16x1xf32> to vector<16x16xf32>
    %815 = arith.divf %811, %814 : vector<16x16xf32>
    %816 = arith.truncf %815 : vector<16x16xf32> to vector<16x16xbf16>
    %cst_265 = arith.constant dense<0.000000e+00> : vector<16x16xf32>
    %817 = tpu.matmul %816, %804, %cst_265 {dimension_numbers = #tpu.dot_dimension_numbers<[1], [0], [0], [1], [0, 0, 1, 1], [], []>} : vector<16x16xbf16>, vector<16x16xbf16>, vector<16x16xf32> -> vector<16x16xf32>
    %818 = vector.extract_strided_slice %798 {offsets = [0, 16], sizes = [16, 16], strides = [1, 1]} : vector<16x96xf32> to vector<16x16xf32>
    %819 = arith.truncf %818 : vector<16x16xf32> to vector<16x16xbf16>
    %820 = vector.extract_strided_slice %798 {offsets = [0, 48], sizes = [16, 16], strides = [1, 1]} : vector<16x96xf32> to vector<16x16xf32>
    %821 = arith.truncf %820 : vector<16x16xf32> to vector<16x16xbf16>
    %822 = vector.extract_strided_slice %798 {offsets = [0, 80], sizes = [16, 16], strides = [1, 1]} : vector<16x96xf32> to vector<16x16xf32>
    %823 = arith.truncf %822 : vector<16x16xf32> to vector<16x16xbf16>
    %cst_266 = arith.constant dense<0.000000e+00> : vector<16x16xf32>
    %824 = tpu.matmul %819, %821, %cst_266 {dimension_numbers = #tpu.dot_dimension_numbers<[1], [1], [0], [0], [0, 0, 1, 0], [], []>} : vector<16x16xbf16>, vector<16x16xbf16>, vector<16x16xf32> -> vector<16x16xf32>
    %825 = arith.addf %824, %0 : vector<16x16xf32>
    %cst_267 = arith.constant dense<0xFF800000> : vector<16xf32>
    %826 = vector.multi_reduction <maximumf>, %825, %cst_267 [1] : vector<16x16xf32> to vector<16xf32>
    %827 = vector.shape_cast %826 : vector<16xf32> to vector<16x1xf32>
    %828 = vector.broadcast %827 : vector<16x1xf32> to vector<16x16xf32>
    %829 = arith.subf %825, %828 : vector<16x16xf32>
    %830 = math.exp %829 : vector<16x16xf32>
    %cst_268 = arith.constant dense<0.000000e+00> : vector<16xf32>
    %831 = vector.multi_reduction <add>, %830, %cst_268 [1] : vector<16x16xf32> to vector<16xf32>
    %832 = vector.shape_cast %831 : vector<16xf32> to vector<16x1xf32>
    %833 = vector.broadcast %832 : vector<16x1xf32> to vector<16x16xf32>
    %834 = arith.divf %830, %833 : vector<16x16xf32>
    %835 = arith.truncf %834 : vector<16x16xf32> to vector<16x16xbf16>
    %cst_269 = arith.constant dense<0.000000e+00> : vector<16x16xf32>
    %836 = tpu.matmul %835, %823, %cst_269 {dimension_numbers = #tpu.dot_dimension_numbers<[1], [0], [0], [1], [0, 0, 1, 1], [], []>} : vector<16x16xbf16>, vector<16x16xbf16>, vector<16x16xf32> -> vector<16x16xf32>
    %837 = tpu.concatenate %817, %836 in 1 : vector<16x16xf32>, vector<16x16xf32> -> vector<16x32xf32>
    %838 = arith.truncf %837 : vector<16x32xf32> to vector<16x32xbf16>
    %c5_270 = arith.constant 5 : index
    %c0_271 = arith.constant 0 : index
    %c0_272 = arith.constant 0 : index
    %839 = vector.load %arg3[%c5_270, %c0_271, %c0_272] : memref<6x32x32xbf16, #tpu.memory_space<vmem>>, vector<1x32x32xbf16>
    %840 = vector.shape_cast %839 : vector<1x32x32xbf16> to vector<32x32xbf16>
    %cst_273 = arith.constant dense<0.000000e+00> : vector<16x32xf32>
    %841 = tpu.matmul %838, %840, %cst_273 {dimension_numbers = #tpu.dot_dimension_numbers<[1], [0], [0], [1], [0, 0, 1, 1], [], []>} : vector<16x32xbf16>, vector<32x32xbf16>, vector<16x32xf32> -> vector<16x32xf32>
    %842 = vector.broadcast %786 : vector<1x32xf32> to vector<16x32xf32>
    %843 = arith.addf %841, %842 : vector<16x32xf32>
    %844 = arith.addf %843, %782 : vector<16x32xf32>
    %cst_274 = arith.constant dense<0.000000e+00> : vector<16xf32>
    %845 = vector.multi_reduction <add>, %844, %cst_274 [1] : vector<16x32xf32> to vector<16xf32>
    %846 = vector.shape_cast %845 : vector<16xf32> to vector<16x1xf32>
    %cst_275 = arith.constant 3.200000e+01 : f32
    %847 = vector.broadcast %cst_275 : f32 to vector<16x1xf32>
    %848 = arith.divf %846, %847 : vector<16x1xf32>
    %849 = vector.broadcast %848 : vector<16x1xf32> to vector<16x32xf32>
    %850 = arith.subf %844, %849 : vector<16x32xf32>
    %851 = arith.mulf %850, %850 : vector<16x32xf32>
    %cst_276 = arith.constant dense<0.000000e+00> : vector<16xf32>
    %852 = vector.multi_reduction <add>, %851, %cst_276 [1] : vector<16x32xf32> to vector<16xf32>
    %853 = vector.shape_cast %852 : vector<16xf32> to vector<16x1xf32>
    %cst_277 = arith.constant 3.200000e+01 : f32
    %854 = vector.broadcast %cst_277 : f32 to vector<16x1xf32>
    %855 = arith.divf %853, %854 : vector<16x1xf32>
    %856 = vector.broadcast %848 : vector<16x1xf32> to vector<16x32xf32>
    %857 = arith.subf %844, %856 : vector<16x32xf32>
    %cst_278 = arith.constant 9.99999996E-13 : f32
    %858 = vector.broadcast %cst_278 : f32 to vector<16x1xf32>
    %859 = arith.addf %855, %858 : vector<16x1xf32>
    %860 = math.rsqrt %859 : vector<16x1xf32>
    %861 = vector.broadcast %860 : vector<16x1xf32> to vector<16x32xf32>
    %862 = arith.mulf %857, %861 : vector<16x32xf32>
    %863 = vector.broadcast %787 : vector<1x32xf32> to vector<16x32xf32>
    %864 = arith.mulf %862, %863 : vector<16x32xf32>
    %865 = vector.broadcast %788 : vector<1x32xf32> to vector<16x32xf32>
    %866 = arith.addf %864, %865 : vector<16x32xf32>
    %867 = arith.truncf %866 : vector<16x32xf32> to vector<16x32xbf16>
    %c5_279 = arith.constant 5 : index
    %c0_280 = arith.constant 0 : index
    %c0_281 = arith.constant 0 : index
    %868 = vector.load %arg4[%c5_279, %c0_280, %c0_281] : memref<6x32x64xbf16, #tpu.memory_space<vmem>>, vector<1x32x64xbf16>
    %869 = vector.shape_cast %868 : vector<1x32x64xbf16> to vector<32x64xbf16>
    %cst_282 = arith.constant dense<0.000000e+00> : vector<16x64xf32>
    %870 = tpu.matmul %867, %869, %cst_282 {dimension_numbers = #tpu.dot_dimension_numbers<[1], [0], [0], [1], [0, 0, 1, 1], [], []>} : vector<16x32xbf16>, vector<32x64xbf16>, vector<16x64xf32> -> vector<16x64xf32>
    %871 = vector.broadcast %789 : vector<1x64xf32> to vector<16x64xf32>
    %872 = arith.addf %870, %871 : vector<16x64xf32>
    %cst_283 = arith.constant 5.000000e-01 : f32
    %873 = vector.broadcast %cst_283 : f32 to vector<16x64xf32>
    %874 = arith.mulf %873, %872 : vector<16x64xf32>
    %cst_284 = arith.constant 4.471500e-02 : f32
    %875 = vector.broadcast %cst_284 : f32 to vector<16x64xf32>
    %876 = arith.mulf %875, %872 : vector<16x64xf32>
    %877 = arith.mulf %876, %872 : vector<16x64xf32>
    %878 = arith.mulf %877, %872 : vector<16x64xf32>
    %879 = arith.addf %872, %878 : vector<16x64xf32>
    %cst_285 = arith.constant 0.797884583 : f32
    %880 = vector.broadcast %cst_285 : f32 to vector<16x64xf32>
    %881 = arith.mulf %880, %879 : vector<16x64xf32>
    %882 = math.tanh %881 : vector<16x64xf32>
    %cst_286 = arith.constant 1.000000e+00 : f32
    %883 = vector.broadcast %cst_286 : f32 to vector<16x64xf32>
    %884 = arith.addf %883, %882 : vector<16x64xf32>
    %885 = arith.mulf %874, %884 : vector<16x64xf32>
    %886 = arith.truncf %885 : vector<16x64xf32> to vector<16x64xbf16>
    %c5_287 = arith.constant 5 : index
    %c0_288 = arith.constant 0 : index
    %c0_289 = arith.constant 0 : index
    %887 = vector.load %arg5[%c5_287, %c0_288, %c0_289] : memref<6x64x32xbf16, #tpu.memory_space<vmem>>, vector<1x64x32xbf16>
    %888 = vector.shape_cast %887 : vector<1x64x32xbf16> to vector<64x32xbf16>
    %cst_290 = arith.constant dense<0.000000e+00> : vector<16x32xf32>
    %889 = tpu.matmul %886, %888, %cst_290 {dimension_numbers = #tpu.dot_dimension_numbers<[1], [0], [0], [1], [0, 0, 1, 1], [], []>} : vector<16x64xbf16>, vector<64x32xbf16>, vector<16x32xf32> -> vector<16x32xf32>
    %890 = vector.broadcast %790 : vector<1x32xf32> to vector<16x32xf32>
    %891 = arith.addf %889, %890 : vector<16x32xf32>
    %892 = arith.addf %891, %866 : vector<16x32xf32>
    %cst_291 = arith.constant dense<0.000000e+00> : vector<16xf32>
    %893 = vector.multi_reduction <add>, %892, %cst_291 [1] : vector<16x32xf32> to vector<16xf32>
    %894 = vector.shape_cast %893 : vector<16xf32> to vector<16x1xf32>
    %cst_292 = arith.constant 3.200000e+01 : f32
    %895 = vector.broadcast %cst_292 : f32 to vector<16x1xf32>
    %896 = arith.divf %894, %895 : vector<16x1xf32>
    %897 = vector.broadcast %896 : vector<16x1xf32> to vector<16x32xf32>
    %898 = arith.subf %892, %897 : vector<16x32xf32>
    %899 = arith.mulf %898, %898 : vector<16x32xf32>
    %cst_293 = arith.constant dense<0.000000e+00> : vector<16xf32>
    %900 = vector.multi_reduction <add>, %899, %cst_293 [1] : vector<16x32xf32> to vector<16xf32>
    %901 = vector.shape_cast %900 : vector<16xf32> to vector<16x1xf32>
    %cst_294 = arith.constant 3.200000e+01 : f32
    %902 = vector.broadcast %cst_294 : f32 to vector<16x1xf32>
    %903 = arith.divf %901, %902 : vector<16x1xf32>
    %904 = vector.broadcast %896 : vector<16x1xf32> to vector<16x32xf32>
    %905 = arith.subf %892, %904 : vector<16x32xf32>
    %cst_295 = arith.constant 9.99999996E-13 : f32
    %906 = vector.broadcast %cst_295 : f32 to vector<16x1xf32>
    %907 = arith.addf %903, %906 : vector<16x1xf32>
    %908 = math.rsqrt %907 : vector<16x1xf32>
    %909 = vector.broadcast %908 : vector<16x1xf32> to vector<16x32xf32>
    %910 = arith.mulf %905, %909 : vector<16x32xf32>
    %911 = vector.broadcast %791 : vector<1x32xf32> to vector<16x32xf32>
    %912 = arith.mulf %910, %911 : vector<16x32xf32>
    %913 = vector.broadcast %792 : vector<1x32xf32> to vector<16x32xf32>
    %914 = arith.addf %912, %913 : vector<16x32xf32>
    %915 = arith.truncf %914 : vector<16x32xf32> to vector<16x32xbf16>
    %c2_296 = arith.constant 2 : index
    %c0_297 = arith.constant 0 : index
    %c0_298 = arith.constant 0 : index
    %916 = vector.load %arg7[%c2_296, %c0_297, %c0_298] : memref<3x32x32xbf16, #tpu.memory_space<vmem>>, vector<1x32x32xbf16>
    %917 = vector.shape_cast %916 : vector<1x32x32xbf16> to vector<32x32xbf16>
    %cst_299 = arith.constant dense<0.000000e+00> : vector<16x32xf32>
    %918 = tpu.matmul %915, %917, %cst_299 {dimension_numbers = #tpu.dot_dimension_numbers<[1], [0], [0], [1], [0, 0, 1, 1], [], []>} : vector<16x32xbf16>, vector<32x32xbf16>, vector<16x32xf32> -> vector<16x32xf32>
    %919 = vector.broadcast %625 : vector<1x32xf32> to vector<16x32xf32>
    %920 = arith.addf %918, %919 : vector<16x32xf32>
    %921 = math.tanh %920 : vector<16x32xf32>
    %922 = arith.truncf %921 : vector<16x32xf32> to vector<16x32xbf16>
    %c2_300 = arith.constant 2 : index
    %c0_301 = arith.constant 0 : index
    %c0_302 = arith.constant 0 : index
    %923 = vector.load %arg8[%c2_300, %c0_301, %c0_302] : memref<3x32x128xbf16, #tpu.memory_space<vmem>>, vector<1x32x128xbf16>
    %924 = vector.shape_cast %923 : vector<1x32x128xbf16> to vector<32x128xbf16>
    %cst_303 = arith.constant dense<0.000000e+00> : vector<16x128xf32>
    %925 = tpu.matmul %922, %924, %cst_303 {dimension_numbers = #tpu.dot_dimension_numbers<[1], [0], [0], [1], [0, 0, 1, 1], [], []>} : vector<16x32xbf16>, vector<32x128xbf16>, vector<16x128xf32> -> vector<16x128xf32>
    %926 = vector.broadcast %626 : vector<1x128xf32> to vector<16x128xf32>
    %927 = arith.addf %925, %926 : vector<16x128xf32>
    %c2_304 = arith.constant 2 : index
    %c0_305 = arith.constant 0 : index
    %c0_306 = arith.constant 0 : index
    %928 = vector.load %arg10[%c2_304, %c0_305, %c0_306] : memref<3x16x128xf32, #tpu.memory_space<vmem>>, vector<1x16x128xf32>
    %929 = vector.shape_cast %928 : vector<1x16x128xf32> to vector<16x128xf32>
    %930 = vector.shape_cast %927 : vector<16x128xf32> to vector<1x16x128xf32>
    tpu.vector_store %arg10[%c2_304, %c0_305, %c0_306], %930 {strides = array<i32>} : memref<3x16x128xf32, #tpu.memory_space<vmem>>, vector<1x16x128xf32>,
    return
  }
}

</mosaic_0001>

<llo_original>
// kernel: multiple_bert_forward.1
$region0: #{multiple_bert_forward.1}
  #allocation0 [shape = 'u32[]', space=smem, size = 0x4, offset = 0x4, fixed_abs, tag = 'smem constant byte address 0x4 - core index']
  #allocation1 [shape = 'u32[144,128]{1,0:T(1,128)}', space=vmem, size = 0x12000, scoped, tag = 'internal scratch']
  %s0 = inlined_call_operand.vmem [shape: f32[3,16,32], index: 0, kind: input, shape index: {}]
  %s1 = inlined_call_operand.vmem [shape: f32[16,16], index: 1, kind: input, shape index: {}]
  %s2 = inlined_call_operand.vmem [shape: bf16[6,32,96], index: 2, kind: input, shape index: {}]
  %s3 = inlined_call_operand.vmem [shape: bf16[6,32,32], index: 3, kind: input, shape index: {}]
  %s4 = inlined_call_operand.vmem [shape: bf16[6,32,64], index: 4, kind: input, shape index: {}]
  %s5 = inlined_call_operand.vmem [shape: bf16[6,64,32], index: 5, kind: input, shape index: {}]
  %s6 = inlined_call_operand.vmem [shape: f32[6,8,96], index: 6, kind: input, shape index: {}]
  %s7 = inlined_call_operand.vmem [shape: bf16[3,32,32], index: 7, kind: input, shape index: {}]
  %s8 = inlined_call_operand.vmem [shape: bf16[3,32,128], index: 8, kind: input, shape index: {}]
  %s9 = inlined_call_operand.vmem [shape: f32[3,8,128], index: 9, kind: input, shape index: {}]
  %s10 = inlined_call_operand.vmem [shape: f32[3,16,128], index: 10, kind: output, shape index: {}]
  %s11 = sld [smem:[#allocation0]]
  $region50: #{multiple_bert_forward.1} parent=0
    _
  %s13 = ssub.s32 1, %s11
  %s14 = scalar_select 0, %s13, %s11
  // Predicated region
  $region2: #{multiple_bert_forward.1} parent=0 // pred_check
    _
  $region3: #{multiple_bert_forward.1} parent=0 // pred_check_branch
    %16 = sbr.rel (0) target = $region5
  $region4: #{multiple_bert_forward.1} parent=0 // pred_region
    _
  $region5: #{multiple_bert_forward.1} parent=0 // pred_fallthru
    _
  // Predicated region
  $region6: #{multiple_bert_forward.1} parent=0 // pred_check
    _
  $region7: #{multiple_bert_forward.1} parent=0 // pred_check_branch
    %18 = sbr.rel (0) target = $region9
  $region8: #{multiple_bert_forward.1} parent=0 // pred_region
    _
  $region9: #{multiple_bert_forward.1} parent=0 // pred_fallthru
    _
  // Predicated region
  $region10: #{multiple_bert_forward.1} parent=0 // pred_check
    _
  $region11: #{multiple_bert_forward.1} parent=0 // pred_check_branch
    %20 = sbr.rel (0) target = $region13
  $region12: #{multiple_bert_forward.1} parent=0 // pred_region
    _
  $region13: #{multiple_bert_forward.1} parent=0 // pred_fallthru
    _
  // Predicated region
  $region14: #{multiple_bert_forward.1} parent=0 // pred_check
    _
  $region15: #{multiple_bert_forward.1} parent=0 // pred_check_branch
    %22 = sbr.rel (0) target = $region17
  $region16: #{multiple_bert_forward.1} parent=0 // pred_region
    _
  $region17: #{multiple_bert_forward.1} parent=0 // pred_fallthru
    _
  // Predicated region
  $region18: #{multiple_bert_forward.1} parent=0 // pred_check
    _
  $region19: #{multiple_bert_forward.1} parent=0 // pred_check_branch
    %24 = sbr.rel (0) target = $region21
  $region20: #{multiple_bert_forward.1} parent=0 // pred_region
    _
  $region21: #{multiple_bert_forward.1} parent=0 // pred_fallthru
    _
  // Predicated region
  $region22: #{multiple_bert_forward.1} parent=0 // pred_check
    _
  $region23: #{multiple_bert_forward.1} parent=0 // pred_check_branch
    %26 = sbr.rel (0) target = $region25
  $region24: #{multiple_bert_forward.1} parent=0 // pred_region
    _
  $region25: #{multiple_bert_forward.1} parent=0 // pred_fallthru
    _
  // Predicated region
  $region26: #{multiple_bert_forward.1} parent=0 // pred_check
    _
  $region27: #{multiple_bert_forward.1} parent=0 // pred_check_branch
    %28 = sbr.rel (0) target = $region29
  $region28: #{multiple_bert_forward.1} parent=0 // pred_region
    _
  $region29: #{multiple_bert_forward.1} parent=0 // pred_fallthru
    _
  // Predicated region
  $region30: #{multiple_bert_forward.1} parent=0 // pred_check
    _
  $region31: #{multiple_bert_forward.1} parent=0 // pred_check_branch
    %30 = sbr.rel (0) target = $region33
  $region32: #{multiple_bert_forward.1} parent=0 // pred_region
    _
  $region33: #{multiple_bert_forward.1} parent=0 // pred_fallthru
    _
  // Predicated region
  $region34: #{multiple_bert_forward.1} parent=0 // pred_check
    _
  $region35: #{multiple_bert_forward.1} parent=0 // pred_check_branch
    %32 = sbr.rel (0) target = $region37
  $region36: #{multiple_bert_forward.1} parent=0 // pred_region
    _
  $region37: #{multiple_bert_forward.1} parent=0 // pred_fallthru
    _
  // Predicated region
  $region38: #{multiple_bert_forward.1} parent=0 // pred_check
    _
  $region39: #{multiple_bert_forward.1} parent=0 // pred_check_branch
    %34 = sbr.rel (0) target = $region41
  $region40: #{multiple_bert_forward.1} parent=0 // pred_region
    _
  $region41: #{multiple_bert_forward.1} parent=0 // pred_fallthru
    _
  %v36 = vld [vmem:[%s1] sm:$0xff]
  %v37 = vld [vmem:[%s1 + $0x8] sm:$0xff]
  %v38 = vld [vmem:[%s9] sm:$0xff]
  %v39 = vld [vmem:[%s0] sm:$0xff]
  %v40 = vld [vmem:[%s0 + $0x8] sm:$0xff]
  %vm41 = vcmask 261120
  %v42 = vsel %vm41, %v39, 0.0
  %43 = vadd.xlane.f32.xlu0 %v42
  %v44 = vpop.xlane.xlu0 %43
  %v45 = vsel %vm41, %v40, 0.0
  %46 = vadd.xlane.f32.xlu0 %v45
  %v47 = vpop.xlane.xlu0 %46
  %v48 = vrcp.pop 32.0
  %v49 = vmul.f32 %v44, %v48
  %v50 = vmul.f32 %v47, %v48
  %v51 = vsub.f32 %v39, %v49
  %v52 = vsub.f32 %v40, %v50
  %v53 = vmul.f32 %v51, %v51
  %v54 = vmul.f32 %v52, %v52
  %v55 = vsel %vm41, %v53, 0.0
  %56 = vadd.xlane.f32.xlu0 %v55
  %v57 = vpop.xlane.xlu0 %56
  %v58 = vsel %vm41, %v54, 0.0
  %59 = vadd.xlane.f32.xlu0 %v58
  %v60 = vpop.xlane.xlu0 %59
  %v61 = vmul.f32 %v57, %v48
  %v62 = vmul.f32 %v60, %v48
  %v63 = vadd.f32 %v61, 1e-12
  %v64 = vadd.f32 %v62, 1e-12
  %v65 = vrsqrt.pop %v63
  %v66 = vrsqrt.pop %v64
  %v67 = vmul.f32 %v51, %v65
  %v68 = vmul.f32 %v52, %v66
  %v69 = vlaneseq
  %v70 = vshrl.u32 %v69, 7
  %v71 = vsub.s32 0, %v70
  %v72 = vrot.slane %v38, %v71
  %v73 = vmul.f32 %v67, %v72
  %v74 = vmul.f32 %v68, %v72
  %v75 = vlaneseq
  %v76 = vshrl.u32 %v75, 7
  %v77 = vsub.s32 1, %v76
  %v78 = vrot.slane %v38, %v77
  %v79 = vadd.f32 %v73, %v78
  %v80 = vadd.f32 %v74, %v78
  %v81 = vld [vmem:[%s6] sm:$0xff]
  %v82 = vpack.c.bf16 %v80, %v79
  %v83 = vld [vmem:[%s2] sm:$0xf]
  %v84 = vld [vmem:[%s2 + $0x4] sm:$0xf]
  %v85 = vld [vmem:[%s2 + $0x8] sm:$0xf]
  %v86 = vld [vmem:[%s2 + $0xc] sm:$0xf]
  %v87 = vlaneseq
  %v88 = vshrl.u32 %v87, 7
  %v89 = vsub.s32 0, %v88
  %v90 = vrot.slane %v81, %v89
  %v95 = vunpack.c.l.b16 %v83
  %v96 = vunpack.c.l.b16 %v84
  %v97 = vunpack.c.l.b16 %v85
  %v98 = vunpack.c.l.b16 %v86
  %v99 = vpack.c.b16 %v96, %v95
  %v100 = vpack.c.b16 %v98, %v97
  %v104 = vsel %vm41, %v82, 0
  %106 = vmatprep.subr.bf16.mxu0 0
  %107 = vmatpush1.bf16.msra.mxu0 0
  %108 = vmatprep.subr.bf16.mxu0 0
  %109 = vmatpush1.bf16.msra.mxu0 0
  %110 = vmatprep.subr.bf16.mxu0 0
  %111 = vmatpush1.bf16.msra.mxu0 0
  %112 = vmatprep.subr.bf16.mxu0 0
  %113 = vmatpush1.bf16.msra.mxu0 0
  %114 = vmatprep.subr.bf16.mxu0 0
  %115 = vmatpush1.bf16.msra.mxu0 0
  %116 = vmatprep.subr.bf16.mxu0 0
  %117 = vmatpush1.bf16.msra.mxu0 0
  %118 = vmatprep.subr.bf16.mxu0 0
  %119 = vmatpush1.bf16.msra.mxu0 %v100
  %120 = vmatprep.subr.bf16.mxu0 0
  %121 = vmatpush1.bf16.msra.mxu0 %v99
  %122 = vmatprep.subr.bf16.mxu0 0
  %123 = vmatpush2.bf16.msra.mxu0 0
  %124 = vmatprep.subr.bf16.mxu0 0
  %125 = vmatpush2.bf16.msra.mxu0 0
  %126 = vmatprep.subr.bf16.mxu0 0
  %127 = vmatpush2.bf16.msra.mxu0 0
  %128 = vmatprep.subr.bf16.mxu0 0
  %129 = vmatpush2.bf16.msra.mxu0 0
  %130 = vmatprep.subr.bf16.mxu0 0
  %131 = vmatpush2.bf16.msra.mxu0 0
  %132 = vmatprep.subr.bf16.mxu0 0
  %133 = vmatpush2.bf16.msra.mxu0 0
  %134 = vmatprep.subr.bf16.mxu0 0
  %135 = vmatpush2.bf16.msra.mxu0 0
  %136 = vmatprep.subr.bf16.mxu0 0
  %137 = vmatpush2.bf16.msra.mxu0 0
  %138 = vmatprep.mubr.bf16.mxu0 0
  %139 = vmatmul.mubr.bf16.gmra.mxu0 %v104
  %v140 = vpop.f32.mrf.mxu0
  %v141 = vadd.f32 %v90, %v140
  %v142 = vpop.f32.mrf.mxu0
  %v143 = vpop.f32.mrf.mxu0
  %v144 = vadd.f32 %v90, %v143
  %v145 = vpop.f32.mrf.mxu0
  %146 = vdwg.mxu0
  %v147 = vpack.c.bf16 %v144, %v141
  %149 = vrot.lane.b32.xlu0 %v147, 96
  %v150 = vpop.permute.xlu0 %149
  %vm151 = vcmask 130048
  %v153 = vsel %vm151, %v147, 0
  %v156 = vsel %vm151, %v150, 0
  %158 = vmatprep.subr.bf16.mxu0 0
  %159 = vmatpush1.bf16.xpose.msra.mxu0 0
  %160 = vmatprep.subr.bf16.mxu0 0
  %161 = vmatpush1.bf16.xpose.msra.mxu0 0
  %162 = vmatprep.subr.bf16.mxu0 0
  %163 = vmatpush1.bf16.xpose.msra.mxu0 0
  %164 = vmatprep.subr.bf16.mxu0 0
  %165 = vmatpush1.bf16.xpose.msra.mxu0 0
  %166 = vmatprep.subr.bf16.mxu0 0
  %167 = vmatpush1.bf16.xpose.msra.mxu0 0
  %168 = vmatprep.subr.bf16.mxu0 0
  %169 = vmatpush1.bf16.xpose.msra.mxu0 0
  %170 = vmatprep.subr.bf16.mxu0 0
  %171 = vmatpush1.bf16.xpose.msra.mxu0 0
  %172 = vmatprep.subr.bf16.mxu0 0
  %173 = vmatpush1.bf16.xpose.msra.mxu0 %v156
  %174 = vmatprep.subr.bf16.mxu0 0
  %175 = vmatpush2.bf16.xpose.msra.mxu0 0
  %176 = vmatprep.subr.bf16.mxu0 0
  %177 = vmatpush2.bf16.xpose.msra.mxu0 0
  %178 = vmatprep.subr.bf16.mxu0 0
  %179 = vmatpush2.bf16.xpose.msra.mxu0 0
  %180 = vmatprep.subr.bf16.mxu0 0
  %181 = vmatpush2.bf16.xpose.msra.mxu0 0
  %182 = vmatprep.subr.bf16.mxu0 0
  %183 = vmatpush2.bf16.xpose.msra.mxu0 0
  %184 = vmatprep.subr.bf16.mxu0 0
  %185 = vmatpush2.bf16.xpose.msra.mxu0 0
  %186 = vmatprep.subr.bf16.mxu0 0
  %187 = vmatpush2.bf16.xpose.msra.mxu0 0
  %188 = vmatprep.subr.bf16.mxu0 0
  %189 = vmatpush2.bf16.xpose.msra.mxu0 0
  %190 = vmatprep.mubr.bf16.mxu0 0
  %191 = vmatmul.mubr.bf16.gmra.mxu0 %v153
  %v192 = vpop.f32.mrf.mxu0
  %v193 = vadd.f32 %v36, %v192
  %v194 = vpop.f32.mrf.mxu0
  %v195 = vpop.f32.mrf.mxu0
  %v196 = vadd.f32 %v37, %v195
  %v197 = vpop.f32.mrf.mxu0
  %198 = vdwg.mxu0
  %v199 = vsel %vm151, %v193, -inf
  %200 = vmax.xlane.f32.xlu0 %v199
  %v201 = vpop.xlane.xlu0 %200
  %v202 = vsel %vm151, %v196, -inf
  %203 = vmax.xlane.f32.xlu0 %v202
  %v204 = vpop.xlane.xlu0 %203
  %v205 = vsub.f32 %v193, %v201
  %v206 = vsub.f32 %v196, %v204
  %v207 = vmul.f32 %v205, 1.442695
  %v208 = vpow.pop %v207
  %v209 = vmul.f32 %v206, 1.442695
  %v210 = vpow.pop %v209
  %v211 = vsel %vm151, %v208, 0.0
  %212 = vadd.xlane.f32.xlu0 %v211
  %v213 = vpop.xlane.xlu0 %212
  %v214 = vsel %vm151, %v210, 0.0
  %215 = vadd.xlane.f32.xlu0 %v214
  %v216 = vpop.xlane.xlu0 %215
  %v217 = vrcp.pop %v213
  %v218 = vmul.f32 %v208, %v217
  %v219 = vrcp.pop %v216
  %v220 = vmul.f32 %v210, %v219
  %v221 = vpack.c.bf16 %v220, %v218
  %222 = vrot.lane.b32.xlu0 %v147, 64
  %v223 = vpop.permute.xlu0 %222
  %v226 = vsel %vm151, %v221, 0
  %228 = vmatprep.subr.bf16.mxu0 0
  %229 = vmatpush1.bf16.msra.mxu0 0
  %230 = vmatprep.subr.bf16.mxu0 0
  %231 = vmatpush1.bf16.msra.mxu0 0
  %232 = vmatprep.subr.bf16.mxu0 0
  %233 = vmatpush1.bf16.msra.mxu0 0
  %234 = vmatprep.subr.bf16.mxu0 0
  %235 = vmatpush1.bf16.msra.mxu0 0
  %236 = vmatprep.subr.bf16.mxu0 0
  %237 = vmatpush1.bf16.msra.mxu0 0
  %238 = vmatprep.subr.bf16.mxu0 0
  %239 = vmatpush1.bf16.msra.mxu0 0
  %240 = vmatprep.subr.bf16.mxu0 0
  %241 = vmatpush1.bf16.msra.mxu0 0
  %242 = vmatprep.subr.bf16.mxu0 0
  %243 = vmatpush1.bf16.msra.mxu0 %v223
  %244 = vmatprep.subr.bf16.mxu0 0
  %245 = vmatpush2.bf16.msra.mxu0 0
  %246 = vmatprep.subr.bf16.mxu0 0
  %247 = vmatpush2.bf16.msra.mxu0 0
  %248 = vmatprep.subr.bf16.mxu0 0
  %249 = vmatpush2.bf16.msra.mxu0 0
  %250 = vmatprep.subr.bf16.mxu0 0
  %251 = vmatpush2.bf16.msra.mxu0 0
  %252 = vmatprep.subr.bf16.mxu0 0
  %253 = vmatpush2.bf16.msra.mxu0 0
  %254 = vmatprep.subr.bf16.mxu0 0
  %255 = vmatpush2.bf16.msra.mxu0 0
  %256 = vmatprep.subr.bf16.mxu0 0
  %257 = vmatpush2.bf16.msra.mxu0 0
  %258 = vmatprep.subr.bf16.mxu0 0
  %259 = vmatpush2.bf16.msra.mxu0 0
  %260 = vmatprep.mubr.bf16.mxu0 0
  %261 = vmatmul.mubr.bf16.gmra.mxu0 %v226
  %v262 = vpop.f32.mrf.mxu0
  %v263 = vadd.f32 0.0, %v262
  %v264 = vpop.f32.mrf.mxu0
  %v265 = vpop.f32.mrf.mxu0
  %v266 = vadd.f32 0.0, %v265
  %v267 = vpop.f32.mrf.mxu0
  %268 = vdwg.mxu0
  %269 = vrot.lane.b32.xlu0 %v147, 112
  %v270 = vpop.permute.xlu0 %269
  %271 = vrot.lane.b32.xlu0 %v147, 80
  %v272 = vpop.permute.xlu0 %271
  %v274 = vsel %vm151, %v270, 0
  %v277 = vsel %vm151, %v272, 0
  %279 = vmatprep.subr.bf16.mxu0 0
  %280 = vmatpush1.bf16.xpose.msra.mxu0 0
  %281 = vmatprep.subr.bf16.mxu0 0
  %282 = vmatpush1.bf16.xpose.msra.mxu0 0
  %283 = vmatprep.subr.bf16.mxu0 0
  %284 = vmatpush1.bf16.xpose.msra.mxu0 0
  %285 = vmatprep.subr.bf16.mxu0 0
  %286 = vmatpush1.bf16.xpose.msra.mxu0 0
  %287 = vmatprep.subr.bf16.mxu0 0
  %288 = vmatpush1.bf16.xpose.msra.mxu0 0
  %289 = vmatprep.subr.bf16.mxu0 0
  %290 = vmatpush1.bf16.xpose.msra.mxu0 0
  %291 = vmatprep.subr.bf16.mxu0 0
  %292 = vmatpush1.bf16.xpose.msra.mxu0 0
  %293 = vmatprep.subr.bf16.mxu0 0
  %294 = vmatpush1.bf16.xpose.msra.mxu0 %v277
  %295 = vmatprep.subr.bf16.mxu0 0
  %296 = vmatpush2.bf16.xpose.msra.mxu0 0
  %297 = vmatprep.subr.bf16.mxu0 0
  %298 = vmatpush2.bf16.xpose.msra.mxu0 0
  %299 = vmatprep.subr.bf16.mxu0 0
  %300 = vmatpush2.bf16.xpose.msra.mxu0 0
  %301 = vmatprep.subr.bf16.mxu0 0
  %302 = vmatpush2.bf16.xpose.msra.mxu0 0
  %303 = vmatprep.subr.bf16.mxu0 0
  %304 = vmatpush2.bf16.xpose.msra.mxu0 0
  %305 = vmatprep.subr.bf16.mxu0 0
  %306 = vmatpush2.bf16.xpose.msra.mxu0 0
  %307 = vmatprep.subr.bf16.mxu0 0
  %308 = vmatpush2.bf16.xpose.msra.mxu0 0
  %309 = vmatprep.subr.bf16.mxu0 0
  %310 = vmatpush2.bf16.xpose.msra.mxu0 0
  %311 = vmatprep.mubr.bf16.mxu0 0
  %312 = vmatmul.mubr.bf16.gmra.mxu0 %v274
  %v313 = vpop.f32.mrf.mxu0
  %v314 = vadd.f32 %v36, %v313
  %v315 = vpop.f32.mrf.mxu0
  %v316 = vpop.f32.mrf.mxu0
  %v317 = vadd.f32 %v37, %v316
  %v318 = vpop.f32.mrf.mxu0
  %319 = vdwg.mxu0
  %v320 = vsel %vm151, %v314, -inf
  %321 = vmax.xlane.f32.xlu0 %v320
  %v322 = vpop.xlane.xlu0 %321
  %v323 = vsel %vm151, %v317, -inf
  %324 = vmax.xlane.f32.xlu0 %v323
  %v325 = vpop.xlane.xlu0 %324
  %v326 = vsub.f32 %v314, %v322
  %v327 = vsub.f32 %v317, %v325
  %v328 = vmul.f32 %v326, 1.442695
  %v329 = vpow.pop %v328
  %v330 = vmul.f32 %v327, 1.442695
  %v331 = vpow.pop %v330
  %v332 = vsel %vm151, %v329, 0.0
  %333 = vadd.xlane.f32.xlu0 %v332
  %v334 = vpop.xlane.xlu0 %333
  %v335 = vsel %vm151, %v331, 0.0
  %336 = vadd.xlane.f32.xlu0 %v335
  %v337 = vpop.xlane.xlu0 %336
  %v338 = vrcp.pop %v334
  %v339 = vmul.f32 %v329, %v338
  %v340 = vrcp.pop %v337
  %v341 = vmul.f32 %v331, %v340
  %v342 = vpack.c.bf16 %v341, %v339
  %343 = vrot.lane.b32.xlu0 %v147, 48
  %v344 = vpop.permute.xlu0 %343
  %v347 = vsel %vm151, %v342, 0
  %349 = vmatprep.subr.bf16.mxu0 0
  %350 = vmatpush1.bf16.msra.mxu0 0
  %351 = vmatprep.subr.bf16.mxu0 0
  %352 = vmatpush1.bf16.msra.mxu0 0
  %353 = vmatprep.subr.bf16.mxu0 0
  %354 = vmatpush1.bf16.msra.mxu0 0
  %355 = vmatprep.subr.bf16.mxu0 0
  %356 = vmatpush1.bf16.msra.mxu0 0
  %357 = vmatprep.subr.bf16.mxu0 0
  %358 = vmatpush1.bf16.msra.mxu0 0
  %359 = vmatprep.subr.bf16.mxu0 0
  %360 = vmatpush1.bf16.msra.mxu0 0
  %361 = vmatprep.subr.bf16.mxu0 0
  %362 = vmatpush1.bf16.msra.mxu0 0
  %363 = vmatprep.subr.bf16.mxu0 0
  %364 = vmatpush1.bf16.msra.mxu0 %v344
  %365 = vmatprep.subr.bf16.mxu0 0
  %366 = vmatpush2.bf16.msra.mxu0 0
  %367 = vmatprep.subr.bf16.mxu0 0
  %368 = vmatpush2.bf16.msra.mxu0 0
  %369 = vmatprep.subr.bf16.mxu0 0
  %370 = vmatpush2.bf16.msra.mxu0 0
  %371 = vmatprep.subr.bf16.mxu0 0
  %372 = vmatpush2.bf16.msra.mxu0 0
  %373 = vmatprep.subr.bf16.mxu0 0
  %374 = vmatpush2.bf16.msra.mxu0 0
  %375 = vmatprep.subr.bf16.mxu0 0
  %376 = vmatpush2.bf16.msra.mxu0 0
  %377 = vmatprep.subr.bf16.mxu0 0
  %378 = vmatpush2.bf16.msra.mxu0 0
  %379 = vmatprep.subr.bf16.mxu0 0
  %380 = vmatpush2.bf16.msra.mxu0 0
  %381 = vmatprep.mubr.bf16.mxu0 0
  %382 = vmatmul.mubr.bf16.gmra.mxu0 %v347
  %v383 = vpop.f32.mrf.mxu0
  %v384 = vadd.f32 0.0, %v383
  %v385 = vpop.f32.mrf.mxu0
  %v386 = vpop.f32.mrf.mxu0
  %v387 = vadd.f32 0.0, %v386
  %v388 = vpop.f32.mrf.mxu0
  %389 = vdwg.mxu0
  %392 = vrot.lane.b32.xlu0 %v384, 16
  %v393 = vpop.permute.xlu0 %392
  %394 = vrot.lane.b32.xlu0 %v387, 16
  %v395 = vpop.permute.xlu0 %394
  %v398 = vsel %vm151, %v263, %v393
  %v399 = vsel %vm151, %v266, %v395
  %v400 = vpack.c.bf16 %v399, %v398
  %v401 = vld [vmem:[%s3] sm:$0xf]
  %v402 = vld [vmem:[%s3 + $0x4] sm:$0xf]
  %v403 = vld [vmem:[%s3 + $0x8] sm:$0xf]
  %v404 = vld [vmem:[%s3 + $0xc] sm:$0xf]
  %v405 = vlaneseq
  %v406 = vshrl.u32 %v405, 7
  %v407 = vsub.s32 1, %v406
  %v408 = vrot.slane %v81, %v407
  %v413 = vunpack.c.l.b16 %v401
  %v414 = vunpack.c.l.b16 %v402
  %v415 = vunpack.c.l.b16 %v403
  %v416 = vunpack.c.l.b16 %v404
  %v417 = vpack.c.b16 %v414, %v413
  %v418 = vpack.c.b16 %v416, %v415
  %v422 = vsel %vm41, %v400, 0
  %424 = vmatprep.subr.bf16.mxu0 0
  %425 = vmatpush1.bf16.msra.mxu0 0
  %426 = vmatprep.subr.bf16.mxu0 0
  %427 = vmatpush1.bf16.msra.mxu0 0
  %428 = vmatprep.subr.bf16.mxu0 0
  %429 = vmatpush1.bf16.msra.mxu0 0
  %430 = vmatprep.subr.bf16.mxu0 0
  %431 = vmatpush1.bf16.msra.mxu0 0
  %432 = vmatprep.subr.bf16.mxu0 0
  %433 = vmatpush1.bf16.msra.mxu0 0
  %434 = vmatprep.subr.bf16.mxu0 0
  %435 = vmatpush1.bf16.msra.mxu0 0
  %436 = vmatprep.subr.bf16.mxu0 0
  %437 = vmatpush1.bf16.msra.mxu0 %v418
  %438 = vmatprep.subr.bf16.mxu0 0
  %439 = vmatpush1.bf16.msra.mxu0 %v417
  %440 = vmatprep.subr.bf16.mxu0 0
  %441 = vmatpush2.bf16.msra.mxu0 0
  %442 = vmatprep.subr.bf16.mxu0 0
  %443 = vmatpush2.bf16.msra.mxu0 0
  %444 = vmatprep.subr.bf16.mxu0 0
  %445 = vmatpush2.bf16.msra.mxu0 0
  %446 = vmatprep.subr.bf16.mxu0 0
  %447 = vmatpush2.bf16.msra.mxu0 0
  %448 = vmatprep.subr.bf16.mxu0 0
  %449 = vmatpush2.bf16.msra.mxu0 0
  %450 = vmatprep.subr.bf16.mxu0 0
  %451 = vmatpush2.bf16.msra.mxu0 0
  %452 = vmatprep.subr.bf16.mxu0 0
  %453 = vmatpush2.bf16.msra.mxu0 0
  %454 = vmatprep.subr.bf16.mxu0 0
  %455 = vmatpush2.bf16.msra.mxu0 0
  %456 = vmatprep.mubr.bf16.mxu0 0
  %457 = vmatmul.mubr.bf16.gmra.mxu0 %v422
  %v458 = vpop.f32.mrf.mxu0
  %v459 = vadd.f32 %v408, %v458
  %v460 = vpop.f32.mrf.mxu0
  %v461 = vpop.f32.mrf.mxu0
  %v462 = vadd.f32 %v408, %v461
  %v463 = vpop.f32.mrf.mxu0
  %464 = vdwg.mxu0
  %v465 = vadd.f32 %v459, %v79
  %v466 = vadd.f32 %v462, %v80
  %v467 = vsel %vm41, %v465, 0.0
  %468 = vadd.xlane.f32.xlu0 %v467
  %v469 = vpop.xlane.xlu0 %468
  %v470 = vsel %vm41, %v466, 0.0
  %471 = vadd.xlane.f32.xlu0 %v470
  %v472 = vpop.xlane.xlu0 %471
  %v473 = vmul.f32 %v469, %v48
  %v474 = vmul.f32 %v472, %v48
  %v475 = vsub.f32 %v465, %v473
  %v476 = vsub.f32 %v466, %v474
  %v477 = vmul.f32 %v475, %v475
  %v478 = vmul.f32 %v476, %v476
  %v479 = vsel %vm41, %v477, 0.0
  %480 = vadd.xlane.f32.xlu0 %v479
  %v481 = vpop.xlane.xlu0 %480
  %v482 = vsel %vm41, %v478, 0.0
  %483 = vadd.xlane.f32.xlu0 %v482
  %v484 = vpop.xlane.xlu0 %483
  %v485 = vmul.f32 %v481, %v48
  %v486 = vmul.f32 %v484, %v48
  %v487 = vadd.f32 %v485, 1e-12
  %v488 = vadd.f32 %v486, 1e-12
  %v489 = vrsqrt.pop %v487
  %v490 = vrsqrt.pop %v488
  %v491 = vmul.f32 %v475, %v489
  %v492 = vmul.f32 %v476, %v490
  %v493 = vlaneseq
  %v494 = vshrl.u32 %v493, 7
  %v495 = vsub.s32 2, %v494
  %v496 = vrot.slane %v81, %v495
  %v497 = vmul.f32 %v491, %v496
  %v498 = vmul.f32 %v492, %v496
  %v499 = vlaneseq
  %v500 = vshrl.u32 %v499, 7
  %v501 = vsub.s32 3, %v500
  %v502 = vrot.slane %v81, %v501
  %v503 = vadd.f32 %v497, %v502
  %v504 = vadd.f32 %v498, %v502
  %v505 = vpack.c.bf16 %v504, %v503
  %v506 = vld [vmem:[%s4] sm:$0xf]
  %v507 = vld [vmem:[%s4 + $0x4] sm:$0xf]
  %v508 = vld [vmem:[%s4 + $0x8] sm:$0xf]
  %v509 = vld [vmem:[%s4 + $0xc] sm:$0xf]
  %v510 = vlaneseq
  %v511 = vshrl.u32 %v510, 7
  %v512 = vsub.s32 4, %v511
  %v513 = vrot.slane %v81, %v512
  %v518 = vunpack.c.l.b16 %v506
  %v519 = vunpack.c.l.b16 %v507
  %v520 = vunpack.c.l.b16 %v508
  %v521 = vunpack.c.l.b16 %v509
  %v522 = vpack.c.b16 %v519, %v518
  %v523 = vpack.c.b16 %v521, %v520
  %v527 = vsel %vm41, %v505, 0
  %529 = vmatprep.subr.bf16.mxu0 0
  %530 = vmatpush1.bf16.msra.mxu0 0
  %531 = vmatprep.subr.bf16.mxu0 0
  %532 = vmatpush1.bf16.msra.mxu0 0
  %533 = vmatprep.subr.bf16.mxu0 0
  %534 = vmatpush1.bf16.msra.mxu0 0
  %535 = vmatprep.subr.bf16.mxu0 0
  %536 = vmatpush1.bf16.msra.mxu0 0
  %537 = vmatprep.subr.bf16.mxu0 0
  %538 = vmatpush1.bf16.msra.mxu0 0
  %539 = vmatprep.subr.bf16.mxu0 0
  %540 = vmatpush1.bf16.msra.mxu0 0
  %541 = vmatprep.subr.bf16.mxu0 0
  %542 = vmatpush1.bf16.msra.mxu0 %v523
  %543 = vmatprep.subr.bf16.mxu0 0
  %544 = vmatpush1.bf16.msra.mxu0 %v522
  %545 = vmatprep.subr.bf16.mxu0 0
  %546 = vmatpush2.bf16.msra.mxu0 0
  %547 = vmatprep.subr.bf16.mxu0 0
  %548 = vmatpush2.bf16.msra.mxu0 0
  %549 = vmatprep.subr.bf16.mxu0 0
  %550 = vmatpush2.bf16.msra.mxu0 0
  %551 = vmatprep.subr.bf16.mxu0 0
  %552 = vmatpush2.bf16.msra.mxu0 0
  %553 = vmatprep.subr.bf16.mxu0 0
  %554 = vmatpush2.bf16.msra.mxu0 0
  %555 = vmatprep.subr.bf16.mxu0 0
  %556 = vmatpush2.bf16.msra.mxu0 0
  %557 = vmatprep.subr.bf16.mxu0 0
  %558 = vmatpush2.bf16.msra.mxu0 0
  %559 = vmatprep.subr.bf16.mxu0 0
  %560 = vmatpush2.bf16.msra.mxu0 0
  %561 = vmatprep.mubr.bf16.mxu0 0
  %562 = vmatmul.mubr.bf16.gmra.mxu0 %v527
  %v563 = vpop.f32.mrf.mxu0
  %v564 = vadd.f32 %v513, %v563
  %v565 = vpop.f32.mrf.mxu0
  %v566 = vpop.f32.mrf.mxu0
  %v567 = vadd.f32 %v513, %v566
  %v568 = vpop.f32.mrf.mxu0
  %569 = vdwg.mxu0
  %v570 = vmul.f32 %v564, 0.5
  %v571 = vmul.f32 %v567, 0.5
  %v572 = vmul.f32 %v564, 0.044715
  %v573 = vmul.f32 %v567, 0.044715
  %v574 = vmul.f32 %v572, %v564
  %v575 = vmul.f32 %v573, %v567
  %v576 = vmul.f32 %v574, %v564
  %v577 = vmul.f32 %v575, %v567
  %v578 = vadd.f32 %v564, %v576
  %v579 = vadd.f32 %v567, %v577
  %v580 = vmul.f32 %v578, 0.7978846
  %v581 = vmul.f32 %v579, 0.7978846
  %v582 = vtanh.pop %v580
  %v583 = vtanh.pop %v581
  %v584 = vadd.f32 %v582, 1.0
  %v585 = vadd.f32 %v583, 1.0
  %v586 = vmul.f32 %v570, %v584
  %v587 = vmul.f32 %v571, %v585
  %v588 = vpack.c.bf16 %v587, %v586
  %v589 = vld [vmem:[%s5] sm:$0xf]
  %v590 = vld [vmem:[%s5 + $0x4] sm:$0xf]
  %v591 = vld [vmem:[%s5 + $0x8] sm:$0xf]
  %v592 = vld [vmem:[%s5 + $0xc] sm:$0xf]
  %v593 = vld [vmem:[%s5 + $0x10] sm:$0xf]
  %v594 = vld [vmem:[%s5 + $0x14] sm:$0xf]
  %v595 = vld [vmem:[%s5 + $0x18] sm:$0xf]
  %v596 = vld [vmem:[%s5 + $0x1c] sm:$0xf]
  %v597 = vlaneseq
  %v598 = vshrl.u32 %v597, 7
  %v599 = vsub.s32 5, %v598
  %v600 = vrot.slane %v81, %v599
  %v609 = vunpack.c.l.b16 %v589
  %v610 = vunpack.c.l.b16 %v590
  %v611 = vunpack.c.l.b16 %v591
  %v612 = vunpack.c.l.b16 %v592
  %v613 = vunpack.c.l.b16 %v593
  %v614 = vunpack.c.l.b16 %v594
  %v615 = vunpack.c.l.b16 %v595
  %v616 = vunpack.c.l.b16 %v596
  %v617 = vpack.c.b16 %v610, %v609
  %v618 = vpack.c.b16 %v612, %v611
  %v619 = vpack.c.b16 %v614, %v613
  %v620 = vpack.c.b16 %v616, %v615
  %vm625 = vcmask 523264
  %v627 = vsel %vm625, %v588, 0
  %629 = vmatprep.subr.bf16.mxu0 0
  %630 = vmatpush1.bf16.msra.mxu0 0
  %631 = vmatprep.subr.bf16.mxu0 0
  %632 = vmatpush1.bf16.msra.mxu0 0
  %633 = vmatprep.subr.bf16.mxu0 0
  %634 = vmatpush1.bf16.msra.mxu0 0
  %635 = vmatprep.subr.bf16.mxu0 0
  %636 = vmatpush1.bf16.msra.mxu0 0
  %637 = vmatprep.subr.bf16.mxu0 0
  %638 = vmatpush1.bf16.msra.mxu0 %v620
  %639 = vmatprep.subr.bf16.mxu0 0
  %640 = vmatpush1.bf16.msra.mxu0 %v619
  %641 = vmatprep.subr.bf16.mxu0 0
  %642 = vmatpush1.bf16.msra.mxu0 %v618
  %643 = vmatprep.subr.bf16.mxu0 0
  %644 = vmatpush1.bf16.msra.mxu0 %v617
  %645 = vmatprep.subr.bf16.mxu0 0
  %646 = vmatpush2.bf16.msra.mxu0 0
  %647 = vmatprep.subr.bf16.mxu0 0
  %648 = vmatpush2.bf16.msra.mxu0 0
  %649 = vmatprep.subr.bf16.mxu0 0
  %650 = vmatpush2.bf16.msra.mxu0 0
  %651 = vmatprep.subr.bf16.mxu0 0
  %652 = vmatpush2.bf16.msra.mxu0 0
  %653 = vmatprep.subr.bf16.mxu0 0
  %654 = vmatpush2.bf16.msra.mxu0 0
  %655 = vmatprep.subr.bf16.mxu0 0
  %656 = vmatpush2.bf16.msra.mxu0 0
  %657 = vmatprep.subr.bf16.mxu0 0
  %658 = vmatpush2.bf16.msra.mxu0 0
  %659 = vmatprep.subr.bf16.mxu0 0
  %660 = vmatpush2.bf16.msra.mxu0 0
  %661 = vmatprep.mubr.bf16.mxu0 0
  %662 = vmatmul.mubr.bf16.gmra.mxu0 %v627
  %v663 = vpop.f32.mrf.mxu0
  %v664 = vadd.f32 %v600, %v663
  %v665 = vpop.f32.mrf.mxu0
  %v666 = vpop.f32.mrf.mxu0
  %v667 = vadd.f32 %v600, %v666
  %v668 = vpop.f32.mrf.mxu0
  %669 = vdwg.mxu0
  %v670 = vadd.f32 %v664, %v503
  %v671 = vadd.f32 %v667, %v504
  %v672 = vsel %vm41, %v670, 0.0
  %673 = vadd.xlane.f32.xlu0 %v672
  %v674 = vpop.xlane.xlu0 %673
  %v675 = vsel %vm41, %v671, 0.0
  %676 = vadd.xlane.f32.xlu0 %v675
  %v677 = vpop.xlane.xlu0 %676
  %v678 = vmul.f32 %v674, %v48
  %v679 = vmul.f32 %v677, %v48
  %v680 = vsub.f32 %v670, %v678
  %v681 = vsub.f32 %v671, %v679
  %v682 = vmul.f32 %v680, %v680
  %v683 = vmul.f32 %v681, %v681
  %v684 = vsel %vm41, %v682, 0.0
  %685 = vadd.xlane.f32.xlu0 %v684
  %v686 = vpop.xlane.xlu0 %685
  %v687 = vsel %vm41, %v683, 0.0
  %688 = vadd.xlane.f32.xlu0 %v687
  %v689 = vpop.xlane.xlu0 %688
  %v690 = vmul.f32 %v686, %v48
  %v691 = vmul.f32 %v689, %v48
  %v692 = vadd.f32 %v690, 1e-12
  %v693 = vadd.f32 %v691, 1e-12
  %v694 = vrsqrt.pop %v692
  %v695 = vrsqrt.pop %v693
  %v696 = vmul.f32 %v680, %v694
  %v697 = vmul.f32 %v681, %v695
  %v698 = vlaneseq
  %v699 = vshrl.u32 %v698, 7
  %v700 = vsub.s32 6, %v699
  %v701 = vrot.slane %v81, %v700
  %v702 = vmul.f32 %v696, %v701
  %v703 = vmul.f32 %v697, %v701
  %v704 = vlaneseq
  %v705 = vshrl.u32 %v704, 7
  %v706 = vsub.s32 7, %v705
  %v707 = vrot.slane %v81, %v706
  %v708 = vadd.f32 %v702, %v707
  %v709 = vadd.f32 %v703, %v707
  %s710 = scalar_lea.vmem %s6, 8
  %v711 = vld [vmem:[%s710] sm:$0xff]
  %v712 = vpack.c.bf16 %v709, %v708
  %s713 = scalar_lea.vmem %s2, 16
  %v714 = vld [vmem:[%s713] sm:$0xf]
  %v715 = vld [vmem:[%s713 + $0x4] sm:$0xf]
  %v716 = vld [vmem:[%s713 + $0x8] sm:$0xf]
  %v717 = vld [vmem:[%s713 + $0xc] sm:$0xf]
  %v718 = vlaneseq
  %v719 = vshrl.u32 %v718, 7
  %v720 = vsub.s32 0, %v719
  %v721 = vrot.slane %v711, %v720
  %v726 = vunpack.c.l.b16 %v714
  %v727 = vunpack.c.l.b16 %v715
  %v728 = vunpack.c.l.b16 %v716
  %v729 = vunpack.c.l.b16 %v717
  %v730 = vpack.c.b16 %v727, %v726
  %v731 = vpack.c.b16 %v729, %v728
  %v735 = vsel %vm41, %v712, 0
  %737 = vmatprep.subr.bf16.mxu0 0
  %738 = vmatpush1.bf16.msra.mxu0 0
  %739 = vmatprep.subr.bf16.mxu0 0
  %740 = vmatpush1.bf16.msra.mxu0 0
  %741 = vmatprep.subr.bf16.mxu0 0
  %742 = vmatpush1.bf16.msra.mxu0 0
  %743 = vmatprep.subr.bf16.mxu0 0
  %744 = vmatpush1.bf16.msra.mxu0 0
  %745 = vmatprep.subr.bf16.mxu0 0
  %746 = vmatpush1.bf16.msra.mxu0 0
  %747 = vmatprep.subr.bf16.mxu0 0
  %748 = vmatpush1.bf16.msra.mxu0 0
  %749 = vmatprep.subr.bf16.mxu0 0
  %750 = vmatpush1.bf16.msra.mxu0 %v731
  %751 = vmatprep.subr.bf16.mxu0 0
  %752 = vmatpush1.bf16.msra.mxu0 %v730
  %753 = vmatprep.subr.bf16.mxu0 0
  %754 = vmatpush2.bf16.msra.mxu0 0
  %755 = vmatprep.subr.bf16.mxu0 0
  %756 = vmatpush2.bf16.msra.mxu0 0
  %757 = vmatprep.subr.bf16.mxu0 0
  %758 = vmatpush2.bf16.msra.mxu0 0
  %759 = vmatprep.subr.bf16.mxu0 0
  %760 = vmatpush2.bf16.msra.mxu0 0
  %761 = vmatprep.subr.bf16.mxu0 0
  %762 = vmatpush2.bf16.msra.mxu0 0
  %763 = vmatprep.subr.bf16.mxu0 0
  %764 = vmatpush2.bf16.msra.mxu0 0
  %765 = vmatprep.subr.bf16.mxu0 0
  %766 = vmatpush2.bf16.msra.mxu0 0
  %767 = vmatprep.subr.bf16.mxu0 0
  %768 = vmatpush2.bf16.msra.mxu0 0
  %769 = vmatprep.mubr.bf16.mxu0 0
  %770 = vmatmul.mubr.bf16.gmra.mxu0 %v735
  %v771 = vpop.f32.mrf.mxu0
  %v772 = vadd.f32 %v721, %v771
  %v773 = vpop.f32.mrf.mxu0
  %v774 = vpop.f32.mrf.mxu0
  %v775 = vadd.f32 %v721, %v774
  %v776 = vpop.f32.mrf.mxu0
  %777 = vdwg.mxu0
  %v778 = vpack.c.bf16 %v775, %v772
  %780 = vrot.lane.b32.xlu0 %v778, 96
  %v781 = vpop.permute.xlu0 %780
  %v783 = vsel %vm151, %v778, 0
  %v786 = vsel %vm151, %v781, 0
  %788 = vmatprep.subr.bf16.mxu0 0
  %789 = vmatpush1.bf16.xpose.msra.mxu0 0
  %790 = vmatprep.subr.bf16.mxu0 0
  %791 = vmatpush1.bf16.xpose.msra.mxu0 0
  %792 = vmatprep.subr.bf16.mxu0 0
  %793 = vmatpush1.bf16.xpose.msra.mxu0 0
  %794 = vmatprep.subr.bf16.mxu0 0
  %795 = vmatpush1.bf16.xpose.msra.mxu0 0
  %796 = vmatprep.subr.bf16.mxu0 0
  %797 = vmatpush1.bf16.xpose.msra.mxu0 0
  %798 = vmatprep.subr.bf16.mxu0 0
  %799 = vmatpush1.bf16.xpose.msra.mxu0 0
  %800 = vmatprep.subr.bf16.mxu0 0
  %801 = vmatpush1.bf16.xpose.msra.mxu0 0
  %802 = vmatprep.subr.bf16.mxu0 0
  %803 = vmatpush1.bf16.xpose.msra.mxu0 %v786
  %804 = vmatprep.subr.bf16.mxu0 0
  %805 = vmatpush2.bf16.xpose.msra.mxu0 0
  %806 = vmatprep.subr.bf16.mxu0 0
  %807 = vmatpush2.bf16.xpose.msra.mxu0 0
  %808 = vmatprep.subr.bf16.mxu0 0
  %809 = vmatpush2.bf16.xpose.msra.mxu0 0
  %810 = vmatprep.subr.bf16.mxu0 0
  %811 = vmatpush2.bf16.xpose.msra.mxu0 0
  %812 = vmatprep.subr.bf16.mxu0 0
  %813 = vmatpush2.bf16.xpose.msra.mxu0 0
  %814 = vmatprep.subr.bf16.mxu0 0
  %815 = vmatpush2.bf16.xpose.msra.mxu0 0
  %816 = vmatprep.subr.bf16.mxu0 0
  %817 = vmatpush2.bf16.xpose.msra.mxu0 0
  %818 = vmatprep.subr.bf16.mxu0 0
  %819 = vmatpush2.bf16.xpose.msra.mxu0 0
  %820 = vmatprep.mubr.bf16.mxu0 0
  %821 = vmatmul.mubr.bf16.gmra.mxu0 %v783
  %v822 = vpop.f32.mrf.mxu0
  %v823 = vadd.f32 %v36, %v822
  %v824 = vpop.f32.mrf.mxu0
  %v825 = vpop.f32.mrf.mxu0
  %v826 = vadd.f32 %v37, %v825
  %v827 = vpop.f32.mrf.mxu0
  %828 = vdwg.mxu0
  %v829 = vsel %vm151, %v823, -inf
  %830 = vmax.xlane.f32.xlu0 %v829
  %v831 = vpop.xlane.xlu0 %830
  %v832 = vsel %vm151, %v826, -inf
  %833 = vmax.xlane.f32.xlu0 %v832
  %v834 = vpop.xlane.xlu0 %833
  %v835 = vsub.f32 %v823, %v831
  %v836 = vsub.f32 %v826, %v834
  %v837 = vmul.f32 %v835, 1.442695
  %v838 = vpow.pop %v837
  %v839 = vmul.f32 %v836, 1.442695
  %v840 = vpow.pop %v839
  %v841 = vsel %vm151, %v838, 0.0
  %842 = vadd.xlane.f32.xlu0 %v841
  %v843 = vpop.xlane.xlu0 %842
  %v844 = vsel %vm151, %v840, 0.0
  %845 = vadd.xlane.f32.xlu0 %v844
  %v846 = vpop.xlane.xlu0 %845
  %v847 = vrcp.pop %v843
  %v848 = vmul.f32 %v838, %v847
  %v849 = vrcp.pop %v846
  %v850 = vmul.f32 %v840, %v849
  %v851 = vpack.c.bf16 %v850, %v848
  %852 = vrot.lane.b32.xlu0 %v778, 64
  %v853 = vpop.permute.xlu0 %852
  %v856 = vsel %vm151, %v851, 0
  %858 = vmatprep.subr.bf16.mxu0 0
  %859 = vmatpush1.bf16.msra.mxu0 0
  %860 = vmatprep.subr.bf16.mxu0 0
  %861 = vmatpush1.bf16.msra.mxu0 0
  %862 = vmatprep.subr.bf16.mxu0 0
  %863 = vmatpush1.bf16.msra.mxu0 0
  %864 = vmatprep.subr.bf16.mxu0 0
  %865 = vmatpush1.bf16.msra.mxu0 0
  %866 = vmatprep.subr.bf16.mxu0 0
  %867 = vmatpush1.bf16.msra.mxu0 0
  %868 = vmatprep.subr.bf16.mxu0 0
  %869 = vmatpush1.bf16.msra.mxu0 0
  %870 = vmatprep.subr.bf16.mxu0 0
  %871 = vmatpush1.bf16.msra.mxu0 0
  %872 = vmatprep.subr.bf16.mxu0 0
  %873 = vmatpush1.bf16.msra.mxu0 %v853
  %874 = vmatprep.subr.bf16.mxu0 0
  %875 = vmatpush2.bf16.msra.mxu0 0
  %876 = vmatprep.subr.bf16.mxu0 0
  %877 = vmatpush2.bf16.msra.mxu0 0
  %878 = vmatprep.subr.bf16.mxu0 0
  %879 = vmatpush2.bf16.msra.mxu0 0
  %880 = vmatprep.subr.bf16.mxu0 0
  %881 = vmatpush2.bf16.msra.mxu0 0
  %882 = vmatprep.subr.bf16.mxu0 0
  %883 = vmatpush2.bf16.msra.mxu0 0
  %884 = vmatprep.subr.bf16.mxu0 0
  %885 = vmatpush2.bf16.msra.mxu0 0
  %886 = vmatprep.subr.bf16.mxu0 0
  %887 = vmatpush2.bf16.msra.mxu0 0
  %888 = vmatprep.subr.bf16.mxu0 0
  %889 = vmatpush2.bf16.msra.mxu0 0
  %890 = vmatprep.mubr.bf16.mxu0 0
  %891 = vmatmul.mubr.bf16.gmra.mxu0 %v856
  %v892 = vpop.f32.mrf.mxu0
  %v893 = vadd.f32 0.0, %v892
  %v894 = vpop.f32.mrf.mxu0
  %v895 = vpop.f32.mrf.mxu0
  %v896 = vadd.f32 0.0, %v895
  %v897 = vpop.f32.mrf.mxu0
  %898 = vdwg.mxu0
  %899 = vrot.lane.b32.xlu0 %v778, 112
  %v900 = vpop.permute.xlu0 %899
  %901 = vrot.lane.b32.xlu0 %v778, 80
  %v902 = vpop.permute.xlu0 %901
  %v904 = vsel %vm151, %v900, 0
  %v907 = vsel %vm151, %v902, 0
  %909 = vmatprep.subr.bf16.mxu0 0
  %910 = vmatpush1.bf16.xpose.msra.mxu0 0
  %911 = vmatprep.subr.bf16.mxu0 0
  %912 = vmatpush1.bf16.xpose.msra.mxu0 0
  %913 = vmatprep.subr.bf16.mxu0 0
  %914 = vmatpush1.bf16.xpose.msra.mxu0 0
  %915 = vmatprep.subr.bf16.mxu0 0
  %916 = vmatpush1.bf16.xpose.msra.mxu0 0
  %917 = vmatprep.subr.bf16.mxu0 0
  %918 = vmatpush1.bf16.xpose.msra.mxu0 0
  %919 = vmatprep.subr.bf16.mxu0 0
  %920 = vmatpush1.bf16.xpose.msra.mxu0 0
  %921 = vmatprep.subr.bf16.mxu0 0
  %922 = vmatpush1.bf16.xpose.msra.mxu0 0
  %923 = vmatprep.subr.bf16.mxu0 0
  %924 = vmatpush1.bf16.xpose.msra.mxu0 %v907
  %925 = vmatprep.subr.bf16.mxu0 0
  %926 = vmatpush2.bf16.xpose.msra.mxu0 0
  %927 = vmatprep.subr.bf16.mxu0 0
  %928 = vmatpush2.bf16.xpose.msra.mxu0 0
  %929 = vmatprep.subr.bf16.mxu0 0
  %930 = vmatpush2.bf16.xpose.msra.mxu0 0
  %931 = vmatprep.subr.bf16.mxu0 0
  %932 = vmatpush2.bf16.xpose.msra.mxu0 0
  %933 = vmatprep.subr.bf16.mxu0 0
  %934 = vmatpush2.bf16.xpose.msra.mxu0 0
  %935 = vmatprep.subr.bf16.mxu0 0
  %936 = vmatpush2.bf16.xpose.msra.mxu0 0
  %937 = vmatprep.subr.bf16.mxu0 0
  %938 = vmatpush2.bf16.xpose.msra.mxu0 0
  %939 = vmatprep.subr.bf16.mxu0 0
  %940 = vmatpush2.bf16.xpose.msra.mxu0 0
  %941 = vmatprep.mubr.bf16.mxu0 0
  %942 = vmatmul.mubr.bf16.gmra.mxu0 %v904
  %v943 = vpop.f32.mrf.mxu0
  %v944 = vadd.f32 %v36, %v943
  %v945 = vpop.f32.mrf.mxu0
  %v946 = vpop.f32.mrf.mxu0
  %v947 = vadd.f32 %v37, %v946
  %v948 = vpop.f32.mrf.mxu0
  %949 = vdwg.mxu0
  %v950 = vsel %vm151, %v944, -inf
  %951 = vmax.xlane.f32.xlu0 %v950
  %v952 = vpop.xlane.xlu0 %951
  %v953 = vsel %vm151, %v947, -inf
  %954 = vmax.xlane.f32.xlu0 %v953
  %v955 = vpop.xlane.xlu0 %954
  %v956 = vsub.f32 %v944, %v952
  %v957 = vsub.f32 %v947, %v955
  %v958 = vmul.f32 %v956, 1.442695
  %v959 = vpow.pop %v958
  %v960 = vmul.f32 %v957, 1.442695
  %v961 = vpow.pop %v960
  %v962 = vsel %vm151, %v959, 0.0
  %963 = vadd.xlane.f32.xlu0 %v962
  %v964 = vpop.xlane.xlu0 %963
  %v965 = vsel %vm151, %v961, 0.0
  %966 = vadd.xlane.f32.xlu0 %v965
  %v967 = vpop.xlane.xlu0 %966
  %v968 = vrcp.pop %v964
  %v969 = vmul.f32 %v959, %v968
  %v970 = vrcp.pop %v967
  %v971 = vmul.f32 %v961, %v970
  %v972 = vpack.c.bf16 %v971, %v969
  %973 = vrot.lane.b32.xlu0 %v778, 48
  %v974 = vpop.permute.xlu0 %973
  %v977 = vsel %vm151, %v972, 0
  %979 = vmatprep.subr.bf16.mxu0 0
  %980 = vmatpush1.bf16.msra.mxu0 0
  %981 = vmatprep.subr.bf16.mxu0 0
  %982 = vmatpush1.bf16.msra.mxu0 0
  %983 = vmatprep.subr.bf16.mxu0 0
  %984 = vmatpush1.bf16.msra.mxu0 0
  %985 = vmatprep.subr.bf16.mxu0 0
  %986 = vmatpush1.bf16.msra.mxu0 0
  %987 = vmatprep.subr.bf16.mxu0 0
  %988 = vmatpush1.bf16.msra.mxu0 0
  %989 = vmatprep.subr.bf16.mxu0 0
  %990 = vmatpush1.bf16.msra.mxu0 0
  %991 = vmatprep.subr.bf16.mxu0 0
  %992 = vmatpush1.bf16.msra.mxu0 0
  %993 = vmatprep.subr.bf16.mxu0 0
  %994 = vmatpush1.bf16.msra.mxu0 %v974
  %995 = vmatprep.subr.bf16.mxu0 0
  %996 = vmatpush2.bf16.msra.mxu0 0
  %997 = vmatprep.subr.bf16.mxu0 0
  %998 = vmatpush2.bf16.msra.mxu0 0
  %999 = vmatprep.subr.bf16.mxu0 0
  %1000 = vmatpush2.bf16.msra.mxu0 0
  %1001 = vmatprep.subr.bf16.mxu0 0
  %1002 = vmatpush2.bf16.msra.mxu0 0
  %1003 = vmatprep.subr.bf16.mxu0 0
  %1004 = vmatpush2.bf16.msra.mxu0 0
  %1005 = vmatprep.subr.bf16.mxu0 0
  %1006 = vmatpush2.bf16.msra.mxu0 0
  %1007 = vmatprep.subr.bf16.mxu0 0
  %1008 = vmatpush2.bf16.msra.mxu0 0
  %1009 = vmatprep.subr.bf16.mxu0 0
  %1010 = vmatpush2.bf16.msra.mxu0 0
  %1011 = vmatprep.mubr.bf16.mxu0 0
  %1012 = vmatmul.mubr.bf16.gmra.mxu0 %v977
  %v1013 = vpop.f32.mrf.mxu0
  %v1014 = vadd.f32 0.0, %v1013
  %v1015 = vpop.f32.mrf.mxu0
  %v1016 = vpop.f32.mrf.mxu0
  %v1017 = vadd.f32 0.0, %v1016
  %v1018 = vpop.f32.mrf.mxu0
  %1019 = vdwg.mxu0
  %1022 = vrot.lane.b32.xlu0 %v1014, 16
  %v1023 = vpop.permute.xlu0 %1022
  %1024 = vrot.lane.b32.xlu0 %v1017, 16
  %v1025 = vpop.permute.xlu0 %1024
  %v1028 = vsel %vm151, %v893, %v1023
  %v1029 = vsel %vm151, %v896, %v1025
  %v1030 = vpack.c.bf16 %v1029, %v1028
  %s1031 = scalar_lea.vmem %s3, 16
  %v1032 = vld [vmem:[%s1031] sm:$0xf]
  %v1033 = vld [vmem:[%s1031 + $0x4] sm:$0xf]
  %v1034 = vld [vmem:[%s1031 + $0x8] sm:$0xf]
  %v1035 = vld [vmem:[%s1031 + $0xc] sm:$0xf]
  %v1036 = vlaneseq
  %v1037 = vshrl.u32 %v1036, 7
  %v1038 = vsub.s32 1, %v1037
  %v1039 = vrot.slane %v711, %v1038
  %v1044 = vunpack.c.l.b16 %v1032
  %v1045 = vunpack.c.l.b16 %v1033
  %v1046 = vunpack.c.l.b16 %v1034
  %v1047 = vunpack.c.l.b16 %v1035
  %v1048 = vpack.c.b16 %v1045, %v1044
  %v1049 = vpack.c.b16 %v1047, %v1046
  %v1053 = vsel %vm41, %v1030, 0
  %1055 = vmatprep.subr.bf16.mxu0 0
  %1056 = vmatpush1.bf16.msra.mxu0 0
  %1057 = vmatprep.subr.bf16.mxu0 0
  %1058 = vmatpush1.bf16.msra.mxu0 0
  %1059 = vmatprep.subr.bf16.mxu0 0
  %1060 = vmatpush1.bf16.msra.mxu0 0
  %1061 = vmatprep.subr.bf16.mxu0 0
  %1062 = vmatpush1.bf16.msra.mxu0 0
  %1063 = vmatprep.subr.bf16.mxu0 0
  %1064 = vmatpush1.bf16.msra.mxu0 0
  %1065 = vmatprep.subr.bf16.mxu0 0
  %1066 = vmatpush1.bf16.msra.mxu0 0
  %1067 = vmatprep.subr.bf16.mxu0 0
  %1068 = vmatpush1.bf16.msra.mxu0 %v1049
  %1069 = vmatprep.subr.bf16.mxu0 0
  %1070 = vmatpush1.bf16.msra.mxu0 %v1048
  %1071 = vmatprep.subr.bf16.mxu0 0
  %1072 = vmatpush2.bf16.msra.mxu0 0
  %1073 = vmatprep.subr.bf16.mxu0 0
  %1074 = vmatpush2.bf16.msra.mxu0 0
  %1075 = vmatprep.subr.bf16.mxu0 0
  %1076 = vmatpush2.bf16.msra.mxu0 0
  %1077 = vmatprep.subr.bf16.mxu0 0
  %1078 = vmatpush2.bf16.msra.mxu0 0
  %1079 = vmatprep.subr.bf16.mxu0 0
  %1080 = vmatpush2.bf16.msra.mxu0 0
  %1081 = vmatprep.subr.bf16.mxu0 0
  %1082 = vmatpush2.bf16.msra.mxu0 0
  %1083 = vmatprep.subr.bf16.mxu0 0
  %1084 = vmatpush2.bf16.msra.mxu0 0
  %1085 = vmatprep.subr.bf16.mxu0 0
  %1086 = vmatpush2.bf16.msra.mxu0 0
  %1087 = vmatprep.mubr.bf16.mxu0 0
  %1088 = vmatmul.mubr.bf16.gmra.mxu0 %v1053
  %v1089 = vpop.f32.mrf.mxu0
  %v1090 = vadd.f32 %v1039, %v1089
  %v1091 = vpop.f32.mrf.mxu0
  %v1092 = vpop.f32.mrf.mxu0
  %v1093 = vadd.f32 %v1039, %v1092
  %v1094 = vpop.f32.mrf.mxu0
  %1095 = vdwg.mxu0
  %v1096 = vadd.f32 %v1090, %v708
  %v1097 = vadd.f32 %v1093, %v709
  %v1098 = vsel %vm41, %v1096, 0.0
  %1099 = vadd.xlane.f32.xlu0 %v1098
  %v1100 = vpop.xlane.xlu0 %1099
  %v1101 = vsel %vm41, %v1097, 0.0
  %1102 = vadd.xlane.f32.xlu0 %v1101
  %v1103 = vpop.xlane.xlu0 %1102
  %v1104 = vmul.f32 %v1100, %v48
  %v1105 = vmul.f32 %v1103, %v48
  %v1106 = vsub.f32 %v1096, %v1104
  %v1107 = vsub.f32 %v1097, %v1105
  %v1108 = vmul.f32 %v1106, %v1106
  %v1109 = vmul.f32 %v1107, %v1107
  %v1110 = vsel %vm41, %v1108, 0.0
  %1111 = vadd.xlane.f32.xlu0 %v1110
  %v1112 = vpop.xlane.xlu0 %1111
  %v1113 = vsel %vm41, %v1109, 0.0
  %1114 = vadd.xlane.f32.xlu0 %v1113
  %v1115 = vpop.xlane.xlu0 %1114
  %v1116 = vmul.f32 %v1112, %v48
  %v1117 = vmul.f32 %v1115, %v48
  %v1118 = vadd.f32 %v1116, 1e-12
  %v1119 = vadd.f32 %v1117, 1e-12
  %v1120 = vrsqrt.pop %v1118
  %v1121 = vrsqrt.pop %v1119
  %v1122 = vmul.f32 %v1106, %v1120
  %v1123 = vmul.f32 %v1107, %v1121
  %v1124 = vlaneseq
  %v1125 = vshrl.u32 %v1124, 7
  %v1126 = vsub.s32 2, %v1125
  %v1127 = vrot.slane %v711, %v1126
  %v1128 = vmul.f32 %v1122, %v1127
  %v1129 = vmul.f32 %v1123, %v1127
  %v1130 = vlaneseq
  %v1131 = vshrl.u32 %v1130, 7
  %v1132 = vsub.s32 3, %v1131
  %v1133 = vrot.slane %v711, %v1132
  %v1134 = vadd.f32 %v1128, %v1133
  %v1135 = vadd.f32 %v1129, %v1133
  %v1136 = vpack.c.bf16 %v1135, %v1134
  %s1137 = scalar_lea.vmem %s4, 16
  %v1138 = vld [vmem:[%s1137] sm:$0xf]
  %v1139 = vld [vmem:[%s1137 + $0x4] sm:$0xf]
  %v1140 = vld [vmem:[%s1137 + $0x8] sm:$0xf]
  %v1141 = vld [vmem:[%s1137 + $0xc] sm:$0xf]
  %v1142 = vlaneseq
  %v1143 = vshrl.u32 %v1142, 7
  %v1144 = vsub.s32 4, %v1143
  %v1145 = vrot.slane %v711, %v1144
  %v1150 = vunpack.c.l.b16 %v1138
  %v1151 = vunpack.c.l.b16 %v1139
  %v1152 = vunpack.c.l.b16 %v1140
  %v1153 = vunpack.c.l.b16 %v1141
  %v1154 = vpack.c.b16 %v1151, %v1150
  %v1155 = vpack.c.b16 %v1153, %v1152
  %v1159 = vsel %vm41, %v1136, 0
  %1161 = vmatprep.subr.bf16.mxu0 0
  %1162 = vmatpush1.bf16.msra.mxu0 0
  %1163 = vmatprep.subr.bf16.mxu0 0
  %1164 = vmatpush1.bf16.msra.mxu0 0
  %1165 = vmatprep.subr.bf16.mxu0 0
  %1166 = vmatpush1.bf16.msra.mxu0 0
  %1167 = vmatprep.subr.bf16.mxu0 0
  %1168 = vmatpush1.bf16.msra.mxu0 0
  %1169 = vmatprep.subr.bf16.mxu0 0
  %1170 = vmatpush1.bf16.msra.mxu0 0
  %1171 = vmatprep.subr.bf16.mxu0 0
  %1172 = vmatpush1.bf16.msra.mxu0 0
  %1173 = vmatprep.subr.bf16.mxu0 0
  %1174 = vmatpush1.bf16.msra.mxu0 %v1155
  %1175 = vmatprep.subr.bf16.mxu0 0
  %1176 = vmatpush1.bf16.msra.mxu0 %v1154
  %1177 = vmatprep.subr.bf16.mxu0 0
  %1178 = vmatpush2.bf16.msra.mxu0 0
  %1179 = vmatprep.subr.bf16.mxu0 0
  %1180 = vmatpush2.bf16.msra.mxu0 0
  %1181 = vmatprep.subr.bf16.mxu0 0
  %1182 = vmatpush2.bf16.msra.mxu0 0
  %1183 = vmatprep.subr.bf16.mxu0 0
  %1184 = vmatpush2.bf16.msra.mxu0 0
  %1185 = vmatprep.subr.bf16.mxu0 0
  %1186 = vmatpush2.bf16.msra.mxu0 0
  %1187 = vmatprep.subr.bf16.mxu0 0
  %1188 = vmatpush2.bf16.msra.mxu0 0
  %1189 = vmatprep.subr.bf16.mxu0 0
  %1190 = vmatpush2.bf16.msra.mxu0 0
  %1191 = vmatprep.subr.bf16.mxu0 0
  %1192 = vmatpush2.bf16.msra.mxu0 0
  %1193 = vmatprep.mubr.bf16.mxu0 0
  %1194 = vmatmul.mubr.bf16.gmra.mxu0 %v1159
  %v1195 = vpop.f32.mrf.mxu0
  %v1196 = vadd.f32 %v1145, %v1195
  %v1197 = vpop.f32.mrf.mxu0
  %v1198 = vpop.f32.mrf.mxu0
  %v1199 = vadd.f32 %v1145, %v1198
  %v1200 = vpop.f32.mrf.mxu0
  %1201 = vdwg.mxu0
  %v1202 = vmul.f32 %v1196, 0.5
  %v1203 = vmul.f32 %v1199, 0.5
  %v1204 = vmul.f32 %v1196, 0.044715
  %v1205 = vmul.f32 %v1199, 0.044715
  %v1206 = vmul.f32 %v1204, %v1196
  %v1207 = vmul.f32 %v1205, %v1199
  %v1208 = vmul.f32 %v1206, %v1196
  %v1209 = vmul.f32 %v1207, %v1199
  %v1210 = vadd.f32 %v1196, %v1208
  %v1211 = vadd.f32 %v1199, %v1209
  %v1212 = vmul.f32 %v1210, 0.7978846
  %v1213 = vmul.f32 %v1211, 0.7978846
  %v1214 = vtanh.pop %v1212
  %v1215 = vtanh.pop %v1213
  %v1216 = vadd.f32 %v1214, 1.0
  %v1217 = vadd.f32 %v1215, 1.0
  %v1218 = vmul.f32 %v1202, %v1216
  %v1219 = vmul.f32 %v1203, %v1217
  %v1220 = vpack.c.bf16 %v1219, %v1218
  %s1221 = scalar_lea.vmem %s5, 32
  %v1222 = vld [vmem:[%s1221] sm:$0xf]
  %v1223 = vld [vmem:[%s1221 + $0x4] sm:$0xf]
  %v1224 = vld [vmem:[%s1221 + $0x8] sm:$0xf]
  %v1225 = vld [vmem:[%s1221 + $0xc] sm:$0xf]
  %v1226 = vld [vmem:[%s1221 + $0x10] sm:$0xf]
  %v1227 = vld [vmem:[%s1221 + $0x14] sm:$0xf]
  %v1228 = vld [vmem:[%s1221 + $0x18] sm:$0xf]
  %v1229 = vld [vmem:[%s1221 + $0x1c] sm:$0xf]
  %v1230 = vlaneseq
  %v1231 = vshrl.u32 %v1230, 7
  %v1232 = vsub.s32 5, %v1231
  %v1233 = vrot.slane %v711, %v1232
  %v1242 = vunpack.c.l.b16 %v1222
  %v1243 = vunpack.c.l.b16 %v1223
  %v1244 = vunpack.c.l.b16 %v1224
  %v1245 = vunpack.c.l.b16 %v1225
  %v1246 = vunpack.c.l.b16 %v1226
  %v1247 = vunpack.c.l.b16 %v1227
  %v1248 = vunpack.c.l.b16 %v1228
  %v1249 = vunpack.c.l.b16 %v1229
  %v1250 = vpack.c.b16 %v1243, %v1242
  %v1251 = vpack.c.b16 %v1245, %v1244
  %v1252 = vpack.c.b16 %v1247, %v1246
  %v1253 = vpack.c.b16 %v1249, %v1248
  %v1259 = vsel %vm625, %v1220, 0
  %1261 = vmatprep.subr.bf16.mxu0 0
  %1262 = vmatpush1.bf16.msra.mxu0 0
  %1263 = vmatprep.subr.bf16.mxu0 0
  %1264 = vmatpush1.bf16.msra.mxu0 0
  %1265 = vmatprep.subr.bf16.mxu0 0
  %1266 = vmatpush1.bf16.msra.mxu0 0
  %1267 = vmatprep.subr.bf16.mxu0 0
  %1268 = vmatpush1.bf16.msra.mxu0 0
  %1269 = vmatprep.subr.bf16.mxu0 0
  %1270 = vmatpush1.bf16.msra.mxu0 %v1253
  %1271 = vmatprep.subr.bf16.mxu0 0
  %1272 = vmatpush1.bf16.msra.mxu0 %v1252
  %1273 = vmatprep.subr.bf16.mxu0 0
  %1274 = vmatpush1.bf16.msra.mxu0 %v1251
  %1275 = vmatprep.subr.bf16.mxu0 0
  %1276 = vmatpush1.bf16.msra.mxu0 %v1250
  %1277 = vmatprep.subr.bf16.mxu0 0
  %1278 = vmatpush2.bf16.msra.mxu0 0
  %1279 = vmatprep.subr.bf16.mxu0 0
  %1280 = vmatpush2.bf16.msra.mxu0 0
  %1281 = vmatprep.subr.bf16.mxu0 0
  %1282 = vmatpush2.bf16.msra.mxu0 0
  %1283 = vmatprep.subr.bf16.mxu0 0
  %1284 = vmatpush2.bf16.msra.mxu0 0
  %1285 = vmatprep.subr.bf16.mxu0 0
  %1286 = vmatpush2.bf16.msra.mxu0 0
  %1287 = vmatprep.subr.bf16.mxu0 0
  %1288 = vmatpush2.bf16.msra.mxu0 0
  %1289 = vmatprep.subr.bf16.mxu0 0
  %1290 = vmatpush2.bf16.msra.mxu0 0
  %1291 = vmatprep.subr.bf16.mxu0 0
  %1292 = vmatpush2.bf16.msra.mxu0 0
  %1293 = vmatprep.mubr.bf16.mxu0 0
  %1294 = vmatmul.mubr.bf16.gmra.mxu0 %v1259
  %v1295 = vpop.f32.mrf.mxu0
  %v1296 = vadd.f32 %v1233, %v1295
  %v1297 = vpop.f32.mrf.mxu0
  %v1298 = vpop.f32.mrf.mxu0
  %v1299 = vadd.f32 %v1233, %v1298
  %v1300 = vpop.f32.mrf.mxu0
  %1301 = vdwg.mxu0
  %v1302 = vadd.f32 %v1296, %v1134
  %v1303 = vadd.f32 %v1299, %v1135
  %v1304 = vsel %vm41, %v1302, 0.0
  %1305 = vadd.xlane.f32.xlu0 %v1304
  %v1306 = vpop.xlane.xlu0 %1305
  %v1307 = vsel %vm41, %v1303, 0.0
  %1308 = vadd.xlane.f32.xlu0 %v1307
  %v1309 = vpop.xlane.xlu0 %1308
  %v1310 = vmul.f32 %v1306, %v48
  %v1311 = vmul.f32 %v1309, %v48
  %v1312 = vsub.f32 %v1302, %v1310
  %v1313 = vsub.f32 %v1303, %v1311
  %v1314 = vmul.f32 %v1312, %v1312
  %v1315 = vmul.f32 %v1313, %v1313
  %v1316 = vsel %vm41, %v1314, 0.0
  %1317 = vadd.xlane.f32.xlu0 %v1316
  %v1318 = vpop.xlane.xlu0 %1317
  %v1319 = vsel %vm41, %v1315, 0.0
  %1320 = vadd.xlane.f32.xlu0 %v1319
  %v1321 = vpop.xlane.xlu0 %1320
  %v1322 = vmul.f32 %v1318, %v48
  %v1323 = vmul.f32 %v1321, %v48
  %v1324 = vadd.f32 %v1322, 1e-12
  %v1325 = vadd.f32 %v1323, 1e-12
  %v1326 = vrsqrt.pop %v1324
  %v1327 = vrsqrt.pop %v1325
  %v1328 = vmul.f32 %v1312, %v1326
  %v1329 = vmul.f32 %v1313, %v1327
  %v1330 = vlaneseq
  %v1331 = vshrl.u32 %v1330, 7
  %v1332 = vsub.s32 6, %v1331
  %v1333 = vrot.slane %v711, %v1332
  %v1334 = vmul.f32 %v1328, %v1333
  %v1335 = vmul.f32 %v1329, %v1333
  %v1336 = vlaneseq
  %v1337 = vshrl.u32 %v1336, 7
  %v1338 = vsub.s32 7, %v1337
  %v1339 = vrot.slane %v711, %v1338
  %v1340 = vadd.f32 %v1334, %v1339
  %v1341 = vadd.f32 %v1335, %v1339
  %v1342 = vpack.c.bf16 %v1341, %v1340
  %v1343 = vld [vmem:[%s7] sm:$0xf]
  %v1344 = vld [vmem:[%s7 + $0x4] sm:$0xf]
  %v1345 = vld [vmem:[%s7 + $0x8] sm:$0xf]
  %v1346 = vld [vmem:[%s7 + $0xc] sm:$0xf]
  %v1347 = vlaneseq
  %v1348 = vshrl.u32 %v1347, 7
  %v1349 = vsub.s32 2, %v1348
  %v1350 = vrot.slane %v38, %v1349
  %v1355 = vunpack.c.l.b16 %v1343
  %v1356 = vunpack.c.l.b16 %v1344
  %v1357 = vunpack.c.l.b16 %v1345
  %v1358 = vunpack.c.l.b16 %v1346
  %v1359 = vpack.c.b16 %v1356, %v1355
  %v1360 = vpack.c.b16 %v1358, %v1357
  %v1364 = vsel %vm41, %v1342, 0
  %1366 = vmatprep.subr.bf16.mxu0 0
  %1367 = vmatpush1.bf16.msra.mxu0 0
  %1368 = vmatprep.subr.bf16.mxu0 0
  %1369 = vmatpush1.bf16.msra.mxu0 0
  %1370 = vmatprep.subr.bf16.mxu0 0
  %1371 = vmatpush1.bf16.msra.mxu0 0
  %1372 = vmatprep.subr.bf16.mxu0 0
  %1373 = vmatpush1.bf16.msra.mxu0 0
  %1374 = vmatprep.subr.bf16.mxu0 0
  %1375 = vmatpush1.bf16.msra.mxu0 0
  %1376 = vmatprep.subr.bf16.mxu0 0
  %1377 = vmatpush1.bf16.msra.mxu0 0
  %1378 = vmatprep.subr.bf16.mxu0 0
  %1379 = vmatpush1.bf16.msra.mxu0 %v1360
  %1380 = vmatprep.subr.bf16.mxu0 0
  %1381 = vmatpush1.bf16.msra.mxu0 %v1359
  %1382 = vmatprep.subr.bf16.mxu0 0
  %1383 = vmatpush2.bf16.msra.mxu0 0
  %1384 = vmatprep.subr.bf16.mxu0 0
  %1385 = vmatpush2.bf16.msra.mxu0 0
  %1386 = vmatprep.subr.bf16.mxu0 0
  %1387 = vmatpush2.bf16.msra.mxu0 0
  %1388 = vmatprep.subr.bf16.mxu0 0
  %1389 = vmatpush2.bf16.msra.mxu0 0
  %1390 = vmatprep.subr.bf16.mxu0 0
  %1391 = vmatpush2.bf16.msra.mxu0 0
  %1392 = vmatprep.subr.bf16.mxu0 0
  %1393 = vmatpush2.bf16.msra.mxu0 0
  %1394 = vmatprep.subr.bf16.mxu0 0
  %1395 = vmatpush2.bf16.msra.mxu0 0
  %1396 = vmatprep.subr.bf16.mxu0 0
  %1397 = vmatpush2.bf16.msra.mxu0 0
  %1398 = vmatprep.mubr.bf16.mxu0 0
  %1399 = vmatmul.mubr.bf16.gmra.mxu0 %v1364
  %v1400 = vpop.f32.mrf.mxu0
  %v1401 = vadd.f32 %v1350, %v1400
  %v1402 = vpop.f32.mrf.mxu0
  %v1403 = vpop.f32.mrf.mxu0
  %v1404 = vadd.f32 %v1350, %v1403
  %v1405 = vpop.f32.mrf.mxu0
  %1406 = vdwg.mxu0
  %v1407 = vtanh.pop %v1401
  %v1408 = vtanh.pop %v1404
  %v1409 = vpack.c.bf16 %v1408, %v1407
  %v1410 = vld [vmem:[%s8] sm:$0xf]
  %v1411 = vld [vmem:[%s8 + $0x4] sm:$0xf]
  %v1412 = vld [vmem:[%s8 + $0x8] sm:$0xf]
  %v1413 = vld [vmem:[%s8 + $0xc] sm:$0xf]
  %v1414 = vlaneseq
  %v1415 = vshrl.u32 %v1414, 7
  %v1416 = vsub.s32 3, %v1415
  %v1417 = vrot.slane %v38, %v1416
  %v1422 = vunpack.c.l.b16 %v1410
  %v1423 = vunpack.c.l.b16 %v1411
  %v1424 = vunpack.c.l.b16 %v1412
  %v1425 = vunpack.c.l.b16 %v1413
  %v1426 = vpack.c.b16 %v1423, %v1422
  %v1427 = vpack.c.b16 %v1425, %v1424
  %v1431 = vsel %vm41, %v1409, 0
  %1433 = vmatprep.subr.bf16.mxu0 0
  %1434 = vmatpush1.bf16.msra.mxu0 0
  %1435 = vmatprep.subr.bf16.mxu0 0
  %1436 = vmatpush1.bf16.msra.mxu0 0
  %1437 = vmatprep.subr.bf16.mxu0 0
  %1438 = vmatpush1.bf16.msra.mxu0 0
  %1439 = vmatprep.subr.bf16.mxu0 0
  %1440 = vmatpush1.bf16.msra.mxu0 0
  %1441 = vmatprep.subr.bf16.mxu0 0
  %1442 = vmatpush1.bf16.msra.mxu0 0
  %1443 = vmatprep.subr.bf16.mxu0 0
  %1444 = vmatpush1.bf16.msra.mxu0 0
  %1445 = vmatprep.subr.bf16.mxu0 0
  %1446 = vmatpush1.bf16.msra.mxu0 %v1427
  %1447 = vmatprep.subr.bf16.mxu0 0
  %1448 = vmatpush1.bf16.msra.mxu0 %v1426
  %1449 = vmatprep.subr.bf16.mxu0 0
  %1450 = vmatpush2.bf16.msra.mxu0 0
  %1451 = vmatprep.subr.bf16.mxu0 0
  %1452 = vmatpush2.bf16.msra.mxu0 0
  %1453 = vmatprep.subr.bf16.mxu0 0
  %1454 = vmatpush2.bf16.msra.mxu0 0
  %1455 = vmatprep.subr.bf16.mxu0 0
  %1456 = vmatpush2.bf16.msra.mxu0 0
  %1457 = vmatprep.subr.bf16.mxu0 0
  %1458 = vmatpush2.bf16.msra.mxu0 0
  %1459 = vmatprep.subr.bf16.mxu0 0
  %1460 = vmatpush2.bf16.msra.mxu0 0
  %1461 = vmatprep.subr.bf16.mxu0 0
  %1462 = vmatpush2.bf16.msra.mxu0 0
  %1463 = vmatprep.subr.bf16.mxu0 0
  %1464 = vmatpush2.bf16.msra.mxu0 0
  %1465 = vmatprep.mubr.bf16.mxu0 0
  %1466 = vmatmul.mubr.bf16.gmra.mxu0 %v1431
  %v1467 = vpop.f32.mrf.mxu0
  %v1468 = vadd.f32 %v1417, %v1467
  %v1469 = vpop.f32.mrf.mxu0
  %v1470 = vpop.f32.mrf.mxu0
  %v1471 = vadd.f32 %v1417, %v1470
  %v1472 = vpop.f32.mrf.mxu0
  %1473 = vdwg.mxu0
  %1474 = vst [vmem:[%s10] sm:$0xff] %v1468
  %1475 = vst [vmem:[%s10 + $0x8] sm:$0xff] %v1471
  %s1476 = scalar_lea.vmem %s9, 8
  %v1477 = vld [vmem:[%s1476] sm:$0xff]
  %s1478 = scalar_lea.vmem %s0, 16
  %v1479 = vld [vmem:[%s1478] sm:$0xff]
  %v1480 = vld [vmem:[%s1478 + $0x8] sm:$0xff]
  %v1481 = vsel %vm41, %v1479, 0.0
  %1482 = vadd.xlane.f32.xlu0 %v1481
  %v1483 = vpop.xlane.xlu0 %1482
  %v1484 = vsel %vm41, %v1480, 0.0
  %1485 = vadd.xlane.f32.xlu0 %v1484
  %v1486 = vpop.xlane.xlu0 %1485
  %v1487 = vmul.f32 %v1483, %v48
  %v1488 = vmul.f32 %v1486, %v48
  %v1489 = vsub.f32 %v1479, %v1487
  %v1490 = vsub.f32 %v1480, %v1488
  %v1491 = vmul.f32 %v1489, %v1489
  %v1492 = vmul.f32 %v1490, %v1490
  %v1493 = vsel %vm41, %v1491, 0.0
  %1494 = vadd.xlane.f32.xlu0 %v1493
  %v1495 = vpop.xlane.xlu0 %1494
  %v1496 = vsel %vm41, %v1492, 0.0
  %1497 = vadd.xlane.f32.xlu0 %v1496
  %v1498 = vpop.xlane.xlu0 %1497
  %v1499 = vmul.f32 %v1495, %v48
  %v1500 = vmul.f32 %v1498, %v48
  %v1501 = vadd.f32 %v1499, 1e-12
  %v1502 = vadd.f32 %v1500, 1e-12
  %v1503 = vrsqrt.pop %v1501
  %v1504 = vrsqrt.pop %v1502
  %v1505 = vmul.f32 %v1489, %v1503
  %v1506 = vmul.f32 %v1490, %v1504
  %v1507 = vlaneseq
  %v1508 = vshrl.u32 %v1507, 7
  %v1509 = vsub.s32 0, %v1508
  %v1510 = vrot.slane %v1477, %v1509
  %v1511 = vmul.f32 %v1505, %v1510
  %v1512 = vmul.f32 %v1506, %v1510
  %v1513 = vlaneseq
  %v1514 = vshrl.u32 %v1513, 7
  %v1515 = vsub.s32 1, %v1514
  %v1516 = vrot.slane %v1477, %v1515
  %v1517 = vadd.f32 %v1511, %v1516
  %v1518 = vadd.f32 %v1512, %v1516
  %s1519 = scalar_lea.vmem %s6, 16
  %v1520 = vld [vmem:[%s1519] sm:$0xff]
  %v1521 = vpack.c.bf16 %v1518, %v1517
  %s1522 = scalar_lea.vmem %s2, 32
  %v1523 = vld [vmem:[%s1522] sm:$0xf]
  %v1524 = vld [vmem:[%s1522 + $0x4] sm:$0xf]
  %v1525 = vld [vmem:[%s1522 + $0x8] sm:$0xf]
  %v1526 = vld [vmem:[%s1522 + $0xc] sm:$0xf]
  %v1527 = vlaneseq
  %v1528 = vshrl.u32 %v1527, 7
  %v1529 = vsub.s32 0, %v1528
  %v1530 = vrot.slane %v1520, %v1529
  %v1535 = vunpack.c.l.b16 %v1523
  %v1536 = vunpack.c.l.b16 %v1524
  %v1537 = vunpack.c.l.b16 %v1525
  %v1538 = vunpack.c.l.b16 %v1526
  %v1539 = vpack.c.b16 %v1536, %v1535
  %v1540 = vpack.c.b16 %v1538, %v1537
  %v1544 = vsel %vm41, %v1521, 0
  %1546 = vmatprep.subr.bf16.mxu0 0
  %1547 = vmatpush1.bf16.msra.mxu0 0
  %1548 = vmatprep.subr.bf16.mxu0 0
  %1549 = vmatpush1.bf16.msra.mxu0 0
  %1550 = vmatprep.subr.bf16.mxu0 0
  %1551 = vmatpush1.bf16.msra.mxu0 0
  %1552 = vmatprep.subr.bf16.mxu0 0
  %1553 = vmatpush1.bf16.msra.mxu0 0
  %1554 = vmatprep.subr.bf16.mxu0 0
  %1555 = vmatpush1.bf16.msra.mxu0 0
  %1556 = vmatprep.subr.bf16.mxu0 0
  %1557 = vmatpush1.bf16.msra.mxu0 0
  %1558 = vmatprep.subr.bf16.mxu0 0
  %1559 = vmatpush1.bf16.msra.mxu0 %v1540
  %1560 = vmatprep.subr.bf16.mxu0 0
  %1561 = vmatpush1.bf16.msra.mxu0 %v1539
  %1562 = vmatprep.subr.bf16.mxu0 0
  %1563 = vmatpush2.bf16.msra.mxu0 0
  %1564 = vmatprep.subr.bf16.mxu0 0
  %1565 = vmatpush2.bf16.msra.mxu0 0
  %1566 = vmatprep.subr.bf16.mxu0 0
  %1567 = vmatpush2.bf16.msra.mxu0 0
  %1568 = vmatprep.subr.bf16.mxu0 0
  %1569 = vmatpush2.bf16.msra.mxu0 0
  %1570 = vmatprep.subr.bf16.mxu0 0
  %1571 = vmatpush2.bf16.msra.mxu0 0
  %1572 = vmatprep.subr.bf16.mxu0 0
  %1573 = vmatpush2.bf16.msra.mxu0 0
  %1574 = vmatprep.subr.bf16.mxu0 0
  %1575 = vmatpush2.bf16.msra.mxu0 0
  %1576 = vmatprep.subr.bf16.mxu0 0
  %1577 = vmatpush2.bf16.msra.mxu0 0
  %1578 = vmatprep.mubr.bf16.mxu0 0
  %1579 = vmatmul.mubr.bf16.gmra.mxu0 %v1544
  %v1580 = vpop.f32.mrf.mxu0
  %v1581 = vadd.f32 %v1530, %v1580
  %v1582 = vpop.f32.mrf.mxu0
  %v1583 = vpop.f32.mrf.mxu0
  %v1584 = vadd.f32 %v1530, %v1583
  %v1585 = vpop.f32.mrf.mxu0
  %1586 = vdwg.mxu0
  %v1587 = vpack.c.bf16 %v1584, %v1581
  %1589 = vrot.lane.b32.xlu0 %v1587, 96
  %v1590 = vpop.permute.xlu0 %1589
  %v1592 = vsel %vm151, %v1587, 0
  %v1595 = vsel %vm151, %v1590, 0
  %1597 = vmatprep.subr.bf16.mxu0 0
  %1598 = vmatpush1.bf16.xpose.msra.mxu0 0
  %1599 = vmatprep.subr.bf16.mxu0 0
  %1600 = vmatpush1.bf16.xpose.msra.mxu0 0
  %1601 = vmatprep.subr.bf16.mxu0 0
  %1602 = vmatpush1.bf16.xpose.msra.mxu0 0
  %1603 = vmatprep.subr.bf16.mxu0 0
  %1604 = vmatpush1.bf16.xpose.msra.mxu0 0
  %1605 = vmatprep.subr.bf16.mxu0 0
  %1606 = vmatpush1.bf16.xpose.msra.mxu0 0
  %1607 = vmatprep.subr.bf16.mxu0 0
  %1608 = vmatpush1.bf16.xpose.msra.mxu0 0
  %1609 = vmatprep.subr.bf16.mxu0 0
  %1610 = vmatpush1.bf16.xpose.msra.mxu0 0
  %1611 = vmatprep.subr.bf16.mxu0 0
  %1612 = vmatpush1.bf16.xpose.msra.mxu0 %v1595
  %1613 = vmatprep.subr.bf16.mxu0 0
  %1614 = vmatpush2.bf16.xpose.msra.mxu0 0
  %1615 = vmatprep.subr.bf16.mxu0 0
  %1616 = vmatpush2.bf16.xpose.msra.mxu0 0
  %1617 = vmatprep.subr.bf16.mxu0 0
  %1618 = vmatpush2.bf16.xpose.msra.mxu0 0
  %1619 = vmatprep.subr.bf16.mxu0 0
  %1620 = vmatpush2.bf16.xpose.msra.mxu0 0
  %1621 = vmatprep.subr.bf16.mxu0 0
  %1622 = vmatpush2.bf16.xpose.msra.mxu0 0
  %1623 = vmatprep.subr.bf16.mxu0 0
  %1624 = vmatpush2.bf16.xpose.msra.mxu0 0
  %1625 = vmatprep.subr.bf16.mxu0 0
  %1626 = vmatpush2.bf16.xpose.msra.mxu0 0
  %1627 = vmatprep.subr.bf16.mxu0 0
  %1628 = vmatpush2.bf16.xpose.msra.mxu0 0
  %1629 = vmatprep.mubr.bf16.mxu0 0
  %1630 = vmatmul.mubr.bf16.gmra.mxu0 %v1592
  %v1631 = vpop.f32.mrf.mxu0
  %v1632 = vadd.f32 %v36, %v1631
  %v1633 = vpop.f32.mrf.mxu0
  %v1634 = vpop.f32.mrf.mxu0
  %v1635 = vadd.f32 %v37, %v1634
  %v1636 = vpop.f32.mrf.mxu0
  %1637 = vdwg.mxu0
  %v1638 = vsel %vm151, %v1632, -inf
  %1639 = vmax.xlane.f32.xlu0 %v1638
  %v1640 = vpop.xlane.xlu0 %1639
  %v1641 = vsel %vm151, %v1635, -inf
  %1642 = vmax.xlane.f32.xlu0 %v1641
  %v1643 = vpop.xlane.xlu0 %1642
  %v1644 = vsub.f32 %v1632, %v1640
  %v1645 = vsub.f32 %v1635, %v1643
  %v1646 = vmul.f32 %v1644, 1.442695
  %v1647 = vpow.pop %v1646
  %v1648 = vmul.f32 %v1645, 1.442695
  %v1649 = vpow.pop %v1648
  %v1650 = vsel %vm151, %v1647, 0.0
  %1651 = vadd.xlane.f32.xlu0 %v1650
  %v1652 = vpop.xlane.xlu0 %1651
  %v1653 = vsel %vm151, %v1649, 0.0
  %1654 = vadd.xlane.f32.xlu0 %v1653
  %v1655 = vpop.xlane.xlu0 %1654
  %v1656 = vrcp.pop %v1652
  %v1657 = vmul.f32 %v1647, %v1656
  %v1658 = vrcp.pop %v1655
  %v1659 = vmul.f32 %v1649, %v1658
  %v1660 = vpack.c.bf16 %v1659, %v1657
  %1661 = vrot.lane.b32.xlu0 %v1587, 64
  %v1662 = vpop.permute.xlu0 %1661
  %v1665 = vsel %vm151, %v1660, 0
  %1667 = vmatprep.subr.bf16.mxu0 0
  %1668 = vmatpush1.bf16.msra.mxu0 0
  %1669 = vmatprep.subr.bf16.mxu0 0
  %1670 = vmatpush1.bf16.msra.mxu0 0
  %1671 = vmatprep.subr.bf16.mxu0 0
  %1672 = vmatpush1.bf16.msra.mxu0 0
  %1673 = vmatprep.subr.bf16.mxu0 0
  %1674 = vmatpush1.bf16.msra.mxu0 0
  %1675 = vmatprep.subr.bf16.mxu0 0
  %1676 = vmatpush1.bf16.msra.mxu0 0
  %1677 = vmatprep.subr.bf16.mxu0 0
  %1678 = vmatpush1.bf16.msra.mxu0 0
  %1679 = vmatprep.subr.bf16.mxu0 0
  %1680 = vmatpush1.bf16.msra.mxu0 0
  %1681 = vmatprep.subr.bf16.mxu0 0
  %1682 = vmatpush1.bf16.msra.mxu0 %v1662
  %1683 = vmatprep.subr.bf16.mxu0 0
  %1684 = vmatpush2.bf16.msra.mxu0 0
  %1685 = vmatprep.subr.bf16.mxu0 0
  %1686 = vmatpush2.bf16.msra.mxu0 0
  %1687 = vmatprep.subr.bf16.mxu0 0
  %1688 = vmatpush2.bf16.msra.mxu0 0
  %1689 = vmatprep.subr.bf16.mxu0 0
  %1690 = vmatpush2.bf16.msra.mxu0 0
  %1691 = vmatprep.subr.bf16.mxu0 0
  %1692 = vmatpush2.bf16.msra.mxu0 0
  %1693 = vmatprep.subr.bf16.mxu0 0
  %1694 = vmatpush2.bf16.msra.mxu0 0
  %1695 = vmatprep.subr.bf16.mxu0 0
  %1696 = vmatpush2.bf16.msra.mxu0 0
  %1697 = vmatprep.subr.bf16.mxu0 0
  %1698 = vmatpush2.bf16.msra.mxu0 0
  %1699 = vmatprep.mubr.bf16.mxu0 0
  %1700 = vmatmul.mubr.bf16.gmra.mxu0 %v1665
  %v1701 = vpop.f32.mrf.mxu0
  %v1702 = vadd.f32 0.0, %v1701
  %v1703 = vpop.f32.mrf.mxu0
  %v1704 = vpop.f32.mrf.mxu0
  %v1705 = vadd.f32 0.0, %v1704
  %v1706 = vpop.f32.mrf.mxu0
  %1707 = vdwg.mxu0
  %1708 = vrot.lane.b32.xlu0 %v1587, 112
  %v1709 = vpop.permute.xlu0 %1708
  %1710 = vrot.lane.b32.xlu0 %v1587, 80
  %v1711 = vpop.permute.xlu0 %1710
  %v1713 = vsel %vm151, %v1709, 0
  %v1716 = vsel %vm151, %v1711, 0
  %1718 = vmatprep.subr.bf16.mxu0 0
  %1719 = vmatpush1.bf16.xpose.msra.mxu0 0
  %1720 = vmatprep.subr.bf16.mxu0 0
  %1721 = vmatpush1.bf16.xpose.msra.mxu0 0
  %1722 = vmatprep.subr.bf16.mxu0 0
  %1723 = vmatpush1.bf16.xpose.msra.mxu0 0
  %1724 = vmatprep.subr.bf16.mxu0 0
  %1725 = vmatpush1.bf16.xpose.msra.mxu0 0
  %1726 = vmatprep.subr.bf16.mxu0 0
  %1727 = vmatpush1.bf16.xpose.msra.mxu0 0
  %1728 = vmatprep.subr.bf16.mxu0 0
  %1729 = vmatpush1.bf16.xpose.msra.mxu0 0
  %1730 = vmatprep.subr.bf16.mxu0 0
  %1731 = vmatpush1.bf16.xpose.msra.mxu0 0
  %1732 = vmatprep.subr.bf16.mxu0 0
  %1733 = vmatpush1.bf16.xpose.msra.mxu0 %v1716
  %1734 = vmatprep.subr.bf16.mxu0 0
  %1735 = vmatpush2.bf16.xpose.msra.mxu0 0
  %1736 = vmatprep.subr.bf16.mxu0 0
  %1737 = vmatpush2.bf16.xpose.msra.mxu0 0
  %1738 = vmatprep.subr.bf16.mxu0 0
  %1739 = vmatpush2.bf16.xpose.msra.mxu0 0
  %1740 = vmatprep.subr.bf16.mxu0 0
  %1741 = vmatpush2.bf16.xpose.msra.mxu0 0
  %1742 = vmatprep.subr.bf16.mxu0 0
  %1743 = vmatpush2.bf16.xpose.msra.mxu0 0
  %1744 = vmatprep.subr.bf16.mxu0 0
  %1745 = vmatpush2.bf16.xpose.msra.mxu0 0
  %1746 = vmatprep.subr.bf16.mxu0 0
  %1747 = vmatpush2.bf16.xpose.msra.mxu0 0
  %1748 = vmatprep.subr.bf16.mxu0 0
  %1749 = vmatpush2.bf16.xpose.msra.mxu0 0
  %1750 = vmatprep.mubr.bf16.mxu0 0
  %1751 = vmatmul.mubr.bf16.gmra.mxu0 %v1713
  %v1752 = vpop.f32.mrf.mxu0
  %v1753 = vadd.f32 %v36, %v1752
  %v1754 = vpop.f32.mrf.mxu0
  %v1755 = vpop.f32.mrf.mxu0
  %v1756 = vadd.f32 %v37, %v1755
  %v1757 = vpop.f32.mrf.mxu0
  %1758 = vdwg.mxu0
  %v1759 = vsel %vm151, %v1753, -inf
  %1760 = vmax.xlane.f32.xlu0 %v1759
  %v1761 = vpop.xlane.xlu0 %1760
  %v1762 = vsel %vm151, %v1756, -inf
  %1763 = vmax.xlane.f32.xlu0 %v1762
  %v1764 = vpop.xlane.xlu0 %1763
  %v1765 = vsub.f32 %v1753, %v1761
  %v1766 = vsub.f32 %v1756, %v1764
  %v1767 = vmul.f32 %v1765, 1.442695
  %v1768 = vpow.pop %v1767
  %v1769 = vmul.f32 %v1766, 1.442695
  %v1770 = vpow.pop %v1769
  %v1771 = vsel %vm151, %v1768, 0.0
  %1772 = vadd.xlane.f32.xlu0 %v1771
  %v1773 = vpop.xlane.xlu0 %1772
  %v1774 = vsel %vm151, %v1770, 0.0
  %1775 = vadd.xlane.f32.xlu0 %v1774
  %v1776 = vpop.xlane.xlu0 %1775
  %v1777 = vrcp.pop %v1773
  %v1778 = vmul.f32 %v1768, %v1777
  %v1779 = vrcp.pop %v1776
  %v1780 = vmul.f32 %v1770, %v1779
  %v1781 = vpack.c.bf16 %v1780, %v1778
  %1782 = vrot.lane.b32.xlu0 %v1587, 48
  %v1783 = vpop.permute.xlu0 %1782
  %v1786 = vsel %vm151, %v1781, 0
  %1788 = vmatprep.subr.bf16.mxu0 0
  %1789 = vmatpush1.bf16.msra.mxu0 0
  %1790 = vmatprep.subr.bf16.mxu0 0
  %1791 = vmatpush1.bf16.msra.mxu0 0
  %1792 = vmatprep.subr.bf16.mxu0 0
  %1793 = vmatpush1.bf16.msra.mxu0 0
  %1794 = vmatprep.subr.bf16.mxu0 0
  %1795 = vmatpush1.bf16.msra.mxu0 0
  %1796 = vmatprep.subr.bf16.mxu0 0
  %1797 = vmatpush1.bf16.msra.mxu0 0
  %1798 = vmatprep.subr.bf16.mxu0 0
  %1799 = vmatpush1.bf16.msra.mxu0 0
  %1800 = vmatprep.subr.bf16.mxu0 0
  %1801 = vmatpush1.bf16.msra.mxu0 0
  %1802 = vmatprep.subr.bf16.mxu0 0
  %1803 = vmatpush1.bf16.msra.mxu0 %v1783
  %1804 = vmatprep.subr.bf16.mxu0 0
  %1805 = vmatpush2.bf16.msra.mxu0 0
  %1806 = vmatprep.subr.bf16.mxu0 0
  %1807 = vmatpush2.bf16.msra.mxu0 0
  %1808 = vmatprep.subr.bf16.mxu0 0
  %1809 = vmatpush2.bf16.msra.mxu0 0
  %1810 = vmatprep.subr.bf16.mxu0 0
  %1811 = vmatpush2.bf16.msra.mxu0 0
  %1812 = vmatprep.subr.bf16.mxu0 0
  %1813 = vmatpush2.bf16.msra.mxu0 0
  %1814 = vmatprep.subr.bf16.mxu0 0
  %1815 = vmatpush2.bf16.msra.mxu0 0
  %1816 = vmatprep.subr.bf16.mxu0 0
  %1817 = vmatpush2.bf16.msra.mxu0 0
  %1818 = vmatprep.subr.bf16.mxu0 0
  %1819 = vmatpush2.bf16.msra.mxu0 0
  %1820 = vmatprep.mubr.bf16.mxu0 0
  %1821 = vmatmul.mubr.bf16.gmra.mxu0 %v1786
  %v1822 = vpop.f32.mrf.mxu0
  %v1823 = vadd.f32 0.0, %v1822
  %v1824 = vpop.f32.mrf.mxu0
  %v1825 = vpop.f32.mrf.mxu0
  %v1826 = vadd.f32 0.0, %v1825
  %v1827 = vpop.f32.mrf.mxu0
  %1828 = vdwg.mxu0
  %1831 = vrot.lane.b32.xlu0 %v1823, 16
  %v1832 = vpop.permute.xlu0 %1831
  %1833 = vrot.lane.b32.xlu0 %v1826, 16
  %v1834 = vpop.permute.xlu0 %1833
  %v1837 = vsel %vm151, %v1702, %v1832
  %v1838 = vsel %vm151, %v1705, %v1834
  %v1839 = vpack.c.bf16 %v1838, %v1837
  %s1840 = scalar_lea.vmem %s3, 32
  %v1841 = vld [vmem:[%s1840] sm:$0xf]
  %v1842 = vld [vmem:[%s1840 + $0x4] sm:$0xf]
  %v1843 = vld [vmem:[%s1840 + $0x8] sm:$0xf]
  %v1844 = vld [vmem:[%s1840 + $0xc] sm:$0xf]
  %v1845 = vlaneseq
  %v1846 = vshrl.u32 %v1845, 7
  %v1847 = vsub.s32 1, %v1846
  %v1848 = vrot.slane %v1520, %v1847
  %v1853 = vunpack.c.l.b16 %v1841
  %v1854 = vunpack.c.l.b16 %v1842
  %v1855 = vunpack.c.l.b16 %v1843
  %v1856 = vunpack.c.l.b16 %v1844
  %v1857 = vpack.c.b16 %v1854, %v1853
  %v1858 = vpack.c.b16 %v1856, %v1855
  %v1862 = vsel %vm41, %v1839, 0
  %1864 = vmatprep.subr.bf16.mxu0 0
  %1865 = vmatpush1.bf16.msra.mxu0 0
  %1866 = vmatprep.subr.bf16.mxu0 0
  %1867 = vmatpush1.bf16.msra.mxu0 0
  %1868 = vmatprep.subr.bf16.mxu0 0
  %1869 = vmatpush1.bf16.msra.mxu0 0
  %1870 = vmatprep.subr.bf16.mxu0 0
  %1871 = vmatpush1.bf16.msra.mxu0 0
  %1872 = vmatprep.subr.bf16.mxu0 0
  %1873 = vmatpush1.bf16.msra.mxu0 0
  %1874 = vmatprep.subr.bf16.mxu0 0
  %1875 = vmatpush1.bf16.msra.mxu0 0
  %1876 = vmatprep.subr.bf16.mxu0 0
  %1877 = vmatpush1.bf16.msra.mxu0 %v1858
  %1878 = vmatprep.subr.bf16.mxu0 0
  %1879 = vmatpush1.bf16.msra.mxu0 %v1857
  %1880 = vmatprep.subr.bf16.mxu0 0
  %1881 = vmatpush2.bf16.msra.mxu0 0
  %1882 = vmatprep.subr.bf16.mxu0 0
  %1883 = vmatpush2.bf16.msra.mxu0 0
  %1884 = vmatprep.subr.bf16.mxu0 0
  %1885 = vmatpush2.bf16.msra.mxu0 0
  %1886 = vmatprep.subr.bf16.mxu0 0
  %1887 = vmatpush2.bf16.msra.mxu0 0
  %1888 = vmatprep.subr.bf16.mxu0 0
  %1889 = vmatpush2.bf16.msra.mxu0 0
  %1890 = vmatprep.subr.bf16.mxu0 0
  %1891 = vmatpush2.bf16.msra.mxu0 0
  %1892 = vmatprep.subr.bf16.mxu0 0
  %1893 = vmatpush2.bf16.msra.mxu0 0
  %1894 = vmatprep.subr.bf16.mxu0 0
  %1895 = vmatpush2.bf16.msra.mxu0 0
  %1896 = vmatprep.mubr.bf16.mxu0 0
  %1897 = vmatmul.mubr.bf16.gmra.mxu0 %v1862
  %v1898 = vpop.f32.mrf.mxu0
  %v1899 = vadd.f32 %v1848, %v1898
  %v1900 = vpop.f32.mrf.mxu0
  %v1901 = vpop.f32.mrf.mxu0
  %v1902 = vadd.f32 %v1848, %v1901
  %v1903 = vpop.f32.mrf.mxu0
  %1904 = vdwg.mxu0
  %v1905 = vadd.f32 %v1899, %v1517
  %v1906 = vadd.f32 %v1902, %v1518
  %v1907 = vsel %vm41, %v1905, 0.0
  %1908 = vadd.xlane.f32.xlu0 %v1907
  %v1909 = vpop.xlane.xlu0 %1908
  %v1910 = vsel %vm41, %v1906, 0.0
  %1911 = vadd.xlane.f32.xlu0 %v1910
  %v1912 = vpop.xlane.xlu0 %1911
  %v1913 = vmul.f32 %v1909, %v48
  %v1914 = vmul.f32 %v1912, %v48
  %v1915 = vsub.f32 %v1905, %v1913
  %v1916 = vsub.f32 %v1906, %v1914
  %v1917 = vmul.f32 %v1915, %v1915
  %v1918 = vmul.f32 %v1916, %v1916
  %v1919 = vsel %vm41, %v1917, 0.0
  %1920 = vadd.xlane.f32.xlu0 %v1919
  %v1921 = vpop.xlane.xlu0 %1920
  %v1922 = vsel %vm41, %v1918, 0.0
  %1923 = vadd.xlane.f32.xlu0 %v1922
  %v1924 = vpop.xlane.xlu0 %1923
  %v1925 = vmul.f32 %v1921, %v48
  %v1926 = vmul.f32 %v1924, %v48
  %v1927 = vadd.f32 %v1925, 1e-12
  %v1928 = vadd.f32 %v1926, 1e-12
  %v1929 = vrsqrt.pop %v1927
  %v1930 = vrsqrt.pop %v1928
  %v1931 = vmul.f32 %v1915, %v1929
  %v1932 = vmul.f32 %v1916, %v1930
  %v1933 = vlaneseq
  %v1934 = vshrl.u32 %v1933, 7
  %v1935 = vsub.s32 2, %v1934
  %v1936 = vrot.slane %v1520, %v1935
  %v1937 = vmul.f32 %v1931, %v1936
  %v1938 = vmul.f32 %v1932, %v1936
  %v1939 = vlaneseq
  %v1940 = vshrl.u32 %v1939, 7
  %v1941 = vsub.s32 3, %v1940
  %v1942 = vrot.slane %v1520, %v1941
  %v1943 = vadd.f32 %v1937, %v1942
  %v1944 = vadd.f32 %v1938, %v1942
  %v1945 = vpack.c.bf16 %v1944, %v1943
  %s1946 = scalar_lea.vmem %s4, 32
  %v1947 = vld [vmem:[%s1946] sm:$0xf]
  %v1948 = vld [vmem:[%s1946 + $0x4] sm:$0xf]
  %v1949 = vld [vmem:[%s1946 + $0x8] sm:$0xf]
  %v1950 = vld [vmem:[%s1946 + $0xc] sm:$0xf]
  %v1951 = vlaneseq
  %v1952 = vshrl.u32 %v1951, 7
  %v1953 = vsub.s32 4, %v1952
  %v1954 = vrot.slane %v1520, %v1953
  %v1959 = vunpack.c.l.b16 %v1947
  %v1960 = vunpack.c.l.b16 %v1948
  %v1961 = vunpack.c.l.b16 %v1949
  %v1962 = vunpack.c.l.b16 %v1950
  %v1963 = vpack.c.b16 %v1960, %v1959
  %v1964 = vpack.c.b16 %v1962, %v1961
  %v1968 = vsel %vm41, %v1945, 0
  %1970 = vmatprep.subr.bf16.mxu0 0
  %1971 = vmatpush1.bf16.msra.mxu0 0
  %1972 = vmatprep.subr.bf16.mxu0 0
  %1973 = vmatpush1.bf16.msra.mxu0 0
  %1974 = vmatprep.subr.bf16.mxu0 0
  %1975 = vmatpush1.bf16.msra.mxu0 0
  %1976 = vmatprep.subr.bf16.mxu0 0
  %1977 = vmatpush1.bf16.msra.mxu0 0
  %1978 = vmatprep.subr.bf16.mxu0 0
  %1979 = vmatpush1.bf16.msra.mxu0 0
  %1980 = vmatprep.subr.bf16.mxu0 0
  %1981 = vmatpush1.bf16.msra.mxu0 0
  %1982 = vmatprep.subr.bf16.mxu0 0
  %1983 = vmatpush1.bf16.msra.mxu0 %v1964
  %1984 = vmatprep.subr.bf16.mxu0 0
  %1985 = vmatpush1.bf16.msra.mxu0 %v1963
  %1986 = vmatprep.subr.bf16.mxu0 0
  %1987 = vmatpush2.bf16.msra.mxu0 0
  %1988 = vmatprep.subr.bf16.mxu0 0
  %1989 = vmatpush2.bf16.msra.mxu0 0
  %1990 = vmatprep.subr.bf16.mxu0 0
  %1991 = vmatpush2.bf16.msra.mxu0 0
  %1992 = vmatprep.subr.bf16.mxu0 0
  %1993 = vmatpush2.bf16.msra.mxu0 0
  %1994 = vmatprep.subr.bf16.mxu0 0
  %1995 = vmatpush2.bf16.msra.mxu0 0
  %1996 = vmatprep.subr.bf16.mxu0 0
  %1997 = vmatpush2.bf16.msra.mxu0 0
  %1998 = vmatprep.subr.bf16.mxu0 0
  %1999 = vmatpush2.bf16.msra.mxu0 0
  %2000 = vmatprep.subr.bf16.mxu0 0
  %2001 = vmatpush2.bf16.msra.mxu0 0
  %2002 = vmatprep.mubr.bf16.mxu0 0
  %2003 = vmatmul.mubr.bf16.gmra.mxu0 %v1968
  %v2004 = vpop.f32.mrf.mxu0
  %v2005 = vadd.f32 %v1954, %v2004
  %v2006 = vpop.f32.mrf.mxu0
  %v2007 = vpop.f32.mrf.mxu0
  %v2008 = vadd.f32 %v1954, %v2007
  %v2009 = vpop.f32.mrf.mxu0
  %2010 = vdwg.mxu0
  %v2011 = vmul.f32 %v2005, 0.5
  %v2012 = vmul.f32 %v2008, 0.5
  %v2013 = vmul.f32 %v2005, 0.044715
  %v2014 = vmul.f32 %v2008, 0.044715
  %v2015 = vmul.f32 %v2013, %v2005
  %v2016 = vmul.f32 %v2014, %v2008
  %v2017 = vmul.f32 %v2015, %v2005
  %v2018 = vmul.f32 %v2016, %v2008
  %v2019 = vadd.f32 %v2005, %v2017
  %v2020 = vadd.f32 %v2008, %v2018
  %v2021 = vmul.f32 %v2019, 0.7978846
  %v2022 = vmul.f32 %v2020, 0.7978846
  %v2023 = vtanh.pop %v2021
  %v2024 = vtanh.pop %v2022
  %v2025 = vadd.f32 %v2023, 1.0
  %v2026 = vadd.f32 %v2024, 1.0
  %v2027 = vmul.f32 %v2011, %v2025
  %v2028 = vmul.f32 %v2012, %v2026
  %v2029 = vpack.c.bf16 %v2028, %v2027
  %s2030 = scalar_lea.vmem %s5, 64
  %v2031 = vld [vmem:[%s2030] sm:$0xf]
  %v2032 = vld [vmem:[%s2030 + $0x4] sm:$0xf]
  %v2033 = vld [vmem:[%s2030 + $0x8] sm:$0xf]
  %v2034 = vld [vmem:[%s2030 + $0xc] sm:$0xf]
  %v2035 = vld [vmem:[%s2030 + $0x10] sm:$0xf]
  %v2036 = vld [vmem:[%s2030 + $0x14] sm:$0xf]
  %v2037 = vld [vmem:[%s2030 + $0x18] sm:$0xf]
  %v2038 = vld [vmem:[%s2030 + $0x1c] sm:$0xf]
  %v2039 = vlaneseq
  %v2040 = vshrl.u32 %v2039, 7
  %v2041 = vsub.s32 5, %v2040
  %v2042 = vrot.slane %v1520, %v2041
  %v2051 = vunpack.c.l.b16 %v2031
  %v2052 = vunpack.c.l.b16 %v2032
  %v2053 = vunpack.c.l.b16 %v2033
  %v2054 = vunpack.c.l.b16 %v2034
  %v2055 = vunpack.c.l.b16 %v2035
  %v2056 = vunpack.c.l.b16 %v2036
  %v2057 = vunpack.c.l.b16 %v2037
  %v2058 = vunpack.c.l.b16 %v2038
  %v2059 = vpack.c.b16 %v2052, %v2051
  %v2060 = vpack.c.b16 %v2054, %v2053
  %v2061 = vpack.c.b16 %v2056, %v2055
  %v2062 = vpack.c.b16 %v2058, %v2057
  %v2068 = vsel %vm625, %v2029, 0
  %2070 = vmatprep.subr.bf16.mxu0 0
  %2071 = vmatpush1.bf16.msra.mxu0 0
  %2072 = vmatprep.subr.bf16.mxu0 0
  %2073 = vmatpush1.bf16.msra.mxu0 0
  %2074 = vmatprep.subr.bf16.mxu0 0
  %2075 = vmatpush1.bf16.msra.mxu0 0
  %2076 = vmatprep.subr.bf16.mxu0 0
  %2077 = vmatpush1.bf16.msra.mxu0 0
  %2078 = vmatprep.subr.bf16.mxu0 0
  %2079 = vmatpush1.bf16.msra.mxu0 %v2062
  %2080 = vmatprep.subr.bf16.mxu0 0
  %2081 = vmatpush1.bf16.msra.mxu0 %v2061
  %2082 = vmatprep.subr.bf16.mxu0 0
  %2083 = vmatpush1.bf16.msra.mxu0 %v2060
  %2084 = vmatprep.subr.bf16.mxu0 0
  %2085 = vmatpush1.bf16.msra.mxu0 %v2059
  %2086 = vmatprep.subr.bf16.mxu0 0
  %2087 = vmatpush2.bf16.msra.mxu0 0
  %2088 = vmatprep.subr.bf16.mxu0 0
  %2089 = vmatpush2.bf16.msra.mxu0 0
  %2090 = vmatprep.subr.bf16.mxu0 0
  %2091 = vmatpush2.bf16.msra.mxu0 0
  %2092 = vmatprep.subr.bf16.mxu0 0
  %2093 = vmatpush2.bf16.msra.mxu0 0
  %2094 = vmatprep.subr.bf16.mxu0 0
  %2095 = vmatpush2.bf16.msra.mxu0 0
  %2096 = vmatprep.subr.bf16.mxu0 0
  %2097 = vmatpush2.bf16.msra.mxu0 0
  %2098 = vmatprep.subr.bf16.mxu0 0
  %2099 = vmatpush2.bf16.msra.mxu0 0
  %2100 = vmatprep.subr.bf16.mxu0 0
  %2101 = vmatpush2.bf16.msra.mxu0 0
  %2102 = vmatprep.mubr.bf16.mxu0 0
  %2103 = vmatmul.mubr.bf16.gmra.mxu0 %v2068
  %v2104 = vpop.f32.mrf.mxu0
  %v2105 = vadd.f32 %v2042, %v2104
  %v2106 = vpop.f32.mrf.mxu0
  %v2107 = vpop.f32.mrf.mxu0
  %v2108 = vadd.f32 %v2042, %v2107
  %v2109 = vpop.f32.mrf.mxu0
  %2110 = vdwg.mxu0
  %v2111 = vadd.f32 %v2105, %v1943
  %v2112 = vadd.f32 %v2108, %v1944
  %v2113 = vsel %vm41, %v2111, 0.0
  %2114 = vadd.xlane.f32.xlu0 %v2113
  %v2115 = vpop.xlane.xlu0 %2114
  %v2116 = vsel %vm41, %v2112, 0.0
  %2117 = vadd.xlane.f32.xlu0 %v2116
  %v2118 = vpop.xlane.xlu0 %2117
  %v2119 = vmul.f32 %v2115, %v48
  %v2120 = vmul.f32 %v2118, %v48
  %v2121 = vsub.f32 %v2111, %v2119
  %v2122 = vsub.f32 %v2112, %v2120
  %v2123 = vmul.f32 %v2121, %v2121
  %v2124 = vmul.f32 %v2122, %v2122
  %v2125 = vsel %vm41, %v2123, 0.0
  %2126 = vadd.xlane.f32.xlu0 %v2125
  %v2127 = vpop.xlane.xlu0 %2126
  %v2128 = vsel %vm41, %v2124, 0.0
  %2129 = vadd.xlane.f32.xlu0 %v2128
  %v2130 = vpop.xlane.xlu0 %2129
  %v2131 = vmul.f32 %v2127, %v48
  %v2132 = vmul.f32 %v2130, %v48
  %v2133 = vadd.f32 %v2131, 1e-12
  %v2134 = vadd.f32 %v2132, 1e-12
  %v2135 = vrsqrt.pop %v2133
  %v2136 = vrsqrt.pop %v2134
  %v2137 = vmul.f32 %v2121, %v2135
  %v2138 = vmul.f32 %v2122, %v2136
  %v2139 = vlaneseq
  %v2140 = vshrl.u32 %v2139, 7
  %v2141 = vsub.s32 6, %v2140
  %v2142 = vrot.slane %v1520, %v2141
  %v2143 = vmul.f32 %v2137, %v2142
  %v2144 = vmul.f32 %v2138, %v2142
  %v2145 = vlaneseq
  %v2146 = vshrl.u32 %v2145, 7
  %v2147 = vsub.s32 7, %v2146
  %v2148 = vrot.slane %v1520, %v2147
  %v2149 = vadd.f32 %v2143, %v2148
  %v2150 = vadd.f32 %v2144, %v2148
  %s2151 = scalar_lea.vmem %s6, 24
  %v2152 = vld [vmem:[%s2151] sm:$0xff]
  %v2153 = vpack.c.bf16 %v2150, %v2149
  %s2154 = scalar_lea.vmem %s2, 48
  %v2155 = vld [vmem:[%s2154] sm:$0xf]
  %v2156 = vld [vmem:[%s2154 + $0x4] sm:$0xf]
  %v2157 = vld [vmem:[%s2154 + $0x8] sm:$0xf]
  %v2158 = vld [vmem:[%s2154 + $0xc] sm:$0xf]
  %v2159 = vlaneseq
  %v2160 = vshrl.u32 %v2159, 7
  %v2161 = vsub.s32 0, %v2160
  %v2162 = vrot.slane %v2152, %v2161
  %v2167 = vunpack.c.l.b16 %v2155
  %v2168 = vunpack.c.l.b16 %v2156
  %v2169 = vunpack.c.l.b16 %v2157
  %v2170 = vunpack.c.l.b16 %v2158
  %v2171 = vpack.c.b16 %v2168, %v2167
  %v2172 = vpack.c.b16 %v2170, %v2169
  %v2176 = vsel %vm41, %v2153, 0
  %2178 = vmatprep.subr.bf16.mxu0 0
  %2179 = vmatpush1.bf16.msra.mxu0 0
  %2180 = vmatprep.subr.bf16.mxu0 0
  %2181 = vmatpush1.bf16.msra.mxu0 0
  %2182 = vmatprep.subr.bf16.mxu0 0
  %2183 = vmatpush1.bf16.msra.mxu0 0
  %2184 = vmatprep.subr.bf16.mxu0 0
  %2185 = vmatpush1.bf16.msra.mxu0 0
  %2186 = vmatprep.subr.bf16.mxu0 0
  %2187 = vmatpush1.bf16.msra.mxu0 0
  %2188 = vmatprep.subr.bf16.mxu0 0
  %2189 = vmatpush1.bf16.msra.mxu0 0
  %2190 = vmatprep.subr.bf16.mxu0 0
  %2191 = vmatpush1.bf16.msra.mxu0 %v2172
  %2192 = vmatprep.subr.bf16.mxu0 0
  %2193 = vmatpush1.bf16.msra.mxu0 %v2171
  %2194 = vmatprep.subr.bf16.mxu0 0
  %2195 = vmatpush2.bf16.msra.mxu0 0
  %2196 = vmatprep.subr.bf16.mxu0 0
  %2197 = vmatpush2.bf16.msra.mxu0 0
  %2198 = vmatprep.subr.bf16.mxu0 0
  %2199 = vmatpush2.bf16.msra.mxu0 0
  %2200 = vmatprep.subr.bf16.mxu0 0
  %2201 = vmatpush2.bf16.msra.mxu0 0
  %2202 = vmatprep.subr.bf16.mxu0 0
  %2203 = vmatpush2.bf16.msra.mxu0 0
  %2204 = vmatprep.subr.bf16.mxu0 0
  %2205 = vmatpush2.bf16.msra.mxu0 0
  %2206 = vmatprep.subr.bf16.mxu0 0
  %2207 = vmatpush2.bf16.msra.mxu0 0
  %2208 = vmatprep.subr.bf16.mxu0 0
  %2209 = vmatpush2.bf16.msra.mxu0 0
  %2210 = vmatprep.mubr.bf16.mxu0 0
  %2211 = vmatmul.mubr.bf16.gmra.mxu0 %v2176
  %v2212 = vpop.f32.mrf.mxu0
  %v2213 = vadd.f32 %v2162, %v2212
  %v2214 = vpop.f32.mrf.mxu0
  %v2215 = vpop.f32.mrf.mxu0
  %v2216 = vadd.f32 %v2162, %v2215
  %v2217 = vpop.f32.mrf.mxu0
  %2218 = vdwg.mxu0
  %v2219 = vpack.c.bf16 %v2216, %v2213
  %2221 = vrot.lane.b32.xlu0 %v2219, 96
  %v2222 = vpop.permute.xlu0 %2221
  %v2224 = vsel %vm151, %v2219, 0
  %v2227 = vsel %vm151, %v2222, 0
  %2229 = vmatprep.subr.bf16.mxu0 0
  %2230 = vmatpush1.bf16.xpose.msra.mxu0 0
  %2231 = vmatprep.subr.bf16.mxu0 0
  %2232 = vmatpush1.bf16.xpose.msra.mxu0 0
  %2233 = vmatprep.subr.bf16.mxu0 0
  %2234 = vmatpush1.bf16.xpose.msra.mxu0 0
  %2235 = vmatprep.subr.bf16.mxu0 0
  %2236 = vmatpush1.bf16.xpose.msra.mxu0 0
  %2237 = vmatprep.subr.bf16.mxu0 0
  %2238 = vmatpush1.bf16.xpose.msra.mxu0 0
  %2239 = vmatprep.subr.bf16.mxu0 0
  %2240 = vmatpush1.bf16.xpose.msra.mxu0 0
  %2241 = vmatprep.subr.bf16.mxu0 0
  %2242 = vmatpush1.bf16.xpose.msra.mxu0 0
  %2243 = vmatprep.subr.bf16.mxu0 0
  %2244 = vmatpush1.bf16.xpose.msra.mxu0 %v2227
  %2245 = vmatprep.subr.bf16.mxu0 0
  %2246 = vmatpush2.bf16.xpose.msra.mxu0 0
  %2247 = vmatprep.subr.bf16.mxu0 0
  %2248 = vmatpush2.bf16.xpose.msra.mxu0 0
  %2249 = vmatprep.subr.bf16.mxu0 0
  %2250 = vmatpush2.bf16.xpose.msra.mxu0 0
  %2251 = vmatprep.subr.bf16.mxu0 0
  %2252 = vmatpush2.bf16.xpose.msra.mxu0 0
  %2253 = vmatprep.subr.bf16.mxu0 0
  %2254 = vmatpush2.bf16.xpose.msra.mxu0 0
  %2255 = vmatprep.subr.bf16.mxu0 0
  %2256 = vmatpush2.bf16.xpose.msra.mxu0 0
  %2257 = vmatprep.subr.bf16.mxu0 0
  %2258 = vmatpush2.bf16.xpose.msra.mxu0 0
  %2259 = vmatprep.subr.bf16.mxu0 0
  %2260 = vmatpush2.bf16.xpose.msra.mxu0 0
  %2261 = vmatprep.mubr.bf16.mxu0 0
  %2262 = vmatmul.mubr.bf16.gmra.mxu0 %v2224
  %v2263 = vpop.f32.mrf.mxu0
  %v2264 = vadd.f32 %v36, %v2263
  %v2265 = vpop.f32.mrf.mxu0
  %v2266 = vpop.f32.mrf.mxu0
  %v2267 = vadd.f32 %v37, %v2266
  %v2268 = vpop.f32.mrf.mxu0
  %2269 = vdwg.mxu0
  %v2270 = vsel %vm151, %v2264, -inf
  %2271 = vmax.xlane.f32.xlu0 %v2270
  %v2272 = vpop.xlane.xlu0 %2271
  %v2273 = vsel %vm151, %v2267, -inf
  %2274 = vmax.xlane.f32.xlu0 %v2273
  %v2275 = vpop.xlane.xlu0 %2274
  %v2276 = vsub.f32 %v2264, %v2272
  %v2277 = vsub.f32 %v2267, %v2275
  %v2278 = vmul.f32 %v2276, 1.442695
  %v2279 = vpow.pop %v2278
  %v2280 = vmul.f32 %v2277, 1.442695
  %v2281 = vpow.pop %v2280
  %v2282 = vsel %vm151, %v2279, 0.0
  %2283 = vadd.xlane.f32.xlu0 %v2282
  %v2284 = vpop.xlane.xlu0 %2283
  %v2285 = vsel %vm151, %v2281, 0.0
  %2286 = vadd.xlane.f32.xlu0 %v2285
  %v2287 = vpop.xlane.xlu0 %2286
  %v2288 = vrcp.pop %v2284
  %v2289 = vmul.f32 %v2279, %v2288
  %v2290 = vrcp.pop %v2287
  %v2291 = vmul.f32 %v2281, %v2290
  %v2292 = vpack.c.bf16 %v2291, %v2289
  %2293 = vrot.lane.b32.xlu0 %v2219, 64
  %v2294 = vpop.permute.xlu0 %2293
  %v2297 = vsel %vm151, %v2292, 0
  %2299 = vmatprep.subr.bf16.mxu0 0
  %2300 = vmatpush1.bf16.msra.mxu0 0
  %2301 = vmatprep.subr.bf16.mxu0 0
  %2302 = vmatpush1.bf16.msra.mxu0 0
  %2303 = vmatprep.subr.bf16.mxu0 0
  %2304 = vmatpush1.bf16.msra.mxu0 0
  %2305 = vmatprep.subr.bf16.mxu0 0
  %2306 = vmatpush1.bf16.msra.mxu0 0
  %2307 = vmatprep.subr.bf16.mxu0 0
  %2308 = vmatpush1.bf16.msra.mxu0 0
  %2309 = vmatprep.subr.bf16.mxu0 0
  %2310 = vmatpush1.bf16.msra.mxu0 0
  %2311 = vmatprep.subr.bf16.mxu0 0
  %2312 = vmatpush1.bf16.msra.mxu0 0
  %2313 = vmatprep.subr.bf16.mxu0 0
  %2314 = vmatpush1.bf16.msra.mxu0 %v2294
  %2315 = vmatprep.subr.bf16.mxu0 0
  %2316 = vmatpush2.bf16.msra.mxu0 0
  %2317 = vmatprep.subr.bf16.mxu0 0
  %2318 = vmatpush2.bf16.msra.mxu0 0
  %2319 = vmatprep.subr.bf16.mxu0 0
  %2320 = vmatpush2.bf16.msra.mxu0 0
  %2321 = vmatprep.subr.bf16.mxu0 0
  %2322 = vmatpush2.bf16.msra.mxu0 0
  %2323 = vmatprep.subr.bf16.mxu0 0
  %2324 = vmatpush2.bf16.msra.mxu0 0
  %2325 = vmatprep.subr.bf16.mxu0 0
  %2326 = vmatpush2.bf16.msra.mxu0 0
  %2327 = vmatprep.subr.bf16.mxu0 0
  %2328 = vmatpush2.bf16.msra.mxu0 0
  %2329 = vmatprep.subr.bf16.mxu0 0
  %2330 = vmatpush2.bf16.msra.mxu0 0
  %2331 = vmatprep.mubr.bf16.mxu0 0
  %2332 = vmatmul.mubr.bf16.gmra.mxu0 %v2297
  %v2333 = vpop.f32.mrf.mxu0
  %v2334 = vadd.f32 0.0, %v2333
  %v2335 = vpop.f32.mrf.mxu0
  %v2336 = vpop.f32.mrf.mxu0
  %v2337 = vadd.f32 0.0, %v2336
  %v2338 = vpop.f32.mrf.mxu0
  %2339 = vdwg.mxu0
  %2340 = vrot.lane.b32.xlu0 %v2219, 112
  %v2341 = vpop.permute.xlu0 %2340
  %2342 = vrot.lane.b32.xlu0 %v2219, 80
  %v2343 = vpop.permute.xlu0 %2342
  %v2345 = vsel %vm151, %v2341, 0
  %v2348 = vsel %vm151, %v2343, 0
  %2350 = vmatprep.subr.bf16.mxu0 0
  %2351 = vmatpush1.bf16.xpose.msra.mxu0 0
  %2352 = vmatprep.subr.bf16.mxu0 0
  %2353 = vmatpush1.bf16.xpose.msra.mxu0 0
  %2354 = vmatprep.subr.bf16.mxu0 0
  %2355 = vmatpush1.bf16.xpose.msra.mxu0 0
  %2356 = vmatprep.subr.bf16.mxu0 0
  %2357 = vmatpush1.bf16.xpose.msra.mxu0 0
  %2358 = vmatprep.subr.bf16.mxu0 0
  %2359 = vmatpush1.bf16.xpose.msra.mxu0 0
  %2360 = vmatprep.subr.bf16.mxu0 0
  %2361 = vmatpush1.bf16.xpose.msra.mxu0 0
  %2362 = vmatprep.subr.bf16.mxu0 0
  %2363 = vmatpush1.bf16.xpose.msra.mxu0 0
  %2364 = vmatprep.subr.bf16.mxu0 0
  %2365 = vmatpush1.bf16.xpose.msra.mxu0 %v2348
  %2366 = vmatprep.subr.bf16.mxu0 0
  %2367 = vmatpush2.bf16.xpose.msra.mxu0 0
  %2368 = vmatprep.subr.bf16.mxu0 0
  %2369 = vmatpush2.bf16.xpose.msra.mxu0 0
  %2370 = vmatprep.subr.bf16.mxu0 0
  %2371 = vmatpush2.bf16.xpose.msra.mxu0 0
  %2372 = vmatprep.subr.bf16.mxu0 0
  %2373 = vmatpush2.bf16.xpose.msra.mxu0 0
  %2374 = vmatprep.subr.bf16.mxu0 0
  %2375 = vmatpush2.bf16.xpose.msra.mxu0 0
  %2376 = vmatprep.subr.bf16.mxu0 0
  %2377 = vmatpush2.bf16.xpose.msra.mxu0 0
  %2378 = vmatprep.subr.bf16.mxu0 0
  %2379 = vmatpush2.bf16.xpose.msra.mxu0 0
  %2380 = vmatprep.subr.bf16.mxu0 0
  %2381 = vmatpush2.bf16.xpose.msra.mxu0 0
  %2382 = vmatprep.mubr.bf16.mxu0 0
  %2383 = vmatmul.mubr.bf16.gmra.mxu0 %v2345
  %v2384 = vpop.f32.mrf.mxu0
  %v2385 = vadd.f32 %v36, %v2384
  %v2386 = vpop.f32.mrf.mxu0
  %v2387 = vpop.f32.mrf.mxu0
  %v2388 = vadd.f32 %v37, %v2387
  %v2389 = vpop.f32.mrf.mxu0
  %2390 = vdwg.mxu0
  %v2391 = vsel %vm151, %v2385, -inf
  %2392 = vmax.xlane.f32.xlu0 %v2391
  %v2393 = vpop.xlane.xlu0 %2392
  %v2394 = vsel %vm151, %v2388, -inf
  %2395 = vmax.xlane.f32.xlu0 %v2394
  %v2396 = vpop.xlane.xlu0 %2395
  %v2397 = vsub.f32 %v2385, %v2393
  %v2398 = vsub.f32 %v2388, %v2396
  %v2399 = vmul.f32 %v2397, 1.442695
  %v2400 = vpow.pop %v2399
  %v2401 = vmul.f32 %v2398, 1.442695
  %v2402 = vpow.pop %v2401
  %v2403 = vsel %vm151, %v2400, 0.0
  %2404 = vadd.xlane.f32.xlu0 %v2403
  %v2405 = vpop.xlane.xlu0 %2404
  %v2406 = vsel %vm151, %v2402, 0.0
  %2407 = vadd.xlane.f32.xlu0 %v2406
  %v2408 = vpop.xlane.xlu0 %2407
  %v2409 = vrcp.pop %v2405
  %v2410 = vmul.f32 %v2400, %v2409
  %v2411 = vrcp.pop %v2408
  %v2412 = vmul.f32 %v2402, %v2411
  %v2413 = vpack.c.bf16 %v2412, %v2410
  %2414 = vrot.lane.b32.xlu0 %v2219, 48
  %v2415 = vpop.permute.xlu0 %2414
  %v2418 = vsel %vm151, %v2413, 0
  %2420 = vmatprep.subr.bf16.mxu0 0
  %2421 = vmatpush1.bf16.msra.mxu0 0
  %2422 = vmatprep.subr.bf16.mxu0 0
  %2423 = vmatpush1.bf16.msra.mxu0 0
  %2424 = vmatprep.subr.bf16.mxu0 0
  %2425 = vmatpush1.bf16.msra.mxu0 0
  %2426 = vmatprep.subr.bf16.mxu0 0
  %2427 = vmatpush1.bf16.msra.mxu0 0
  %2428 = vmatprep.subr.bf16.mxu0 0
  %2429 = vmatpush1.bf16.msra.mxu0 0
  %2430 = vmatprep.subr.bf16.mxu0 0
  %2431 = vmatpush1.bf16.msra.mxu0 0
  %2432 = vmatprep.subr.bf16.mxu0 0
  %2433 = vmatpush1.bf16.msra.mxu0 0
  %2434 = vmatprep.subr.bf16.mxu0 0
  %2435 = vmatpush1.bf16.msra.mxu0 %v2415
  %2436 = vmatprep.subr.bf16.mxu0 0
  %2437 = vmatpush2.bf16.msra.mxu0 0
  %2438 = vmatprep.subr.bf16.mxu0 0
  %2439 = vmatpush2.bf16.msra.mxu0 0
  %2440 = vmatprep.subr.bf16.mxu0 0
  %2441 = vmatpush2.bf16.msra.mxu0 0
  %2442 = vmatprep.subr.bf16.mxu0 0
  %2443 = vmatpush2.bf16.msra.mxu0 0
  %2444 = vmatprep.subr.bf16.mxu0 0
  %2445 = vmatpush2.bf16.msra.mxu0 0
  %2446 = vmatprep.subr.bf16.mxu0 0
  %2447 = vmatpush2.bf16.msra.mxu0 0
  %2448 = vmatprep.subr.bf16.mxu0 0
  %2449 = vmatpush2.bf16.msra.mxu0 0
  %2450 = vmatprep.subr.bf16.mxu0 0
  %2451 = vmatpush2.bf16.msra.mxu0 0
  %2452 = vmatprep.mubr.bf16.mxu0 0
  %2453 = vmatmul.mubr.bf16.gmra.mxu0 %v2418
  %v2454 = vpop.f32.mrf.mxu0
  %v2455 = vadd.f32 0.0, %v2454
  %v2456 = vpop.f32.mrf.mxu0
  %v2457 = vpop.f32.mrf.mxu0
  %v2458 = vadd.f32 0.0, %v2457
  %v2459 = vpop.f32.mrf.mxu0
  %2460 = vdwg.mxu0
  %2463 = vrot.lane.b32.xlu0 %v2455, 16
  %v2464 = vpop.permute.xlu0 %2463
  %2465 = vrot.lane.b32.xlu0 %v2458, 16
  %v2466 = vpop.permute.xlu0 %2465
  %v2469 = vsel %vm151, %v2334, %v2464
  %v2470 = vsel %vm151, %v2337, %v2466
  %v2471 = vpack.c.bf16 %v2470, %v2469
  %s2472 = scalar_lea.vmem %s3, 48
  %v2473 = vld [vmem:[%s2472] sm:$0xf]
  %v2474 = vld [vmem:[%s2472 + $0x4] sm:$0xf]
  %v2475 = vld [vmem:[%s2472 + $0x8] sm:$0xf]
  %v2476 = vld [vmem:[%s2472 + $0xc] sm:$0xf]
  %v2477 = vlaneseq
  %v2478 = vshrl.u32 %v2477, 7
  %v2479 = vsub.s32 1, %v2478
  %v2480 = vrot.slane %v2152, %v2479
  %v2485 = vunpack.c.l.b16 %v2473
  %v2486 = vunpack.c.l.b16 %v2474
  %v2487 = vunpack.c.l.b16 %v2475
  %v2488 = vunpack.c.l.b16 %v2476
  %v2489 = vpack.c.b16 %v2486, %v2485
  %v2490 = vpack.c.b16 %v2488, %v2487
  %v2494 = vsel %vm41, %v2471, 0
  %2496 = vmatprep.subr.bf16.mxu0 0
  %2497 = vmatpush1.bf16.msra.mxu0 0
  %2498 = vmatprep.subr.bf16.mxu0 0
  %2499 = vmatpush1.bf16.msra.mxu0 0
  %2500 = vmatprep.subr.bf16.mxu0 0
  %2501 = vmatpush1.bf16.msra.mxu0 0
  %2502 = vmatprep.subr.bf16.mxu0 0
  %2503 = vmatpush1.bf16.msra.mxu0 0
  %2504 = vmatprep.subr.bf16.mxu0 0
  %2505 = vmatpush1.bf16.msra.mxu0 0
  %2506 = vmatprep.subr.bf16.mxu0 0
  %2507 = vmatpush1.bf16.msra.mxu0 0
  %2508 = vmatprep.subr.bf16.mxu0 0
  %2509 = vmatpush1.bf16.msra.mxu0 %v2490
  %2510 = vmatprep.subr.bf16.mxu0 0
  %2511 = vmatpush1.bf16.msra.mxu0 %v2489
  %2512 = vmatprep.subr.bf16.mxu0 0
  %2513 = vmatpush2.bf16.msra.mxu0 0
  %2514 = vmatprep.subr.bf16.mxu0 0
  %2515 = vmatpush2.bf16.msra.mxu0 0
  %2516 = vmatprep.subr.bf16.mxu0 0
  %2517 = vmatpush2.bf16.msra.mxu0 0
  %2518 = vmatprep.subr.bf16.mxu0 0
  %2519 = vmatpush2.bf16.msra.mxu0 0
  %2520 = vmatprep.subr.bf16.mxu0 0
  %2521 = vmatpush2.bf16.msra.mxu0 0
  %2522 = vmatprep.subr.bf16.mxu0 0
  %2523 = vmatpush2.bf16.msra.mxu0 0
  %2524 = vmatprep.subr.bf16.mxu0 0
  %2525 = vmatpush2.bf16.msra.mxu0 0
  %2526 = vmatprep.subr.bf16.mxu0 0
  %2527 = vmatpush2.bf16.msra.mxu0 0
  %2528 = vmatprep.mubr.bf16.mxu0 0
  %2529 = vmatmul.mubr.bf16.gmra.mxu0 %v2494
  %v2530 = vpop.f32.mrf.mxu0
  %v2531 = vadd.f32 %v2480, %v2530
  %v2532 = vpop.f32.mrf.mxu0
  %v2533 = vpop.f32.mrf.mxu0
  %v2534 = vadd.f32 %v2480, %v2533
  %v2535 = vpop.f32.mrf.mxu0
  %2536 = vdwg.mxu0
  %v2537 = vadd.f32 %v2531, %v2149
  %v2538 = vadd.f32 %v2534, %v2150
  %v2539 = vsel %vm41, %v2537, 0.0
  %2540 = vadd.xlane.f32.xlu0 %v2539
  %v2541 = vpop.xlane.xlu0 %2540
  %v2542 = vsel %vm41, %v2538, 0.0
  %2543 = vadd.xlane.f32.xlu0 %v2542
  %v2544 = vpop.xlane.xlu0 %2543
  %v2545 = vmul.f32 %v2541, %v48
  %v2546 = vmul.f32 %v2544, %v48
  %v2547 = vsub.f32 %v2537, %v2545
  %v2548 = vsub.f32 %v2538, %v2546
  %v2549 = vmul.f32 %v2547, %v2547
  %v2550 = vmul.f32 %v2548, %v2548
  %v2551 = vsel %vm41, %v2549, 0.0
  %2552 = vadd.xlane.f32.xlu0 %v2551
  %v2553 = vpop.xlane.xlu0 %2552
  %v2554 = vsel %vm41, %v2550, 0.0
  %2555 = vadd.xlane.f32.xlu0 %v2554
  %v2556 = vpop.xlane.xlu0 %2555
  %v2557 = vmul.f32 %v2553, %v48
  %v2558 = vmul.f32 %v2556, %v48
  %v2559 = vadd.f32 %v2557, 1e-12
  %v2560 = vadd.f32 %v2558, 1e-12
  %v2561 = vrsqrt.pop %v2559
  %v2562 = vrsqrt.pop %v2560
  %v2563 = vmul.f32 %v2547, %v2561
  %v2564 = vmul.f32 %v2548, %v2562
  %v2565 = vlaneseq
  %v2566 = vshrl.u32 %v2565, 7
  %v2567 = vsub.s32 2, %v2566
  %v2568 = vrot.slane %v2152, %v2567
  %v2569 = vmul.f32 %v2563, %v2568
  %v2570 = vmul.f32 %v2564, %v2568
  %v2571 = vlaneseq
  %v2572 = vshrl.u32 %v2571, 7
  %v2573 = vsub.s32 3, %v2572
  %v2574 = vrot.slane %v2152, %v2573
  %v2575 = vadd.f32 %v2569, %v2574
  %v2576 = vadd.f32 %v2570, %v2574
  %v2577 = vpack.c.bf16 %v2576, %v2575
  %s2578 = scalar_lea.vmem %s4, 48
  %v2579 = vld [vmem:[%s2578] sm:$0xf]
  %v2580 = vld [vmem:[%s2578 + $0x4] sm:$0xf]
  %v2581 = vld [vmem:[%s2578 + $0x8] sm:$0xf]
  %v2582 = vld [vmem:[%s2578 + $0xc] sm:$0xf]
  %v2583 = vlaneseq
  %v2584 = vshrl.u32 %v2583, 7
  %v2585 = vsub.s32 4, %v2584
  %v2586 = vrot.slane %v2152, %v2585
  %v2591 = vunpack.c.l.b16 %v2579
  %v2592 = vunpack.c.l.b16 %v2580
  %v2593 = vunpack.c.l.b16 %v2581
  %v2594 = vunpack.c.l.b16 %v2582
  %v2595 = vpack.c.b16 %v2592, %v2591
  %v2596 = vpack.c.b16 %v2594, %v2593
  %v2600 = vsel %vm41, %v2577, 0
  %2602 = vmatprep.subr.bf16.mxu0 0
  %2603 = vmatpush1.bf16.msra.mxu0 0
  %2604 = vmatprep.subr.bf16.mxu0 0
  %2605 = vmatpush1.bf16.msra.mxu0 0
  %2606 = vmatprep.subr.bf16.mxu0 0
  %2607 = vmatpush1.bf16.msra.mxu0 0
  %2608 = vmatprep.subr.bf16.mxu0 0
  %2609 = vmatpush1.bf16.msra.mxu0 0
  %2610 = vmatprep.subr.bf16.mxu0 0
  %2611 = vmatpush1.bf16.msra.mxu0 0
  %2612 = vmatprep.subr.bf16.mxu0 0
  %2613 = vmatpush1.bf16.msra.mxu0 0
  %2614 = vmatprep.subr.bf16.mxu0 0
  %2615 = vmatpush1.bf16.msra.mxu0 %v2596
  %2616 = vmatprep.subr.bf16.mxu0 0
  %2617 = vmatpush1.bf16.msra.mxu0 %v2595
  %2618 = vmatprep.subr.bf16.mxu0 0
  %2619 = vmatpush2.bf16.msra.mxu0 0
  %2620 = vmatprep.subr.bf16.mxu0 0
  %2621 = vmatpush2.bf16.msra.mxu0 0
  %2622 = vmatprep.subr.bf16.mxu0 0
  %2623 = vmatpush2.bf16.msra.mxu0 0
  %2624 = vmatprep.subr.bf16.mxu0 0
  %2625 = vmatpush2.bf16.msra.mxu0 0
  %2626 = vmatprep.subr.bf16.mxu0 0
  %2627 = vmatpush2.bf16.msra.mxu0 0
  %2628 = vmatprep.subr.bf16.mxu0 0
  %2629 = vmatpush2.bf16.msra.mxu0 0
  %2630 = vmatprep.subr.bf16.mxu0 0
  %2631 = vmatpush2.bf16.msra.mxu0 0
  %2632 = vmatprep.subr.bf16.mxu0 0
  %2633 = vmatpush2.bf16.msra.mxu0 0
  %2634 = vmatprep.mubr.bf16.mxu0 0
  %2635 = vmatmul.mubr.bf16.gmra.mxu0 %v2600
  %v2636 = vpop.f32.mrf.mxu0
  %v2637 = vadd.f32 %v2586, %v2636
  %v2638 = vpop.f32.mrf.mxu0
  %v2639 = vpop.f32.mrf.mxu0
  %v2640 = vadd.f32 %v2586, %v2639
  %v2641 = vpop.f32.mrf.mxu0
  %2642 = vdwg.mxu0
  %v2643 = vmul.f32 %v2637, 0.5
  %v2644 = vmul.f32 %v2640, 0.5
  %v2645 = vmul.f32 %v2637, 0.044715
  %v2646 = vmul.f32 %v2640, 0.044715
  %v2647 = vmul.f32 %v2645, %v2637
  %v2648 = vmul.f32 %v2646, %v2640
  %v2649 = vmul.f32 %v2647, %v2637
  %v2650 = vmul.f32 %v2648, %v2640
  %v2651 = vadd.f32 %v2637, %v2649
  %v2652 = vadd.f32 %v2640, %v2650
  %v2653 = vmul.f32 %v2651, 0.7978846
  %v2654 = vmul.f32 %v2652, 0.7978846
  %v2655 = vtanh.pop %v2653
  %v2656 = vtanh.pop %v2654
  %v2657 = vadd.f32 %v2655, 1.0
  %v2658 = vadd.f32 %v2656, 1.0
  %v2659 = vmul.f32 %v2643, %v2657
  %v2660 = vmul.f32 %v2644, %v2658
  %v2661 = vpack.c.bf16 %v2660, %v2659
  %s2662 = scalar_lea.vmem %s5, 96
  %v2663 = vld [vmem:[%s2662] sm:$0xf]
  %v2664 = vld [vmem:[%s2662 + $0x4] sm:$0xf]
  %v2665 = vld [vmem:[%s2662 + $0x8] sm:$0xf]
  %v2666 = vld [vmem:[%s2662 + $0xc] sm:$0xf]
  %v2667 = vld [vmem:[%s2662 + $0x10] sm:$0xf]
  %v2668 = vld [vmem:[%s2662 + $0x14] sm:$0xf]
  %v2669 = vld [vmem:[%s2662 + $0x18] sm:$0xf]
  %v2670 = vld [vmem:[%s2662 + $0x1c] sm:$0xf]
  %v2671 = vlaneseq
  %v2672 = vshrl.u32 %v2671, 7
  %v2673 = vsub.s32 5, %v2672
  %v2674 = vrot.slane %v2152, %v2673
  %v2683 = vunpack.c.l.b16 %v2663
  %v2684 = vunpack.c.l.b16 %v2664
  %v2685 = vunpack.c.l.b16 %v2665
  %v2686 = vunpack.c.l.b16 %v2666
  %v2687 = vunpack.c.l.b16 %v2667
  %v2688 = vunpack.c.l.b16 %v2668
  %v2689 = vunpack.c.l.b16 %v2669
  %v2690 = vunpack.c.l.b16 %v2670
  %v2691 = vpack.c.b16 %v2684, %v2683
  %v2692 = vpack.c.b16 %v2686, %v2685
  %v2693 = vpack.c.b16 %v2688, %v2687
  %v2694 = vpack.c.b16 %v2690, %v2689
  %v2700 = vsel %vm625, %v2661, 0
  %2702 = vmatprep.subr.bf16.mxu0 0
  %2703 = vmatpush1.bf16.msra.mxu0 0
  %2704 = vmatprep.subr.bf16.mxu0 0
  %2705 = vmatpush1.bf16.msra.mxu0 0
  %2706 = vmatprep.subr.bf16.mxu0 0
  %2707 = vmatpush1.bf16.msra.mxu0 0
  %2708 = vmatprep.subr.bf16.mxu0 0
  %2709 = vmatpush1.bf16.msra.mxu0 0
  %2710 = vmatprep.subr.bf16.mxu0 0
  %2711 = vmatpush1.bf16.msra.mxu0 %v2694
  %2712 = vmatprep.subr.bf16.mxu0 0
  %2713 = vmatpush1.bf16.msra.mxu0 %v2693
  %2714 = vmatprep.subr.bf16.mxu0 0
  %2715 = vmatpush1.bf16.msra.mxu0 %v2692
  %2716 = vmatprep.subr.bf16.mxu0 0
  %2717 = vmatpush1.bf16.msra.mxu0 %v2691
  %2718 = vmatprep.subr.bf16.mxu0 0
  %2719 = vmatpush2.bf16.msra.mxu0 0
  %2720 = vmatprep.subr.bf16.mxu0 0
  %2721 = vmatpush2.bf16.msra.mxu0 0
  %2722 = vmatprep.subr.bf16.mxu0 0
  %2723 = vmatpush2.bf16.msra.mxu0 0
  %2724 = vmatprep.subr.bf16.mxu0 0
  %2725 = vmatpush2.bf16.msra.mxu0 0
  %2726 = vmatprep.subr.bf16.mxu0 0
  %2727 = vmatpush2.bf16.msra.mxu0 0
  %2728 = vmatprep.subr.bf16.mxu0 0
  %2729 = vmatpush2.bf16.msra.mxu0 0
  %2730 = vmatprep.subr.bf16.mxu0 0
  %2731 = vmatpush2.bf16.msra.mxu0 0
  %2732 = vmatprep.subr.bf16.mxu0 0
  %2733 = vmatpush2.bf16.msra.mxu0 0
  %2734 = vmatprep.mubr.bf16.mxu0 0
  %2735 = vmatmul.mubr.bf16.gmra.mxu0 %v2700
  %v2736 = vpop.f32.mrf.mxu0
  %v2737 = vadd.f32 %v2674, %v2736
  %v2738 = vpop.f32.mrf.mxu0
  %v2739 = vpop.f32.mrf.mxu0
  %v2740 = vadd.f32 %v2674, %v2739
  %v2741 = vpop.f32.mrf.mxu0
  %2742 = vdwg.mxu0
  %v2743 = vadd.f32 %v2737, %v2575
  %v2744 = vadd.f32 %v2740, %v2576
  %v2745 = vsel %vm41, %v2743, 0.0
  %2746 = vadd.xlane.f32.xlu0 %v2745
  %v2747 = vpop.xlane.xlu0 %2746
  %v2748 = vsel %vm41, %v2744, 0.0
  %2749 = vadd.xlane.f32.xlu0 %v2748
  %v2750 = vpop.xlane.xlu0 %2749
  %v2751 = vmul.f32 %v2747, %v48
  %v2752 = vmul.f32 %v2750, %v48
  %v2753 = vsub.f32 %v2743, %v2751
  %v2754 = vsub.f32 %v2744, %v2752
  %v2755 = vmul.f32 %v2753, %v2753
  %v2756 = vmul.f32 %v2754, %v2754
  %v2757 = vsel %vm41, %v2755, 0.0
  %2758 = vadd.xlane.f32.xlu0 %v2757
  %v2759 = vpop.xlane.xlu0 %2758
  %v2760 = vsel %vm41, %v2756, 0.0
  %2761 = vadd.xlane.f32.xlu0 %v2760
  %v2762 = vpop.xlane.xlu0 %2761
  %v2763 = vmul.f32 %v2759, %v48
  %v2764 = vmul.f32 %v2762, %v48
  %v2765 = vadd.f32 %v2763, 1e-12
  %v2766 = vadd.f32 %v2764, 1e-12
  %v2767 = vrsqrt.pop %v2765
  %v2768 = vrsqrt.pop %v2766
  %v2769 = vmul.f32 %v2753, %v2767
  %v2770 = vmul.f32 %v2754, %v2768
  %v2771 = vlaneseq
  %v2772 = vshrl.u32 %v2771, 7
  %v2773 = vsub.s32 6, %v2772
  %v2774 = vrot.slane %v2152, %v2773
  %v2775 = vmul.f32 %v2769, %v2774
  %v2776 = vmul.f32 %v2770, %v2774
  %v2777 = vlaneseq
  %v2778 = vshrl.u32 %v2777, 7
  %v2779 = vsub.s32 7, %v2778
  %v2780 = vrot.slane %v2152, %v2779
  %v2781 = vadd.f32 %v2775, %v2780
  %v2782 = vadd.f32 %v2776, %v2780
  %v2783 = vpack.c.bf16 %v2782, %v2781
  %s2784 = scalar_lea.vmem %s7, 16
  %v2785 = vld [vmem:[%s2784] sm:$0xf]
  %v2786 = vld [vmem:[%s2784 + $0x4] sm:$0xf]
  %v2787 = vld [vmem:[%s2784 + $0x8] sm:$0xf]
  %v2788 = vld [vmem:[%s2784 + $0xc] sm:$0xf]
  %v2789 = vlaneseq
  %v2790 = vshrl.u32 %v2789, 7
  %v2791 = vsub.s32 2, %v2790
  %v2792 = vrot.slane %v1477, %v2791
  %v2797 = vunpack.c.l.b16 %v2785
  %v2798 = vunpack.c.l.b16 %v2786
  %v2799 = vunpack.c.l.b16 %v2787
  %v2800 = vunpack.c.l.b16 %v2788
  %v2801 = vpack.c.b16 %v2798, %v2797
  %v2802 = vpack.c.b16 %v2800, %v2799
  %v2806 = vsel %vm41, %v2783, 0
  %2808 = vmatprep.subr.bf16.mxu0 0
  %2809 = vmatpush1.bf16.msra.mxu0 0
  %2810 = vmatprep.subr.bf16.mxu0 0
  %2811 = vmatpush1.bf16.msra.mxu0 0
  %2812 = vmatprep.subr.bf16.mxu0 0
  %2813 = vmatpush1.bf16.msra.mxu0 0
  %2814 = vmatprep.subr.bf16.mxu0 0
  %2815 = vmatpush1.bf16.msra.mxu0 0
  %2816 = vmatprep.subr.bf16.mxu0 0
  %2817 = vmatpush1.bf16.msra.mxu0 0
  %2818 = vmatprep.subr.bf16.mxu0 0
  %2819 = vmatpush1.bf16.msra.mxu0 0
  %2820 = vmatprep.subr.bf16.mxu0 0
  %2821 = vmatpush1.bf16.msra.mxu0 %v2802
  %2822 = vmatprep.subr.bf16.mxu0 0
  %2823 = vmatpush1.bf16.msra.mxu0 %v2801
  %2824 = vmatprep.subr.bf16.mxu0 0
  %2825 = vmatpush2.bf16.msra.mxu0 0
  %2826 = vmatprep.subr.bf16.mxu0 0
  %2827 = vmatpush2.bf16.msra.mxu0 0
  %2828 = vmatprep.subr.bf16.mxu0 0
  %2829 = vmatpush2.bf16.msra.mxu0 0
  %2830 = vmatprep.subr.bf16.mxu0 0
  %2831 = vmatpush2.bf16.msra.mxu0 0
  %2832 = vmatprep.subr.bf16.mxu0 0
  %2833 = vmatpush2.bf16.msra.mxu0 0
  %2834 = vmatprep.subr.bf16.mxu0 0
  %2835 = vmatpush2.bf16.msra.mxu0 0
  %2836 = vmatprep.subr.bf16.mxu0 0
  %2837 = vmatpush2.bf16.msra.mxu0 0
  %2838 = vmatprep.subr.bf16.mxu0 0
  %2839 = vmatpush2.bf16.msra.mxu0 0
  %2840 = vmatprep.mubr.bf16.mxu0 0
  %2841 = vmatmul.mubr.bf16.gmra.mxu0 %v2806
  %v2842 = vpop.f32.mrf.mxu0
  %v2843 = vadd.f32 %v2792, %v2842
  %v2844 = vpop.f32.mrf.mxu0
  %v2845 = vpop.f32.mrf.mxu0
  %v2846 = vadd.f32 %v2792, %v2845
  %v2847 = vpop.f32.mrf.mxu0
  %2848 = vdwg.mxu0
  %v2849 = vtanh.pop %v2843
  %v2850 = vtanh.pop %v2846
  %v2851 = vpack.c.bf16 %v2850, %v2849
  %s2852 = scalar_lea.vmem %s8, 16
  %v2853 = vld [vmem:[%s2852] sm:$0xf]
  %v2854 = vld [vmem:[%s2852 + $0x4] sm:$0xf]
  %v2855 = vld [vmem:[%s2852 + $0x8] sm:$0xf]
  %v2856 = vld [vmem:[%s2852 + $0xc] sm:$0xf]
  %v2857 = vlaneseq
  %v2858 = vshrl.u32 %v2857, 7
  %v2859 = vsub.s32 3, %v2858
  %v2860 = vrot.slane %v1477, %v2859
  %v2865 = vunpack.c.l.b16 %v2853
  %v2866 = vunpack.c.l.b16 %v2854
  %v2867 = vunpack.c.l.b16 %v2855
  %v2868 = vunpack.c.l.b16 %v2856
  %v2869 = vpack.c.b16 %v2866, %v2865
  %v2870 = vpack.c.b16 %v2868, %v2867
  %v2874 = vsel %vm41, %v2851, 0
  %2876 = vmatprep.subr.bf16.mxu0 0
  %2877 = vmatpush1.bf16.msra.mxu0 0
  %2878 = vmatprep.subr.bf16.mxu0 0
  %2879 = vmatpush1.bf16.msra.mxu0 0
  %2880 = vmatprep.subr.bf16.mxu0 0
  %2881 = vmatpush1.bf16.msra.mxu0 0
  %2882 = vmatprep.subr.bf16.mxu0 0
  %2883 = vmatpush1.bf16.msra.mxu0 0
  %2884 = vmatprep.subr.bf16.mxu0 0
  %2885 = vmatpush1.bf16.msra.mxu0 0
  %2886 = vmatprep.subr.bf16.mxu0 0
  %2887 = vmatpush1.bf16.msra.mxu0 0
  %2888 = vmatprep.subr.bf16.mxu0 0
  %2889 = vmatpush1.bf16.msra.mxu0 %v2870
  %2890 = vmatprep.subr.bf16.mxu0 0
  %2891 = vmatpush1.bf16.msra.mxu0 %v2869
  %2892 = vmatprep.subr.bf16.mxu0 0
  %2893 = vmatpush2.bf16.msra.mxu0 0
  %2894 = vmatprep.subr.bf16.mxu0 0
  %2895 = vmatpush2.bf16.msra.mxu0 0
  %2896 = vmatprep.subr.bf16.mxu0 0
  %2897 = vmatpush2.bf16.msra.mxu0 0
  %2898 = vmatprep.subr.bf16.mxu0 0
  %2899 = vmatpush2.bf16.msra.mxu0 0
  %2900 = vmatprep.subr.bf16.mxu0 0
  %2901 = vmatpush2.bf16.msra.mxu0 0
  %2902 = vmatprep.subr.bf16.mxu0 0
  %2903 = vmatpush2.bf16.msra.mxu0 0
  %2904 = vmatprep.subr.bf16.mxu0 0
  %2905 = vmatpush2.bf16.msra.mxu0 0
  %2906 = vmatprep.subr.bf16.mxu0 0
  %2907 = vmatpush2.bf16.msra.mxu0 0
  %2908 = vmatprep.mubr.bf16.mxu0 0
  %2909 = vmatmul.mubr.bf16.gmra.mxu0 %v2874
  %v2910 = vpop.f32.mrf.mxu0
  %v2911 = vadd.f32 %v2860, %v2910
  %v2912 = vpop.f32.mrf.mxu0
  %v2913 = vpop.f32.mrf.mxu0
  %v2914 = vadd.f32 %v2860, %v2913
  %v2915 = vpop.f32.mrf.mxu0
  %2916 = vdwg.mxu0
  %s2917 = scalar_lea.vmem %s10, 16
  %2918 = vst [vmem:[%s2917] sm:$0xff] %v2911
  %2919 = vst [vmem:[%s2917 + $0x8] sm:$0xff] %v2914
  %s2920 = scalar_lea.vmem %s9, 16
  %v2921 = vld [vmem:[%s2920] sm:$0xff]
  %s2922 = scalar_lea.vmem %s0, 32
  %v2923 = vld [vmem:[%s2922] sm:$0xff]
  %v2924 = vld [vmem:[%s2922 + $0x8] sm:$0xff]
  %v2925 = vsel %vm41, %v2923, 0.0
  %2926 = vadd.xlane.f32.xlu0 %v2925
  %v2927 = vpop.xlane.xlu0 %2926
  %v2928 = vsel %vm41, %v2924, 0.0
  %2929 = vadd.xlane.f32.xlu0 %v2928
  %v2930 = vpop.xlane.xlu0 %2929
  %v2931 = vmul.f32 %v2927, %v48
  %v2932 = vmul.f32 %v2930, %v48
  %v2933 = vsub.f32 %v2923, %v2931
  %v2934 = vsub.f32 %v2924, %v2932
  %v2935 = vmul.f32 %v2933, %v2933
  %v2936 = vmul.f32 %v2934, %v2934
  %v2937 = vsel %vm41, %v2935, 0.0
  %2938 = vadd.xlane.f32.xlu0 %v2937
  %v2939 = vpop.xlane.xlu0 %2938
  %v2940 = vsel %vm41, %v2936, 0.0
  %2941 = vadd.xlane.f32.xlu0 %v2940
  %v2942 = vpop.xlane.xlu0 %2941
  %v2943 = vmul.f32 %v2939, %v48
  %v2944 = vmul.f32 %v2942, %v48
  %v2945 = vadd.f32 %v2943, 1e-12
  %v2946 = vadd.f32 %v2944, 1e-12
  %v2947 = vrsqrt.pop %v2945
  %v2948 = vrsqrt.pop %v2946
  %v2949 = vmul.f32 %v2933, %v2947
  %v2950 = vmul.f32 %v2934, %v2948
  %v2951 = vlaneseq
  %v2952 = vshrl.u32 %v2951, 7
  %v2953 = vsub.s32 0, %v2952
  %v2954 = vrot.slane %v2921, %v2953
  %v2955 = vmul.f32 %v2949, %v2954
  %v2956 = vmul.f32 %v2950, %v2954
  %v2957 = vlaneseq
  %v2958 = vshrl.u32 %v2957, 7
  %v2959 = vsub.s32 1, %v2958
  %v2960 = vrot.slane %v2921, %v2959
  %v2961 = vadd.f32 %v2955, %v2960
  %v2962 = vadd.f32 %v2956, %v2960
  %s2963 = scalar_lea.vmem %s6, 32
  %v2964 = vld [vmem:[%s2963] sm:$0xff]
  %v2965 = vpack.c.bf16 %v2962, %v2961
  %s2966 = scalar_lea.vmem %s2, 64
  %v2967 = vld [vmem:[%s2966] sm:$0xf]
  %v2968 = vld [vmem:[%s2966 + $0x4] sm:$0xf]
  %v2969 = vld [vmem:[%s2966 + $0x8] sm:$0xf]
  %v2970 = vld [vmem:[%s2966 + $0xc] sm:$0xf]
  %v2971 = vlaneseq
  %v2972 = vshrl.u32 %v2971, 7
  %v2973 = vsub.s32 0, %v2972
  %v2974 = vrot.slane %v2964, %v2973
  %v2979 = vunpack.c.l.b16 %v2967
  %v2980 = vunpack.c.l.b16 %v2968
  %v2981 = vunpack.c.l.b16 %v2969
  %v2982 = vunpack.c.l.b16 %v2970
  %v2983 = vpack.c.b16 %v2980, %v2979
  %v2984 = vpack.c.b16 %v2982, %v2981
  %v2988 = vsel %vm41, %v2965, 0
  %2990 = vmatprep.subr.bf16.mxu0 0
  %2991 = vmatpush1.bf16.msra.mxu0 0
  %2992 = vmatprep.subr.bf16.mxu0 0
  %2993 = vmatpush1.bf16.msra.mxu0 0
  %2994 = vmatprep.subr.bf16.mxu0 0
  %2995 = vmatpush1.bf16.msra.mxu0 0
  %2996 = vmatprep.subr.bf16.mxu0 0
  %2997 = vmatpush1.bf16.msra.mxu0 0
  %2998 = vmatprep.subr.bf16.mxu0 0
  %2999 = vmatpush1.bf16.msra.mxu0 0
  %3000 = vmatprep.subr.bf16.mxu0 0
  %3001 = vmatpush1.bf16.msra.mxu0 0
  %3002 = vmatprep.subr.bf16.mxu0 0
  %3003 = vmatpush1.bf16.msra.mxu0 %v2984
  %3004 = vmatprep.subr.bf16.mxu0 0
  %3005 = vmatpush1.bf16.msra.mxu0 %v2983
  %3006 = vmatprep.subr.bf16.mxu0 0
  %3007 = vmatpush2.bf16.msra.mxu0 0
  %3008 = vmatprep.subr.bf16.mxu0 0
  %3009 = vmatpush2.bf16.msra.mxu0 0
  %3010 = vmatprep.subr.bf16.mxu0 0
  %3011 = vmatpush2.bf16.msra.mxu0 0
  %3012 = vmatprep.subr.bf16.mxu0 0
  %3013 = vmatpush2.bf16.msra.mxu0 0
  %3014 = vmatprep.subr.bf16.mxu0 0
  %3015 = vmatpush2.bf16.msra.mxu0 0
  %3016 = vmatprep.subr.bf16.mxu0 0
  %3017 = vmatpush2.bf16.msra.mxu0 0
  %3018 = vmatprep.subr.bf16.mxu0 0
  %3019 = vmatpush2.bf16.msra.mxu0 0
  %3020 = vmatprep.subr.bf16.mxu0 0
  %3021 = vmatpush2.bf16.msra.mxu0 0
  %3022 = vmatprep.mubr.bf16.mxu0 0
  %3023 = vmatmul.mubr.bf16.gmra.mxu0 %v2988
  %v3024 = vpop.f32.mrf.mxu0
  %v3025 = vadd.f32 %v2974, %v3024
  %v3026 = vpop.f32.mrf.mxu0
  %v3027 = vpop.f32.mrf.mxu0
  %v3028 = vadd.f32 %v2974, %v3027
  %v3029 = vpop.f32.mrf.mxu0
  %3030 = vdwg.mxu0
  %v3031 = vpack.c.bf16 %v3028, %v3025
  %3033 = vrot.lane.b32.xlu0 %v3031, 96
  %v3034 = vpop.permute.xlu0 %3033
  %v3036 = vsel %vm151, %v3031, 0
  %v3039 = vsel %vm151, %v3034, 0
  %3041 = vmatprep.subr.bf16.mxu0 0
  %3042 = vmatpush1.bf16.xpose.msra.mxu0 0
  %3043 = vmatprep.subr.bf16.mxu0 0
  %3044 = vmatpush1.bf16.xpose.msra.mxu0 0
  %3045 = vmatprep.subr.bf16.mxu0 0
  %3046 = vmatpush1.bf16.xpose.msra.mxu0 0
  %3047 = vmatprep.subr.bf16.mxu0 0
  %3048 = vmatpush1.bf16.xpose.msra.mxu0 0
  %3049 = vmatprep.subr.bf16.mxu0 0
  %3050 = vmatpush1.bf16.xpose.msra.mxu0 0
  %3051 = vmatprep.subr.bf16.mxu0 0
  %3052 = vmatpush1.bf16.xpose.msra.mxu0 0
  %3053 = vmatprep.subr.bf16.mxu0 0
  %3054 = vmatpush1.bf16.xpose.msra.mxu0 0
  %3055 = vmatprep.subr.bf16.mxu0 0
  %3056 = vmatpush1.bf16.xpose.msra.mxu0 %v3039
  %3057 = vmatprep.subr.bf16.mxu0 0
  %3058 = vmatpush2.bf16.xpose.msra.mxu0 0
  %3059 = vmatprep.subr.bf16.mxu0 0
  %3060 = vmatpush2.bf16.xpose.msra.mxu0 0
  %3061 = vmatprep.subr.bf16.mxu0 0
  %3062 = vmatpush2.bf16.xpose.msra.mxu0 0
  %3063 = vmatprep.subr.bf16.mxu0 0
  %3064 = vmatpush2.bf16.xpose.msra.mxu0 0
  %3065 = vmatprep.subr.bf16.mxu0 0
  %3066 = vmatpush2.bf16.xpose.msra.mxu0 0
  %3067 = vmatprep.subr.bf16.mxu0 0
  %3068 = vmatpush2.bf16.xpose.msra.mxu0 0
  %3069 = vmatprep.subr.bf16.mxu0 0
  %3070 = vmatpush2.bf16.xpose.msra.mxu0 0
  %3071 = vmatprep.subr.bf16.mxu0 0
  %3072 = vmatpush2.bf16.xpose.msra.mxu0 0
  %3073 = vmatprep.mubr.bf16.mxu0 0
  %3074 = vmatmul.mubr.bf16.gmra.mxu0 %v3036
  %v3075 = vpop.f32.mrf.mxu0
  %v3076 = vadd.f32 %v36, %v3075
  %v3077 = vpop.f32.mrf.mxu0
  %v3078 = vpop.f32.mrf.mxu0
  %v3079 = vadd.f32 %v37, %v3078
  %v3080 = vpop.f32.mrf.mxu0
  %3081 = vdwg.mxu0
  %v3082 = vsel %vm151, %v3076, -inf
  %3083 = vmax.xlane.f32.xlu0 %v3082
  %v3084 = vpop.xlane.xlu0 %3083
  %v3085 = vsel %vm151, %v3079, -inf
  %3086 = vmax.xlane.f32.xlu0 %v3085
  %v3087 = vpop.xlane.xlu0 %3086
  %v3088 = vsub.f32 %v3076, %v3084
  %v3089 = vsub.f32 %v3079, %v3087
  %v3090 = vmul.f32 %v3088, 1.442695
  %v3091 = vpow.pop %v3090
  %v3092 = vmul.f32 %v3089, 1.442695
  %v3093 = vpow.pop %v3092
  %v3094 = vsel %vm151, %v3091, 0.0
  %3095 = vadd.xlane.f32.xlu0 %v3094
  %v3096 = vpop.xlane.xlu0 %3095
  %v3097 = vsel %vm151, %v3093, 0.0
  %3098 = vadd.xlane.f32.xlu0 %v3097
  %v3099 = vpop.xlane.xlu0 %3098
  %v3100 = vrcp.pop %v3096
  %v3101 = vmul.f32 %v3091, %v3100
  %v3102 = vrcp.pop %v3099
  %v3103 = vmul.f32 %v3093, %v3102
  %v3104 = vpack.c.bf16 %v3103, %v3101
  %3105 = vrot.lane.b32.xlu0 %v3031, 64
  %v3106 = vpop.permute.xlu0 %3105
  %v3109 = vsel %vm151, %v3104, 0
  %3111 = vmatprep.subr.bf16.mxu0 0
  %3112 = vmatpush1.bf16.msra.mxu0 0
  %3113 = vmatprep.subr.bf16.mxu0 0
  %3114 = vmatpush1.bf16.msra.mxu0 0
  %3115 = vmatprep.subr.bf16.mxu0 0
  %3116 = vmatpush1.bf16.msra.mxu0 0
  %3117 = vmatprep.subr.bf16.mxu0 0
  %3118 = vmatpush1.bf16.msra.mxu0 0
  %3119 = vmatprep.subr.bf16.mxu0 0
  %3120 = vmatpush1.bf16.msra.mxu0 0
  %3121 = vmatprep.subr.bf16.mxu0 0
  %3122 = vmatpush1.bf16.msra.mxu0 0
  %3123 = vmatprep.subr.bf16.mxu0 0
  %3124 = vmatpush1.bf16.msra.mxu0 0
  %3125 = vmatprep.subr.bf16.mxu0 0
  %3126 = vmatpush1.bf16.msra.mxu0 %v3106
  %3127 = vmatprep.subr.bf16.mxu0 0
  %3128 = vmatpush2.bf16.msra.mxu0 0
  %3129 = vmatprep.subr.bf16.mxu0 0
  %3130 = vmatpush2.bf16.msra.mxu0 0
  %3131 = vmatprep.subr.bf16.mxu0 0
  %3132 = vmatpush2.bf16.msra.mxu0 0
  %3133 = vmatprep.subr.bf16.mxu0 0
  %3134 = vmatpush2.bf16.msra.mxu0 0
  %3135 = vmatprep.subr.bf16.mxu0 0
  %3136 = vmatpush2.bf16.msra.mxu0 0
  %3137 = vmatprep.subr.bf16.mxu0 0
  %3138 = vmatpush2.bf16.msra.mxu0 0
  %3139 = vmatprep.subr.bf16.mxu0 0
  %3140 = vmatpush2.bf16.msra.mxu0 0
  %3141 = vmatprep.subr.bf16.mxu0 0
  %3142 = vmatpush2.bf16.msra.mxu0 0
  %3143 = vmatprep.mubr.bf16.mxu0 0
  %3144 = vmatmul.mubr.bf16.gmra.mxu0 %v3109
  %v3145 = vpop.f32.mrf.mxu0
  %v3146 = vadd.f32 0.0, %v3145
  %v3147 = vpop.f32.mrf.mxu0
  %v3148 = vpop.f32.mrf.mxu0
  %v3149 = vadd.f32 0.0, %v3148
  %v3150 = vpop.f32.mrf.mxu0
  %3151 = vdwg.mxu0
  %3152 = vrot.lane.b32.xlu0 %v3031, 112
  %v3153 = vpop.permute.xlu0 %3152
  %3154 = vrot.lane.b32.xlu0 %v3031, 80
  %v3155 = vpop.permute.xlu0 %3154
  %v3157 = vsel %vm151, %v3153, 0
  %v3160 = vsel %vm151, %v3155, 0
  %3162 = vmatprep.subr.bf16.mxu0 0
  %3163 = vmatpush1.bf16.xpose.msra.mxu0 0
  %3164 = vmatprep.subr.bf16.mxu0 0
  %3165 = vmatpush1.bf16.xpose.msra.mxu0 0
  %3166 = vmatprep.subr.bf16.mxu0 0
  %3167 = vmatpush1.bf16.xpose.msra.mxu0 0
  %3168 = vmatprep.subr.bf16.mxu0 0
  %3169 = vmatpush1.bf16.xpose.msra.mxu0 0
  %3170 = vmatprep.subr.bf16.mxu0 0
  %3171 = vmatpush1.bf16.xpose.msra.mxu0 0
  %3172 = vmatprep.subr.bf16.mxu0 0
  %3173 = vmatpush1.bf16.xpose.msra.mxu0 0
  %3174 = vmatprep.subr.bf16.mxu0 0
  %3175 = vmatpush1.bf16.xpose.msra.mxu0 0
  %3176 = vmatprep.subr.bf16.mxu0 0
  %3177 = vmatpush1.bf16.xpose.msra.mxu0 %v3160
  %3178 = vmatprep.subr.bf16.mxu0 0
  %3179 = vmatpush2.bf16.xpose.msra.mxu0 0
  %3180 = vmatprep.subr.bf16.mxu0 0
  %3181 = vmatpush2.bf16.xpose.msra.mxu0 0
  %3182 = vmatprep.subr.bf16.mxu0 0
  %3183 = vmatpush2.bf16.xpose.msra.mxu0 0
  %3184 = vmatprep.subr.bf16.mxu0 0
  %3185 = vmatpush2.bf16.xpose.msra.mxu0 0
  %3186 = vmatprep.subr.bf16.mxu0 0
  %3187 = vmatpush2.bf16.xpose.msra.mxu0 0
  %3188 = vmatprep.subr.bf16.mxu0 0
  %3189 = vmatpush2.bf16.xpose.msra.mxu0 0
  %3190 = vmatprep.subr.bf16.mxu0 0
  %3191 = vmatpush2.bf16.xpose.msra.mxu0 0
  %3192 = vmatprep.subr.bf16.mxu0 0
  %3193 = vmatpush2.bf16.xpose.msra.mxu0 0
  %3194 = vmatprep.mubr.bf16.mxu0 0
  %3195 = vmatmul.mubr.bf16.gmra.mxu0 %v3157
  %v3196 = vpop.f32.mrf.mxu0
  %v3197 = vadd.f32 %v36, %v3196
  %v3198 = vpop.f32.mrf.mxu0
  %v3199 = vpop.f32.mrf.mxu0
  %v3200 = vadd.f32 %v37, %v3199
  %v3201 = vpop.f32.mrf.mxu0
  %3202 = vdwg.mxu0
  %v3203 = vsel %vm151, %v3197, -inf
  %3204 = vmax.xlane.f32.xlu0 %v3203
  %v3205 = vpop.xlane.xlu0 %3204
  %v3206 = vsel %vm151, %v3200, -inf
  %3207 = vmax.xlane.f32.xlu0 %v3206
  %v3208 = vpop.xlane.xlu0 %3207
  %v3209 = vsub.f32 %v3197, %v3205
  %v3210 = vsub.f32 %v3200, %v3208
  %v3211 = vmul.f32 %v3209, 1.442695
  %v3212 = vpow.pop %v3211
  %v3213 = vmul.f32 %v3210, 1.442695
  %v3214 = vpow.pop %v3213
  %v3215 = vsel %vm151, %v3212, 0.0
  %3216 = vadd.xlane.f32.xlu0 %v3215
  %v3217 = vpop.xlane.xlu0 %3216
  %v3218 = vsel %vm151, %v3214, 0.0
  %3219 = vadd.xlane.f32.xlu0 %v3218
  %v3220 = vpop.xlane.xlu0 %3219
  %v3221 = vrcp.pop %v3217
  %v3222 = vmul.f32 %v3212, %v3221
  %v3223 = vrcp.pop %v3220
  %v3224 = vmul.f32 %v3214, %v3223
  %v3225 = vpack.c.bf16 %v3224, %v3222
  %3226 = vrot.lane.b32.xlu0 %v3031, 48
  %v3227 = vpop.permute.xlu0 %3226
  %v3230 = vsel %vm151, %v3225, 0
  %3232 = vmatprep.subr.bf16.mxu0 0
  %3233 = vmatpush1.bf16.msra.mxu0 0
  %3234 = vmatprep.subr.bf16.mxu0 0
  %3235 = vmatpush1.bf16.msra.mxu0 0
  %3236 = vmatprep.subr.bf16.mxu0 0
  %3237 = vmatpush1.bf16.msra.mxu0 0
  %3238 = vmatprep.subr.bf16.mxu0 0
  %3239 = vmatpush1.bf16.msra.mxu0 0
  %3240 = vmatprep.subr.bf16.mxu0 0
  %3241 = vmatpush1.bf16.msra.mxu0 0
  %3242 = vmatprep.subr.bf16.mxu0 0
  %3243 = vmatpush1.bf16.msra.mxu0 0
  %3244 = vmatprep.subr.bf16.mxu0 0
  %3245 = vmatpush1.bf16.msra.mxu0 0
  %3246 = vmatprep.subr.bf16.mxu0 0
  %3247 = vmatpush1.bf16.msra.mxu0 %v3227
  %3248 = vmatprep.subr.bf16.mxu0 0
  %3249 = vmatpush2.bf16.msra.mxu0 0
  %3250 = vmatprep.subr.bf16.mxu0 0
  %3251 = vmatpush2.bf16.msra.mxu0 0
  %3252 = vmatprep.subr.bf16.mxu0 0
  %3253 = vmatpush2.bf16.msra.mxu0 0
  %3254 = vmatprep.subr.bf16.mxu0 0
  %3255 = vmatpush2.bf16.msra.mxu0 0
  %3256 = vmatprep.subr.bf16.mxu0 0
  %3257 = vmatpush2.bf16.msra.mxu0 0
  %3258 = vmatprep.subr.bf16.mxu0 0
  %3259 = vmatpush2.bf16.msra.mxu0 0
  %3260 = vmatprep.subr.bf16.mxu0 0
  %3261 = vmatpush2.bf16.msra.mxu0 0
  %3262 = vmatprep.subr.bf16.mxu0 0
  %3263 = vmatpush2.bf16.msra.mxu0 0
  %3264 = vmatprep.mubr.bf16.mxu0 0
  %3265 = vmatmul.mubr.bf16.gmra.mxu0 %v3230
  %v3266 = vpop.f32.mrf.mxu0
  %v3267 = vadd.f32 0.0, %v3266
  %v3268 = vpop.f32.mrf.mxu0
  %v3269 = vpop.f32.mrf.mxu0
  %v3270 = vadd.f32 0.0, %v3269
  %v3271 = vpop.f32.mrf.mxu0
  %3272 = vdwg.mxu0
  %3275 = vrot.lane.b32.xlu0 %v3267, 16
  %v3276 = vpop.permute.xlu0 %3275
  %3277 = vrot.lane.b32.xlu0 %v3270, 16
  %v3278 = vpop.permute.xlu0 %3277
  %v3281 = vsel %vm151, %v3146, %v3276
  %v3282 = vsel %vm151, %v3149, %v3278
  %v3283 = vpack.c.bf16 %v3282, %v3281
  %s3284 = scalar_lea.vmem %s3, 64
  %v3285 = vld [vmem:[%s3284] sm:$0xf]
  %v3286 = vld [vmem:[%s3284 + $0x4] sm:$0xf]
  %v3287 = vld [vmem:[%s3284 + $0x8] sm:$0xf]
  %v3288 = vld [vmem:[%s3284 + $0xc] sm:$0xf]
  %v3289 = vlaneseq
  %v3290 = vshrl.u32 %v3289, 7
  %v3291 = vsub.s32 1, %v3290
  %v3292 = vrot.slane %v2964, %v3291
  %v3297 = vunpack.c.l.b16 %v3285
  %v3298 = vunpack.c.l.b16 %v3286
  %v3299 = vunpack.c.l.b16 %v3287
  %v3300 = vunpack.c.l.b16 %v3288
  %v3301 = vpack.c.b16 %v3298, %v3297
  %v3302 = vpack.c.b16 %v3300, %v3299
  %v3306 = vsel %vm41, %v3283, 0
  %3308 = vmatprep.subr.bf16.mxu0 0
  %3309 = vmatpush1.bf16.msra.mxu0 0
  %3310 = vmatprep.subr.bf16.mxu0 0
  %3311 = vmatpush1.bf16.msra.mxu0 0
  %3312 = vmatprep.subr.bf16.mxu0 0
  %3313 = vmatpush1.bf16.msra.mxu0 0
  %3314 = vmatprep.subr.bf16.mxu0 0
  %3315 = vmatpush1.bf16.msra.mxu0 0
  %3316 = vmatprep.subr.bf16.mxu0 0
  %3317 = vmatpush1.bf16.msra.mxu0 0
  %3318 = vmatprep.subr.bf16.mxu0 0
  %3319 = vmatpush1.bf16.msra.mxu0 0
  %3320 = vmatprep.subr.bf16.mxu0 0
  %3321 = vmatpush1.bf16.msra.mxu0 %v3302
  %3322 = vmatprep.subr.bf16.mxu0 0
  %3323 = vmatpush1.bf16.msra.mxu0 %v3301
  %3324 = vmatprep.subr.bf16.mxu0 0
  %3325 = vmatpush2.bf16.msra.mxu0 0
  %3326 = vmatprep.subr.bf16.mxu0 0
  %3327 = vmatpush2.bf16.msra.mxu0 0
  %3328 = vmatprep.subr.bf16.mxu0 0
  %3329 = vmatpush2.bf16.msra.mxu0 0
  %3330 = vmatprep.subr.bf16.mxu0 0
  %3331 = vmatpush2.bf16.msra.mxu0 0
  %3332 = vmatprep.subr.bf16.mxu0 0
  %3333 = vmatpush2.bf16.msra.mxu0 0
  %3334 = vmatprep.subr.bf16.mxu0 0
  %3335 = vmatpush2.bf16.msra.mxu0 0
  %3336 = vmatprep.subr.bf16.mxu0 0
  %3337 = vmatpush2.bf16.msra.mxu0 0
  %3338 = vmatprep.subr.bf16.mxu0 0
  %3339 = vmatpush2.bf16.msra.mxu0 0
  %3340 = vmatprep.mubr.bf16.mxu0 0
  %3341 = vmatmul.mubr.bf16.gmra.mxu0 %v3306
  %v3342 = vpop.f32.mrf.mxu0
  %v3343 = vadd.f32 %v3292, %v3342
  %v3344 = vpop.f32.mrf.mxu0
  %v3345 = vpop.f32.mrf.mxu0
  %v3346 = vadd.f32 %v3292, %v3345
  %v3347 = vpop.f32.mrf.mxu0
  %3348 = vdwg.mxu0
  %v3349 = vadd.f32 %v3343, %v2961
  %v3350 = vadd.f32 %v3346, %v2962
  %v3351 = vsel %vm41, %v3349, 0.0
  %3352 = vadd.xlane.f32.xlu0 %v3351
  %v3353 = vpop.xlane.xlu0 %3352
  %v3354 = vsel %vm41, %v3350, 0.0
  %3355 = vadd.xlane.f32.xlu0 %v3354
  %v3356 = vpop.xlane.xlu0 %3355
  %v3357 = vmul.f32 %v3353, %v48
  %v3358 = vmul.f32 %v3356, %v48
  %v3359 = vsub.f32 %v3349, %v3357
  %v3360 = vsub.f32 %v3350, %v3358
  %v3361 = vmul.f32 %v3359, %v3359
  %v3362 = vmul.f32 %v3360, %v3360
  %v3363 = vsel %vm41, %v3361, 0.0
  %3364 = vadd.xlane.f32.xlu0 %v3363
  %v3365 = vpop.xlane.xlu0 %3364
  %v3366 = vsel %vm41, %v3362, 0.0
  %3367 = vadd.xlane.f32.xlu0 %v3366
  %v3368 = vpop.xlane.xlu0 %3367
  %v3369 = vmul.f32 %v3365, %v48
  %v3370 = vmul.f32 %v3368, %v48
  %v3371 = vadd.f32 %v3369, 1e-12
  %v3372 = vadd.f32 %v3370, 1e-12
  %v3373 = vrsqrt.pop %v3371
  %v3374 = vrsqrt.pop %v3372
  %v3375 = vmul.f32 %v3359, %v3373
  %v3376 = vmul.f32 %v3360, %v3374
  %v3377 = vlaneseq
  %v3378 = vshrl.u32 %v3377, 7
  %v3379 = vsub.s32 2, %v3378
  %v3380 = vrot.slane %v2964, %v3379
  %v3381 = vmul.f32 %v3375, %v3380
  %v3382 = vmul.f32 %v3376, %v3380
  %v3383 = vlaneseq
  %v3384 = vshrl.u32 %v3383, 7
  %v3385 = vsub.s32 3, %v3384
  %v3386 = vrot.slane %v2964, %v3385
  %v3387 = vadd.f32 %v3381, %v3386
  %v3388 = vadd.f32 %v3382, %v3386
  %v3389 = vpack.c.bf16 %v3388, %v3387
  %s3390 = scalar_lea.vmem %s4, 64
  %v3391 = vld [vmem:[%s3390] sm:$0xf]
  %v3392 = vld [vmem:[%s3390 + $0x4] sm:$0xf]
  %v3393 = vld [vmem:[%s3390 + $0x8] sm:$0xf]
  %v3394 = vld [vmem:[%s3390 + $0xc] sm:$0xf]
  %v3395 = vlaneseq
  %v3396 = vshrl.u32 %v3395, 7
  %v3397 = vsub.s32 4, %v3396
  %v3398 = vrot.slane %v2964, %v3397
  %v3403 = vunpack.c.l.b16 %v3391
  %v3404 = vunpack.c.l.b16 %v3392
  %v3405 = vunpack.c.l.b16 %v3393
  %v3406 = vunpack.c.l.b16 %v3394
  %v3407 = vpack.c.b16 %v3404, %v3403
  %v3408 = vpack.c.b16 %v3406, %v3405
  %v3412 = vsel %vm41, %v3389, 0
  %3414 = vmatprep.subr.bf16.mxu0 0
  %3415 = vmatpush1.bf16.msra.mxu0 0
  %3416 = vmatprep.subr.bf16.mxu0 0
  %3417 = vmatpush1.bf16.msra.mxu0 0
  %3418 = vmatprep.subr.bf16.mxu0 0
  %3419 = vmatpush1.bf16.msra.mxu0 0
  %3420 = vmatprep.subr.bf16.mxu0 0
  %3421 = vmatpush1.bf16.msra.mxu0 0
  %3422 = vmatprep.subr.bf16.mxu0 0
  %3423 = vmatpush1.bf16.msra.mxu0 0
  %3424 = vmatprep.subr.bf16.mxu0 0
  %3425 = vmatpush1.bf16.msra.mxu0 0
  %3426 = vmatprep.subr.bf16.mxu0 0
  %3427 = vmatpush1.bf16.msra.mxu0 %v3408
  %3428 = vmatprep.subr.bf16.mxu0 0
  %3429 = vmatpush1.bf16.msra.mxu0 %v3407
  %3430 = vmatprep.subr.bf16.mxu0 0
  %3431 = vmatpush2.bf16.msra.mxu0 0
  %3432 = vmatprep.subr.bf16.mxu0 0
  %3433 = vmatpush2.bf16.msra.mxu0 0
  %3434 = vmatprep.subr.bf16.mxu0 0
  %3435 = vmatpush2.bf16.msra.mxu0 0
  %3436 = vmatprep.subr.bf16.mxu0 0
  %3437 = vmatpush2.bf16.msra.mxu0 0
  %3438 = vmatprep.subr.bf16.mxu0 0
  %3439 = vmatpush2.bf16.msra.mxu0 0
  %3440 = vmatprep.subr.bf16.mxu0 0
  %3441 = vmatpush2.bf16.msra.mxu0 0
  %3442 = vmatprep.subr.bf16.mxu0 0
  %3443 = vmatpush2.bf16.msra.mxu0 0
  %3444 = vmatprep.subr.bf16.mxu0 0
  %3445 = vmatpush2.bf16.msra.mxu0 0
  %3446 = vmatprep.mubr.bf16.mxu0 0
  %3447 = vmatmul.mubr.bf16.gmra.mxu0 %v3412
  %v3448 = vpop.f32.mrf.mxu0
  %v3449 = vadd.f32 %v3398, %v3448
  %v3450 = vpop.f32.mrf.mxu0
  %v3451 = vpop.f32.mrf.mxu0
  %v3452 = vadd.f32 %v3398, %v3451
  %v3453 = vpop.f32.mrf.mxu0
  %3454 = vdwg.mxu0
  %v3455 = vmul.f32 %v3449, 0.5
  %v3456 = vmul.f32 %v3452, 0.5
  %v3457 = vmul.f32 %v3449, 0.044715
  %v3458 = vmul.f32 %v3452, 0.044715
  %v3459 = vmul.f32 %v3457, %v3449
  %v3460 = vmul.f32 %v3458, %v3452
  %v3461 = vmul.f32 %v3459, %v3449
  %v3462 = vmul.f32 %v3460, %v3452
  %v3463 = vadd.f32 %v3449, %v3461
  %v3464 = vadd.f32 %v3452, %v3462
  %v3465 = vmul.f32 %v3463, 0.7978846
  %v3466 = vmul.f32 %v3464, 0.7978846
  %v3467 = vtanh.pop %v3465
  %v3468 = vtanh.pop %v3466
  %v3469 = vadd.f32 %v3467, 1.0
  %v3470 = vadd.f32 %v3468, 1.0
  %v3471 = vmul.f32 %v3455, %v3469
  %v3472 = vmul.f32 %v3456, %v3470
  %v3473 = vpack.c.bf16 %v3472, %v3471
  %s3474 = scalar_lea.vmem %s5, 128
  %v3475 = vld [vmem:[%s3474] sm:$0xf]
  %v3476 = vld [vmem:[%s3474 + $0x4] sm:$0xf]
  %v3477 = vld [vmem:[%s3474 + $0x8] sm:$0xf]
  %v3478 = vld [vmem:[%s3474 + $0xc] sm:$0xf]
  %v3479 = vld [vmem:[%s3474 + $0x10] sm:$0xf]
  %v3480 = vld [vmem:[%s3474 + $0x14] sm:$0xf]
  %v3481 = vld [vmem:[%s3474 + $0x18] sm:$0xf]
  %v3482 = vld [vmem:[%s3474 + $0x1c] sm:$0xf]
  %v3483 = vlaneseq
  %v3484 = vshrl.u32 %v3483, 7
  %v3485 = vsub.s32 5, %v3484
  %v3486 = vrot.slane %v2964, %v3485
  %v3495 = vunpack.c.l.b16 %v3475
  %v3496 = vunpack.c.l.b16 %v3476
  %v3497 = vunpack.c.l.b16 %v3477
  %v3498 = vunpack.c.l.b16 %v3478
  %v3499 = vunpack.c.l.b16 %v3479
  %v3500 = vunpack.c.l.b16 %v3480
  %v3501 = vunpack.c.l.b16 %v3481
  %v3502 = vunpack.c.l.b16 %v3482
  %v3503 = vpack.c.b16 %v3496, %v3495
  %v3504 = vpack.c.b16 %v3498, %v3497
  %v3505 = vpack.c.b16 %v3500, %v3499
  %v3506 = vpack.c.b16 %v3502, %v3501
  %v3512 = vsel %vm625, %v3473, 0
  %3514 = vmatprep.subr.bf16.mxu0 0
  %3515 = vmatpush1.bf16.msra.mxu0 0
  %3516 = vmatprep.subr.bf16.mxu0 0
  %3517 = vmatpush1.bf16.msra.mxu0 0
  %3518 = vmatprep.subr.bf16.mxu0 0
  %3519 = vmatpush1.bf16.msra.mxu0 0
  %3520 = vmatprep.subr.bf16.mxu0 0
  %3521 = vmatpush1.bf16.msra.mxu0 0
  %3522 = vmatprep.subr.bf16.mxu0 0
  %3523 = vmatpush1.bf16.msra.mxu0 %v3506
  %3524 = vmatprep.subr.bf16.mxu0 0
  %3525 = vmatpush1.bf16.msra.mxu0 %v3505
  %3526 = vmatprep.subr.bf16.mxu0 0
  %3527 = vmatpush1.bf16.msra.mxu0 %v3504
  %3528 = vmatprep.subr.bf16.mxu0 0
  %3529 = vmatpush1.bf16.msra.mxu0 %v3503
  %3530 = vmatprep.subr.bf16.mxu0 0
  %3531 = vmatpush2.bf16.msra.mxu0 0
  %3532 = vmatprep.subr.bf16.mxu0 0
  %3533 = vmatpush2.bf16.msra.mxu0 0
  %3534 = vmatprep.subr.bf16.mxu0 0
  %3535 = vmatpush2.bf16.msra.mxu0 0
  %3536 = vmatprep.subr.bf16.mxu0 0
  %3537 = vmatpush2.bf16.msra.mxu0 0
  %3538 = vmatprep.subr.bf16.mxu0 0
  %3539 = vmatpush2.bf16.msra.mxu0 0
  %3540 = vmatprep.subr.bf16.mxu0 0
  %3541 = vmatpush2.bf16.msra.mxu0 0
  %3542 = vmatprep.subr.bf16.mxu0 0
  %3543 = vmatpush2.bf16.msra.mxu0 0
  %3544 = vmatprep.subr.bf16.mxu0 0
  %3545 = vmatpush2.bf16.msra.mxu0 0
  %3546 = vmatprep.mubr.bf16.mxu0 0
  %3547 = vmatmul.mubr.bf16.gmra.mxu0 %v3512
  %v3548 = vpop.f32.mrf.mxu0
  %v3549 = vadd.f32 %v3486, %v3548
  %v3550 = vpop.f32.mrf.mxu0
  %v3551 = vpop.f32.mrf.mxu0
  %v3552 = vadd.f32 %v3486, %v3551
  %v3553 = vpop.f32.mrf.mxu0
  %3554 = vdwg.mxu0
  %v3555 = vadd.f32 %v3549, %v3387
  %v3556 = vadd.f32 %v3552, %v3388
  %v3557 = vsel %vm41, %v3555, 0.0
  %3558 = vadd.xlane.f32.xlu0 %v3557
  %v3559 = vpop.xlane.xlu0 %3558
  %v3560 = vsel %vm41, %v3556, 0.0
  %3561 = vadd.xlane.f32.xlu0 %v3560
  %v3562 = vpop.xlane.xlu0 %3561
  %v3563 = vmul.f32 %v3559, %v48
  %v3564 = vmul.f32 %v3562, %v48
  %v3565 = vsub.f32 %v3555, %v3563
  %v3566 = vsub.f32 %v3556, %v3564
  %v3567 = vmul.f32 %v3565, %v3565
  %v3568 = vmul.f32 %v3566, %v3566
  %v3569 = vsel %vm41, %v3567, 0.0
  %3570 = vadd.xlane.f32.xlu0 %v3569
  %v3571 = vpop.xlane.xlu0 %3570
  %v3572 = vsel %vm41, %v3568, 0.0
  %3573 = vadd.xlane.f32.xlu0 %v3572
  %v3574 = vpop.xlane.xlu0 %3573
  %v3575 = vmul.f32 %v3571, %v48
  %v3576 = vmul.f32 %v3574, %v48
  %v3577 = vadd.f32 %v3575, 1e-12
  %v3578 = vadd.f32 %v3576, 1e-12
  %v3579 = vrsqrt.pop %v3577
  %v3580 = vrsqrt.pop %v3578
  %v3581 = vmul.f32 %v3565, %v3579
  %v3582 = vmul.f32 %v3566, %v3580
  %v3583 = vlaneseq
  %v3584 = vshrl.u32 %v3583, 7
  %v3585 = vsub.s32 6, %v3584
  %v3586 = vrot.slane %v2964, %v3585
  %v3587 = vmul.f32 %v3581, %v3586
  %v3588 = vmul.f32 %v3582, %v3586
  %v3589 = vlaneseq
  %v3590 = vshrl.u32 %v3589, 7
  %v3591 = vsub.s32 7, %v3590
  %v3592 = vrot.slane %v2964, %v3591
  %v3593 = vadd.f32 %v3587, %v3592
  %v3594 = vadd.f32 %v3588, %v3592
  %s3595 = scalar_lea.vmem %s6, 40
  %v3596 = vld [vmem:[%s3595] sm:$0xff]
  %v3597 = vpack.c.bf16 %v3594, %v3593
  %s3598 = scalar_lea.vmem %s2, 80
  %v3599 = vld [vmem:[%s3598] sm:$0xf]
  %v3600 = vld [vmem:[%s3598 + $0x4] sm:$0xf]
  %v3601 = vld [vmem:[%s3598 + $0x8] sm:$0xf]
  %v3602 = vld [vmem:[%s3598 + $0xc] sm:$0xf]
  %v3603 = vlaneseq
  %v3604 = vshrl.u32 %v3603, 7
  %v3605 = vsub.s32 0, %v3604
  %v3606 = vrot.slane %v3596, %v3605
  %v3611 = vunpack.c.l.b16 %v3599
  %v3612 = vunpack.c.l.b16 %v3600
  %v3613 = vunpack.c.l.b16 %v3601
  %v3614 = vunpack.c.l.b16 %v3602
  %v3615 = vpack.c.b16 %v3612, %v3611
  %v3616 = vpack.c.b16 %v3614, %v3613
  %v3620 = vsel %vm41, %v3597, 0
  %3622 = vmatprep.subr.bf16.mxu0 0
  %3623 = vmatpush1.bf16.msra.mxu0 0
  %3624 = vmatprep.subr.bf16.mxu0 0
  %3625 = vmatpush1.bf16.msra.mxu0 0
  %3626 = vmatprep.subr.bf16.mxu0 0
  %3627 = vmatpush1.bf16.msra.mxu0 0
  %3628 = vmatprep.subr.bf16.mxu0 0
  %3629 = vmatpush1.bf16.msra.mxu0 0
  %3630 = vmatprep.subr.bf16.mxu0 0
  %3631 = vmatpush1.bf16.msra.mxu0 0
  %3632 = vmatprep.subr.bf16.mxu0 0
  %3633 = vmatpush1.bf16.msra.mxu0 0
  %3634 = vmatprep.subr.bf16.mxu0 0
  %3635 = vmatpush1.bf16.msra.mxu0 %v3616
  %3636 = vmatprep.subr.bf16.mxu0 0
  %3637 = vmatpush1.bf16.msra.mxu0 %v3615
  %3638 = vmatprep.subr.bf16.mxu0 0
  %3639 = vmatpush2.bf16.msra.mxu0 0
  %3640 = vmatprep.subr.bf16.mxu0 0
  %3641 = vmatpush2.bf16.msra.mxu0 0
  %3642 = vmatprep.subr.bf16.mxu0 0
  %3643 = vmatpush2.bf16.msra.mxu0 0
  %3644 = vmatprep.subr.bf16.mxu0 0
  %3645 = vmatpush2.bf16.msra.mxu0 0
  %3646 = vmatprep.subr.bf16.mxu0 0
  %3647 = vmatpush2.bf16.msra.mxu0 0
  %3648 = vmatprep.subr.bf16.mxu0 0
  %3649 = vmatpush2.bf16.msra.mxu0 0
  %3650 = vmatprep.subr.bf16.mxu0 0
  %3651 = vmatpush2.bf16.msra.mxu0 0
  %3652 = vmatprep.subr.bf16.mxu0 0
  %3653 = vmatpush2.bf16.msra.mxu0 0
  %3654 = vmatprep.mubr.bf16.mxu0 0
  %3655 = vmatmul.mubr.bf16.gmra.mxu0 %v3620
  %v3656 = vpop.f32.mrf.mxu0
  %v3657 = vadd.f32 %v3606, %v3656
  %v3658 = vpop.f32.mrf.mxu0
  %v3659 = vpop.f32.mrf.mxu0
  %v3660 = vadd.f32 %v3606, %v3659
  %v3661 = vpop.f32.mrf.mxu0
  %3662 = vdwg.mxu0
  %v3663 = vpack.c.bf16 %v3660, %v3657
  %3665 = vrot.lane.b32.xlu0 %v3663, 96
  %v3666 = vpop.permute.xlu0 %3665
  %v3668 = vsel %vm151, %v3663, 0
  %v3671 = vsel %vm151, %v3666, 0
  %3673 = vmatprep.subr.bf16.mxu0 0
  %3674 = vmatpush1.bf16.xpose.msra.mxu0 0
  %3675 = vmatprep.subr.bf16.mxu0 0
  %3676 = vmatpush1.bf16.xpose.msra.mxu0 0
  %3677 = vmatprep.subr.bf16.mxu0 0
  %3678 = vmatpush1.bf16.xpose.msra.mxu0 0
  %3679 = vmatprep.subr.bf16.mxu0 0
  %3680 = vmatpush1.bf16.xpose.msra.mxu0 0
  %3681 = vmatprep.subr.bf16.mxu0 0
  %3682 = vmatpush1.bf16.xpose.msra.mxu0 0
  %3683 = vmatprep.subr.bf16.mxu0 0
  %3684 = vmatpush1.bf16.xpose.msra.mxu0 0
  %3685 = vmatprep.subr.bf16.mxu0 0
  %3686 = vmatpush1.bf16.xpose.msra.mxu0 0
  %3687 = vmatprep.subr.bf16.mxu0 0
  %3688 = vmatpush1.bf16.xpose.msra.mxu0 %v3671
  %3689 = vmatprep.subr.bf16.mxu0 0
  %3690 = vmatpush2.bf16.xpose.msra.mxu0 0
  %3691 = vmatprep.subr.bf16.mxu0 0
  %3692 = vmatpush2.bf16.xpose.msra.mxu0 0
  %3693 = vmatprep.subr.bf16.mxu0 0
  %3694 = vmatpush2.bf16.xpose.msra.mxu0 0
  %3695 = vmatprep.subr.bf16.mxu0 0
  %3696 = vmatpush2.bf16.xpose.msra.mxu0 0
  %3697 = vmatprep.subr.bf16.mxu0 0
  %3698 = vmatpush2.bf16.xpose.msra.mxu0 0
  %3699 = vmatprep.subr.bf16.mxu0 0
  %3700 = vmatpush2.bf16.xpose.msra.mxu0 0
  %3701 = vmatprep.subr.bf16.mxu0 0
  %3702 = vmatpush2.bf16.xpose.msra.mxu0 0
  %3703 = vmatprep.subr.bf16.mxu0 0
  %3704 = vmatpush2.bf16.xpose.msra.mxu0 0
  %3705 = vmatprep.mubr.bf16.mxu0 0
  %3706 = vmatmul.mubr.bf16.gmra.mxu0 %v3668
  %v3707 = vpop.f32.mrf.mxu0
  %v3708 = vadd.f32 %v36, %v3707
  %v3709 = vpop.f32.mrf.mxu0
  %v3710 = vpop.f32.mrf.mxu0
  %v3711 = vadd.f32 %v37, %v3710
  %v3712 = vpop.f32.mrf.mxu0
  %3713 = vdwg.mxu0
  %v3714 = vsel %vm151, %v3708, -inf
  %3715 = vmax.xlane.f32.xlu0 %v3714
  %v3716 = vpop.xlane.xlu0 %3715
  %v3717 = vsel %vm151, %v3711, -inf
  %3718 = vmax.xlane.f32.xlu0 %v3717
  %v3719 = vpop.xlane.xlu0 %3718
  %v3720 = vsub.f32 %v3708, %v3716
  %v3721 = vsub.f32 %v3711, %v3719
  %v3722 = vmul.f32 %v3720, 1.442695
  %v3723 = vpow.pop %v3722
  %v3724 = vmul.f32 %v3721, 1.442695
  %v3725 = vpow.pop %v3724
  %v3726 = vsel %vm151, %v3723, 0.0
  %3727 = vadd.xlane.f32.xlu0 %v3726
  %v3728 = vpop.xlane.xlu0 %3727
  %v3729 = vsel %vm151, %v3725, 0.0
  %3730 = vadd.xlane.f32.xlu0 %v3729
  %v3731 = vpop.xlane.xlu0 %3730
  %v3732 = vrcp.pop %v3728
  %v3733 = vmul.f32 %v3723, %v3732
  %v3734 = vrcp.pop %v3731
  %v3735 = vmul.f32 %v3725, %v3734
  %v3736 = vpack.c.bf16 %v3735, %v3733
  %3737 = vrot.lane.b32.xlu0 %v3663, 64
  %v3738 = vpop.permute.xlu0 %3737
  %v3741 = vsel %vm151, %v3736, 0
  %3743 = vmatprep.subr.bf16.mxu0 0
  %3744 = vmatpush1.bf16.msra.mxu0 0
  %3745 = vmatprep.subr.bf16.mxu0 0
  %3746 = vmatpush1.bf16.msra.mxu0 0
  %3747 = vmatprep.subr.bf16.mxu0 0
  %3748 = vmatpush1.bf16.msra.mxu0 0
  %3749 = vmatprep.subr.bf16.mxu0 0
  %3750 = vmatpush1.bf16.msra.mxu0 0
  %3751 = vmatprep.subr.bf16.mxu0 0
  %3752 = vmatpush1.bf16.msra.mxu0 0
  %3753 = vmatprep.subr.bf16.mxu0 0
  %3754 = vmatpush1.bf16.msra.mxu0 0
  %3755 = vmatprep.subr.bf16.mxu0 0
  %3756 = vmatpush1.bf16.msra.mxu0 0
  %3757 = vmatprep.subr.bf16.mxu0 0
  %3758 = vmatpush1.bf16.msra.mxu0 %v3738
  %3759 = vmatprep.subr.bf16.mxu0 0
  %3760 = vmatpush2.bf16.msra.mxu0 0
  %3761 = vmatprep.subr.bf16.mxu0 0
  %3762 = vmatpush2.bf16.msra.mxu0 0
  %3763 = vmatprep.subr.bf16.mxu0 0
  %3764 = vmatpush2.bf16.msra.mxu0 0
  %3765 = vmatprep.subr.bf16.mxu0 0
  %3766 = vmatpush2.bf16.msra.mxu0 0
  %3767 = vmatprep.subr.bf16.mxu0 0
  %3768 = vmatpush2.bf16.msra.mxu0 0
  %3769 = vmatprep.subr.bf16.mxu0 0
  %3770 = vmatpush2.bf16.msra.mxu0 0
  %3771 = vmatprep.subr.bf16.mxu0 0
  %3772 = vmatpush2.bf16.msra.mxu0 0
  %3773 = vmatprep.subr.bf16.mxu0 0
  %3774 = vmatpush2.bf16.msra.mxu0 0
  %3775 = vmatprep.mubr.bf16.mxu0 0
  %3776 = vmatmul.mubr.bf16.gmra.mxu0 %v3741
  %v3777 = vpop.f32.mrf.mxu0
  %v3778 = vadd.f32 0.0, %v3777
  %v3779 = vpop.f32.mrf.mxu0
  %v3780 = vpop.f32.mrf.mxu0
  %v3781 = vadd.f32 0.0, %v3780
  %v3782 = vpop.f32.mrf.mxu0
  %3783 = vdwg.mxu0
  %3784 = vrot.lane.b32.xlu0 %v3663, 112
  %v3785 = vpop.permute.xlu0 %3784
  %3786 = vrot.lane.b32.xlu0 %v3663, 80
  %v3787 = vpop.permute.xlu0 %3786
  %v3789 = vsel %vm151, %v3785, 0
  %v3792 = vsel %vm151, %v3787, 0
  %3794 = vmatprep.subr.bf16.mxu0 0
  %3795 = vmatpush1.bf16.xpose.msra.mxu0 0
  %3796 = vmatprep.subr.bf16.mxu0 0
  %3797 = vmatpush1.bf16.xpose.msra.mxu0 0
  %3798 = vmatprep.subr.bf16.mxu0 0
  %3799 = vmatpush1.bf16.xpose.msra.mxu0 0
  %3800 = vmatprep.subr.bf16.mxu0 0
  %3801 = vmatpush1.bf16.xpose.msra.mxu0 0
  %3802 = vmatprep.subr.bf16.mxu0 0
  %3803 = vmatpush1.bf16.xpose.msra.mxu0 0
  %3804 = vmatprep.subr.bf16.mxu0 0
  %3805 = vmatpush1.bf16.xpose.msra.mxu0 0
  %3806 = vmatprep.subr.bf16.mxu0 0
  %3807 = vmatpush1.bf16.xpose.msra.mxu0 0
  %3808 = vmatprep.subr.bf16.mxu0 0
  %3809 = vmatpush1.bf16.xpose.msra.mxu0 %v3792
  %3810 = vmatprep.subr.bf16.mxu0 0
  %3811 = vmatpush2.bf16.xpose.msra.mxu0 0
  %3812 = vmatprep.subr.bf16.mxu0 0
  %3813 = vmatpush2.bf16.xpose.msra.mxu0 0
  %3814 = vmatprep.subr.bf16.mxu0 0
  %3815 = vmatpush2.bf16.xpose.msra.mxu0 0
  %3816 = vmatprep.subr.bf16.mxu0 0
  %3817 = vmatpush2.bf16.xpose.msra.mxu0 0
  %3818 = vmatprep.subr.bf16.mxu0 0
  %3819 = vmatpush2.bf16.xpose.msra.mxu0 0
  %3820 = vmatprep.subr.bf16.mxu0 0
  %3821 = vmatpush2.bf16.xpose.msra.mxu0 0
  %3822 = vmatprep.subr.bf16.mxu0 0
  %3823 = vmatpush2.bf16.xpose.msra.mxu0 0
  %3824 = vmatprep.subr.bf16.mxu0 0
  %3825 = vmatpush2.bf16.xpose.msra.mxu0 0
  %3826 = vmatprep.mubr.bf16.mxu0 0
  %3827 = vmatmul.mubr.bf16.gmra.mxu0 %v3789
  %v3828 = vpop.f32.mrf.mxu0
  %v3829 = vadd.f32 %v36, %v3828
  %v3830 = vpop.f32.mrf.mxu0
  %v3831 = vpop.f32.mrf.mxu0
  %v3832 = vadd.f32 %v37, %v3831
  %v3833 = vpop.f32.mrf.mxu0
  %3834 = vdwg.mxu0
  %v3835 = vsel %vm151, %v3829, -inf
  %3836 = vmax.xlane.f32.xlu0 %v3835
  %v3837 = vpop.xlane.xlu0 %3836
  %v3838 = vsel %vm151, %v3832, -inf
  %3839 = vmax.xlane.f32.xlu0 %v3838
  %v3840 = vpop.xlane.xlu0 %3839
  %v3841 = vsub.f32 %v3829, %v3837
  %v3842 = vsub.f32 %v3832, %v3840
  %v3843 = vmul.f32 %v3841, 1.442695
  %v3844 = vpow.pop %v3843
  %v3845 = vmul.f32 %v3842, 1.442695
  %v3846 = vpow.pop %v3845
  %v3847 = vsel %vm151, %v3844, 0.0
  %3848 = vadd.xlane.f32.xlu0 %v3847
  %v3849 = vpop.xlane.xlu0 %3848
  %v3850 = vsel %vm151, %v3846, 0.0
  %3851 = vadd.xlane.f32.xlu0 %v3850
  %v3852 = vpop.xlane.xlu0 %3851
  %v3853 = vrcp.pop %v3849
  %v3854 = vmul.f32 %v3844, %v3853
  %v3855 = vrcp.pop %v3852
  %v3856 = vmul.f32 %v3846, %v3855
  %v3857 = vpack.c.bf16 %v3856, %v3854
  %3858 = vrot.lane.b32.xlu0 %v3663, 48
  %v3859 = vpop.permute.xlu0 %3858
  %v3862 = vsel %vm151, %v3857, 0
  %3864 = vmatprep.subr.bf16.mxu0 0
  %3865 = vmatpush1.bf16.msra.mxu0 0
  %3866 = vmatprep.subr.bf16.mxu0 0
  %3867 = vmatpush1.bf16.msra.mxu0 0
  %3868 = vmatprep.subr.bf16.mxu0 0
  %3869 = vmatpush1.bf16.msra.mxu0 0
  %3870 = vmatprep.subr.bf16.mxu0 0
  %3871 = vmatpush1.bf16.msra.mxu0 0
  %3872 = vmatprep.subr.bf16.mxu0 0
  %3873 = vmatpush1.bf16.msra.mxu0 0
  %3874 = vmatprep.subr.bf16.mxu0 0
  %3875 = vmatpush1.bf16.msra.mxu0 0
  %3876 = vmatprep.subr.bf16.mxu0 0
  %3877 = vmatpush1.bf16.msra.mxu0 0
  %3878 = vmatprep.subr.bf16.mxu0 0
  %3879 = vmatpush1.bf16.msra.mxu0 %v3859
  %3880 = vmatprep.subr.bf16.mxu0 0
  %3881 = vmatpush2.bf16.msra.mxu0 0
  %3882 = vmatprep.subr.bf16.mxu0 0
  %3883 = vmatpush2.bf16.msra.mxu0 0
  %3884 = vmatprep.subr.bf16.mxu0 0
  %3885 = vmatpush2.bf16.msra.mxu0 0
  %3886 = vmatprep.subr.bf16.mxu0 0
  %3887 = vmatpush2.bf16.msra.mxu0 0
  %3888 = vmatprep.subr.bf16.mxu0 0
  %3889 = vmatpush2.bf16.msra.mxu0 0
  %3890 = vmatprep.subr.bf16.mxu0 0
  %3891 = vmatpush2.bf16.msra.mxu0 0
  %3892 = vmatprep.subr.bf16.mxu0 0
  %3893 = vmatpush2.bf16.msra.mxu0 0
  %3894 = vmatprep.subr.bf16.mxu0 0
  %3895 = vmatpush2.bf16.msra.mxu0 0
  %3896 = vmatprep.mubr.bf16.mxu0 0
  %3897 = vmatmul.mubr.bf16.gmra.mxu0 %v3862
  %v3898 = vpop.f32.mrf.mxu0
  %v3899 = vadd.f32 0.0, %v3898
  %v3900 = vpop.f32.mrf.mxu0
  %v3901 = vpop.f32.mrf.mxu0
  %v3902 = vadd.f32 0.0, %v3901
  %v3903 = vpop.f32.mrf.mxu0
  %3904 = vdwg.mxu0
  %3907 = vrot.lane.b32.xlu0 %v3899, 16
  %v3908 = vpop.permute.xlu0 %3907
  %3909 = vrot.lane.b32.xlu0 %v3902, 16
  %v3910 = vpop.permute.xlu0 %3909
  %v3913 = vsel %vm151, %v3778, %v3908
  %v3914 = vsel %vm151, %v3781, %v3910
  %v3915 = vpack.c.bf16 %v3914, %v3913
  %s3916 = scalar_lea.vmem %s3, 80
  %v3917 = vld [vmem:[%s3916] sm:$0xf]
  %v3918 = vld [vmem:[%s3916 + $0x4] sm:$0xf]
  %v3919 = vld [vmem:[%s3916 + $0x8] sm:$0xf]
  %v3920 = vld [vmem:[%s3916 + $0xc] sm:$0xf]
  %v3921 = vlaneseq
  %v3922 = vshrl.u32 %v3921, 7
  %v3923 = vsub.s32 1, %v3922
  %v3924 = vrot.slane %v3596, %v3923
  %v3929 = vunpack.c.l.b16 %v3917
  %v3930 = vunpack.c.l.b16 %v3918
  %v3931 = vunpack.c.l.b16 %v3919
  %v3932 = vunpack.c.l.b16 %v3920
  %v3933 = vpack.c.b16 %v3930, %v3929
  %v3934 = vpack.c.b16 %v3932, %v3931
  %v3938 = vsel %vm41, %v3915, 0
  %3940 = vmatprep.subr.bf16.mxu0 0
  %3941 = vmatpush1.bf16.msra.mxu0 0
  %3942 = vmatprep.subr.bf16.mxu0 0
  %3943 = vmatpush1.bf16.msra.mxu0 0
  %3944 = vmatprep.subr.bf16.mxu0 0
  %3945 = vmatpush1.bf16.msra.mxu0 0
  %3946 = vmatprep.subr.bf16.mxu0 0
  %3947 = vmatpush1.bf16.msra.mxu0 0
  %3948 = vmatprep.subr.bf16.mxu0 0
  %3949 = vmatpush1.bf16.msra.mxu0 0
  %3950 = vmatprep.subr.bf16.mxu0 0
  %3951 = vmatpush1.bf16.msra.mxu0 0
  %3952 = vmatprep.subr.bf16.mxu0 0
  %3953 = vmatpush1.bf16.msra.mxu0 %v3934
  %3954 = vmatprep.subr.bf16.mxu0 0
  %3955 = vmatpush1.bf16.msra.mxu0 %v3933
  %3956 = vmatprep.subr.bf16.mxu0 0
  %3957 = vmatpush2.bf16.msra.mxu0 0
  %3958 = vmatprep.subr.bf16.mxu0 0
  %3959 = vmatpush2.bf16.msra.mxu0 0
  %3960 = vmatprep.subr.bf16.mxu0 0
  %3961 = vmatpush2.bf16.msra.mxu0 0
  %3962 = vmatprep.subr.bf16.mxu0 0
  %3963 = vmatpush2.bf16.msra.mxu0 0
  %3964 = vmatprep.subr.bf16.mxu0 0
  %3965 = vmatpush2.bf16.msra.mxu0 0
  %3966 = vmatprep.subr.bf16.mxu0 0
  %3967 = vmatpush2.bf16.msra.mxu0 0
  %3968 = vmatprep.subr.bf16.mxu0 0
  %3969 = vmatpush2.bf16.msra.mxu0 0
  %3970 = vmatprep.subr.bf16.mxu0 0
  %3971 = vmatpush2.bf16.msra.mxu0 0
  %3972 = vmatprep.mubr.bf16.mxu0 0
  %3973 = vmatmul.mubr.bf16.gmra.mxu0 %v3938
  %v3974 = vpop.f32.mrf.mxu0
  %v3975 = vadd.f32 %v3924, %v3974
  %v3976 = vpop.f32.mrf.mxu0
  %v3977 = vpop.f32.mrf.mxu0
  %v3978 = vadd.f32 %v3924, %v3977
  %v3979 = vpop.f32.mrf.mxu0
  %3980 = vdwg.mxu0
  %v3981 = vadd.f32 %v3975, %v3593
  %v3982 = vadd.f32 %v3978, %v3594
  %v3983 = vsel %vm41, %v3981, 0.0
  %3984 = vadd.xlane.f32.xlu0 %v3983
  %v3985 = vpop.xlane.xlu0 %3984
  %v3986 = vsel %vm41, %v3982, 0.0
  %3987 = vadd.xlane.f32.xlu0 %v3986
  %v3988 = vpop.xlane.xlu0 %3987
  %v3989 = vmul.f32 %v3985, %v48
  %v3990 = vmul.f32 %v3988, %v48
  %v3991 = vsub.f32 %v3981, %v3989
  %v3992 = vsub.f32 %v3982, %v3990
  %v3993 = vmul.f32 %v3991, %v3991
  %v3994 = vmul.f32 %v3992, %v3992
  %v3995 = vsel %vm41, %v3993, 0.0
  %3996 = vadd.xlane.f32.xlu0 %v3995
  %v3997 = vpop.xlane.xlu0 %3996
  %v3998 = vsel %vm41, %v3994, 0.0
  %3999 = vadd.xlane.f32.xlu0 %v3998
  %v4000 = vpop.xlane.xlu0 %3999
  %v4001 = vmul.f32 %v3997, %v48
  %v4002 = vmul.f32 %v4000, %v48
  %v4003 = vadd.f32 %v4001, 1e-12
  %v4004 = vadd.f32 %v4002, 1e-12
  %v4005 = vrsqrt.pop %v4003
  %v4006 = vrsqrt.pop %v4004
  %v4007 = vmul.f32 %v3991, %v4005
  %v4008 = vmul.f32 %v3992, %v4006
  %v4009 = vlaneseq
  %v4010 = vshrl.u32 %v4009, 7
  %v4011 = vsub.s32 2, %v4010
  %v4012 = vrot.slane %v3596, %v4011
  %v4013 = vmul.f32 %v4007, %v4012
  %v4014 = vmul.f32 %v4008, %v4012
  %v4015 = vlaneseq
  %v4016 = vshrl.u32 %v4015, 7
  %v4017 = vsub.s32 3, %v4016
  %v4018 = vrot.slane %v3596, %v4017
  %v4019 = vadd.f32 %v4013, %v4018
  %v4020 = vadd.f32 %v4014, %v4018
  %v4021 = vpack.c.bf16 %v4020, %v4019
  %s4022 = scalar_lea.vmem %s4, 80
  %v4023 = vld [vmem:[%s4022] sm:$0xf]
  %v4024 = vld [vmem:[%s4022 + $0x4] sm:$0xf]
  %v4025 = vld [vmem:[%s4022 + $0x8] sm:$0xf]
  %v4026 = vld [vmem:[%s4022 + $0xc] sm:$0xf]
  %v4027 = vlaneseq
  %v4028 = vshrl.u32 %v4027, 7
  %v4029 = vsub.s32 4, %v4028
  %v4030 = vrot.slane %v3596, %v4029
  %v4035 = vunpack.c.l.b16 %v4023
  %v4036 = vunpack.c.l.b16 %v4024
  %v4037 = vunpack.c.l.b16 %v4025
  %v4038 = vunpack.c.l.b16 %v4026
  %v4039 = vpack.c.b16 %v4036, %v4035
  %v4040 = vpack.c.b16 %v4038, %v4037
  %v4044 = vsel %vm41, %v4021, 0
  %4046 = vmatprep.subr.bf16.mxu0 0
  %4047 = vmatpush1.bf16.msra.mxu0 0
  %4048 = vmatprep.subr.bf16.mxu0 0
  %4049 = vmatpush1.bf16.msra.mxu0 0
  %4050 = vmatprep.subr.bf16.mxu0 0
  %4051 = vmatpush1.bf16.msra.mxu0 0
  %4052 = vmatprep.subr.bf16.mxu0 0
  %4053 = vmatpush1.bf16.msra.mxu0 0
  %4054 = vmatprep.subr.bf16.mxu0 0
  %4055 = vmatpush1.bf16.msra.mxu0 0
  %4056 = vmatprep.subr.bf16.mxu0 0
  %4057 = vmatpush1.bf16.msra.mxu0 0
  %4058 = vmatprep.subr.bf16.mxu0 0
  %4059 = vmatpush1.bf16.msra.mxu0 %v4040
  %4060 = vmatprep.subr.bf16.mxu0 0
  %4061 = vmatpush1.bf16.msra.mxu0 %v4039
  %4062 = vmatprep.subr.bf16.mxu0 0
  %4063 = vmatpush2.bf16.msra.mxu0 0
  %4064 = vmatprep.subr.bf16.mxu0 0
  %4065 = vmatpush2.bf16.msra.mxu0 0
  %4066 = vmatprep.subr.bf16.mxu0 0
  %4067 = vmatpush2.bf16.msra.mxu0 0
  %4068 = vmatprep.subr.bf16.mxu0 0
  %4069 = vmatpush2.bf16.msra.mxu0 0
  %4070 = vmatprep.subr.bf16.mxu0 0
  %4071 = vmatpush2.bf16.msra.mxu0 0
  %4072 = vmatprep.subr.bf16.mxu0 0
  %4073 = vmatpush2.bf16.msra.mxu0 0
  %4074 = vmatprep.subr.bf16.mxu0 0
  %4075 = vmatpush2.bf16.msra.mxu0 0
  %4076 = vmatprep.subr.bf16.mxu0 0
  %4077 = vmatpush2.bf16.msra.mxu0 0
  %4078 = vmatprep.mubr.bf16.mxu0 0
  %4079 = vmatmul.mubr.bf16.gmra.mxu0 %v4044
  %v4080 = vpop.f32.mrf.mxu0
  %v4081 = vadd.f32 %v4030, %v4080
  %v4082 = vpop.f32.mrf.mxu0
  %v4083 = vpop.f32.mrf.mxu0
  %v4084 = vadd.f32 %v4030, %v4083
  %v4085 = vpop.f32.mrf.mxu0
  %4086 = vdwg.mxu0
  %v4087 = vmul.f32 %v4081, 0.5
  %v4088 = vmul.f32 %v4084, 0.5
  %v4089 = vmul.f32 %v4081, 0.044715
  %v4090 = vmul.f32 %v4084, 0.044715
  %v4091 = vmul.f32 %v4089, %v4081
  %v4092 = vmul.f32 %v4090, %v4084
  %v4093 = vmul.f32 %v4091, %v4081
  %v4094 = vmul.f32 %v4092, %v4084
  %v4095 = vadd.f32 %v4081, %v4093
  %v4096 = vadd.f32 %v4084, %v4094
  %v4097 = vmul.f32 %v4095, 0.7978846
  %v4098 = vmul.f32 %v4096, 0.7978846
  %v4099 = vtanh.pop %v4097
  %v4100 = vtanh.pop %v4098
  %v4101 = vadd.f32 %v4099, 1.0
  %v4102 = vadd.f32 %v4100, 1.0
  %v4103 = vmul.f32 %v4087, %v4101
  %v4104 = vmul.f32 %v4088, %v4102
  %v4105 = vpack.c.bf16 %v4104, %v4103
  %s4106 = scalar_lea.vmem %s5, 160
  %v4107 = vld [vmem:[%s4106] sm:$0xf]
  %v4108 = vld [vmem:[%s4106 + $0x4] sm:$0xf]
  %v4109 = vld [vmem:[%s4106 + $0x8] sm:$0xf]
  %v4110 = vld [vmem:[%s4106 + $0xc] sm:$0xf]
  %v4111 = vld [vmem:[%s4106 + $0x10] sm:$0xf]
  %v4112 = vld [vmem:[%s4106 + $0x14] sm:$0xf]
  %v4113 = vld [vmem:[%s4106 + $0x18] sm:$0xf]
  %v4114 = vld [vmem:[%s4106 + $0x1c] sm:$0xf]
  %v4115 = vlaneseq
  %v4116 = vshrl.u32 %v4115, 7
  %v4117 = vsub.s32 5, %v4116
  %v4118 = vrot.slane %v3596, %v4117
  %v4127 = vunpack.c.l.b16 %v4107
  %v4128 = vunpack.c.l.b16 %v4108
  %v4129 = vunpack.c.l.b16 %v4109
  %v4130 = vunpack.c.l.b16 %v4110
  %v4131 = vunpack.c.l.b16 %v4111
  %v4132 = vunpack.c.l.b16 %v4112
  %v4133 = vunpack.c.l.b16 %v4113
  %v4134 = vunpack.c.l.b16 %v4114
  %v4135 = vpack.c.b16 %v4128, %v4127
  %v4136 = vpack.c.b16 %v4130, %v4129
  %v4137 = vpack.c.b16 %v4132, %v4131
  %v4138 = vpack.c.b16 %v4134, %v4133
  %v4144 = vsel %vm625, %v4105, 0
  %4146 = vmatprep.subr.bf16.mxu0 0
  %4147 = vmatpush1.bf16.msra.mxu0 0
  %4148 = vmatprep.subr.bf16.mxu0 0
  %4149 = vmatpush1.bf16.msra.mxu0 0
  %4150 = vmatprep.subr.bf16.mxu0 0
  %4151 = vmatpush1.bf16.msra.mxu0 0
  %4152 = vmatprep.subr.bf16.mxu0 0
  %4153 = vmatpush1.bf16.msra.mxu0 0
  %4154 = vmatprep.subr.bf16.mxu0 0
  %4155 = vmatpush1.bf16.msra.mxu0 %v4138
  %4156 = vmatprep.subr.bf16.mxu0 0
  %4157 = vmatpush1.bf16.msra.mxu0 %v4137
  %4158 = vmatprep.subr.bf16.mxu0 0
  %4159 = vmatpush1.bf16.msra.mxu0 %v4136
  %4160 = vmatprep.subr.bf16.mxu0 0
  %4161 = vmatpush1.bf16.msra.mxu0 %v4135
  %4162 = vmatprep.subr.bf16.mxu0 0
  %4163 = vmatpush2.bf16.msra.mxu0 0
  %4164 = vmatprep.subr.bf16.mxu0 0
  %4165 = vmatpush2.bf16.msra.mxu0 0
  %4166 = vmatprep.subr.bf16.mxu0 0
  %4167 = vmatpush2.bf16.msra.mxu0 0
  %4168 = vmatprep.subr.bf16.mxu0 0
  %4169 = vmatpush2.bf16.msra.mxu0 0
  %4170 = vmatprep.subr.bf16.mxu0 0
  %4171 = vmatpush2.bf16.msra.mxu0 0
  %4172 = vmatprep.subr.bf16.mxu0 0
  %4173 = vmatpush2.bf16.msra.mxu0 0
  %4174 = vmatprep.subr.bf16.mxu0 0
  %4175 = vmatpush2.bf16.msra.mxu0 0
  %4176 = vmatprep.subr.bf16.mxu0 0
  %4177 = vmatpush2.bf16.msra.mxu0 0
  %4178 = vmatprep.mubr.bf16.mxu0 0
  %4179 = vmatmul.mubr.bf16.gmra.mxu0 %v4144
  %v4180 = vpop.f32.mrf.mxu0
  %v4181 = vadd.f32 %v4118, %v4180
  %v4182 = vpop.f32.mrf.mxu0
  %v4183 = vpop.f32.mrf.mxu0
  %v4184 = vadd.f32 %v4118, %v4183
  %v4185 = vpop.f32.mrf.mxu0
  %4186 = vdwg.mxu0
  %v4187 = vadd.f32 %v4181, %v4019
  %v4188 = vadd.f32 %v4184, %v4020
  %v4189 = vsel %vm41, %v4187, 0.0
  %4190 = vadd.xlane.f32.xlu0 %v4189
  %v4191 = vpop.xlane.xlu0 %4190
  %v4192 = vsel %vm41, %v4188, 0.0
  %4193 = vadd.xlane.f32.xlu0 %v4192
  %v4194 = vpop.xlane.xlu0 %4193
  %v4195 = vmul.f32 %v4191, %v48
  %v4196 = vmul.f32 %v4194, %v48
  %v4197 = vsub.f32 %v4187, %v4195
  %v4198 = vsub.f32 %v4188, %v4196
  %v4199 = vmul.f32 %v4197, %v4197
  %v4200 = vmul.f32 %v4198, %v4198
  %v4201 = vsel %vm41, %v4199, 0.0
  %4202 = vadd.xlane.f32.xlu0 %v4201
  %v4203 = vpop.xlane.xlu0 %4202
  %v4204 = vsel %vm41, %v4200, 0.0
  %4205 = vadd.xlane.f32.xlu0 %v4204
  %v4206 = vpop.xlane.xlu0 %4205
  %v4207 = vmul.f32 %v4203, %v48
  %v4208 = vmul.f32 %v4206, %v48
  %v4209 = vadd.f32 %v4207, 1e-12
  %v4210 = vadd.f32 %v4208, 1e-12
  %v4211 = vrsqrt.pop %v4209
  %v4212 = vrsqrt.pop %v4210
  %v4213 = vmul.f32 %v4197, %v4211
  %v4214 = vmul.f32 %v4198, %v4212
  %v4215 = vlaneseq
  %v4216 = vshrl.u32 %v4215, 7
  %v4217 = vsub.s32 6, %v4216
  %v4218 = vrot.slane %v3596, %v4217
  %v4219 = vmul.f32 %v4213, %v4218
  %v4220 = vmul.f32 %v4214, %v4218
  %v4221 = vlaneseq
  %v4222 = vshrl.u32 %v4221, 7
  %v4223 = vsub.s32 7, %v4222
  %v4224 = vrot.slane %v3596, %v4223
  %v4225 = vadd.f32 %v4219, %v4224
  %v4226 = vadd.f32 %v4220, %v4224
  %v4227 = vpack.c.bf16 %v4226, %v4225
  %s4228 = scalar_lea.vmem %s7, 32
  %v4229 = vld [vmem:[%s4228] sm:$0xf]
  %v4230 = vld [vmem:[%s4228 + $0x4] sm:$0xf]
  %v4231 = vld [vmem:[%s4228 + $0x8] sm:$0xf]
  %v4232 = vld [vmem:[%s4228 + $0xc] sm:$0xf]
  %v4233 = vlaneseq
  %v4234 = vshrl.u32 %v4233, 7
  %v4235 = vsub.s32 2, %v4234
  %v4236 = vrot.slane %v2921, %v4235
  %v4241 = vunpack.c.l.b16 %v4229
  %v4242 = vunpack.c.l.b16 %v4230
  %v4243 = vunpack.c.l.b16 %v4231
  %v4244 = vunpack.c.l.b16 %v4232
  %v4245 = vpack.c.b16 %v4242, %v4241
  %v4246 = vpack.c.b16 %v4244, %v4243
  %v4250 = vsel %vm41, %v4227, 0
  %4252 = vmatprep.subr.bf16.mxu0 0
  %4253 = vmatpush1.bf16.msra.mxu0 0
  %4254 = vmatprep.subr.bf16.mxu0 0
  %4255 = vmatpush1.bf16.msra.mxu0 0
  %4256 = vmatprep.subr.bf16.mxu0 0
  %4257 = vmatpush1.bf16.msra.mxu0 0
  %4258 = vmatprep.subr.bf16.mxu0 0
  %4259 = vmatpush1.bf16.msra.mxu0 0
  %4260 = vmatprep.subr.bf16.mxu0 0
  %4261 = vmatpush1.bf16.msra.mxu0 0
  %4262 = vmatprep.subr.bf16.mxu0 0
  %4263 = vmatpush1.bf16.msra.mxu0 0
  %4264 = vmatprep.subr.bf16.mxu0 0
  %4265 = vmatpush1.bf16.msra.mxu0 %v4246
  %4266 = vmatprep.subr.bf16.mxu0 0
  %4267 = vmatpush1.bf16.msra.mxu0 %v4245
  %4268 = vmatprep.subr.bf16.mxu0 0
  %4269 = vmatpush2.bf16.msra.mxu0 0
  %4270 = vmatprep.subr.bf16.mxu0 0
  %4271 = vmatpush2.bf16.msra.mxu0 0
  %4272 = vmatprep.subr.bf16.mxu0 0
  %4273 = vmatpush2.bf16.msra.mxu0 0
  %4274 = vmatprep.subr.bf16.mxu0 0
  %4275 = vmatpush2.bf16.msra.mxu0 0
  %4276 = vmatprep.subr.bf16.mxu0 0
  %4277 = vmatpush2.bf16.msra.mxu0 0
  %4278 = vmatprep.subr.bf16.mxu0 0
  %4279 = vmatpush2.bf16.msra.mxu0 0
  %4280 = vmatprep.subr.bf16.mxu0 0
  %4281 = vmatpush2.bf16.msra.mxu0 0
  %4282 = vmatprep.subr.bf16.mxu0 0
  %4283 = vmatpush2.bf16.msra.mxu0 0
  %4284 = vmatprep.mubr.bf16.mxu0 0
  %4285 = vmatmul.mubr.bf16.gmra.mxu0 %v4250
  %v4286 = vpop.f32.mrf.mxu0
  %v4287 = vadd.f32 %v4236, %v4286
  %v4288 = vpop.f32.mrf.mxu0
  %v4289 = vpop.f32.mrf.mxu0
  %v4290 = vadd.f32 %v4236, %v4289
  %v4291 = vpop.f32.mrf.mxu0
  %4292 = vdwg.mxu0
  %v4293 = vtanh.pop %v4287
  %v4294 = vtanh.pop %v4290
  %v4295 = vpack.c.bf16 %v4294, %v4293
  %s4296 = scalar_lea.vmem %s8, 32
  %v4297 = vld [vmem:[%s4296] sm:$0xf]
  %v4298 = vld [vmem:[%s4296 + $0x4] sm:$0xf]
  %v4299 = vld [vmem:[%s4296 + $0x8] sm:$0xf]
  %v4300 = vld [vmem:[%s4296 + $0xc] sm:$0xf]
  %v4301 = vlaneseq
  %v4302 = vshrl.u32 %v4301, 7
  %v4303 = vsub.s32 3, %v4302
  %v4304 = vrot.slane %v2921, %v4303
  %v4309 = vunpack.c.l.b16 %v4297
  %v4310 = vunpack.c.l.b16 %v4298
  %v4311 = vunpack.c.l.b16 %v4299
  %v4312 = vunpack.c.l.b16 %v4300
  %v4313 = vpack.c.b16 %v4310, %v4309
  %v4314 = vpack.c.b16 %v4312, %v4311
  %v4318 = vsel %vm41, %v4295, 0
  %4320 = vmatprep.subr.bf16.mxu0 0
  %4321 = vmatpush1.bf16.msra.mxu0 0
  %4322 = vmatprep.subr.bf16.mxu0 0
  %4323 = vmatpush1.bf16.msra.mxu0 0
  %4324 = vmatprep.subr.bf16.mxu0 0
  %4325 = vmatpush1.bf16.msra.mxu0 0
  %4326 = vmatprep.subr.bf16.mxu0 0
  %4327 = vmatpush1.bf16.msra.mxu0 0
  %4328 = vmatprep.subr.bf16.mxu0 0
  %4329 = vmatpush1.bf16.msra.mxu0 0
  %4330 = vmatprep.subr.bf16.mxu0 0
  %4331 = vmatpush1.bf16.msra.mxu0 0
  %4332 = vmatprep.subr.bf16.mxu0 0
  %4333 = vmatpush1.bf16.msra.mxu0 %v4314
  %4334 = vmatprep.subr.bf16.mxu0 0
  %4335 = vmatpush1.bf16.msra.mxu0 %v4313
  %4336 = vmatprep.subr.bf16.mxu0 0
  %4337 = vmatpush2.bf16.msra.mxu0 0
  %4338 = vmatprep.subr.bf16.mxu0 0
  %4339 = vmatpush2.bf16.msra.mxu0 0
  %4340 = vmatprep.subr.bf16.mxu0 0
  %4341 = vmatpush2.bf16.msra.mxu0 0
  %4342 = vmatprep.subr.bf16.mxu0 0
  %4343 = vmatpush2.bf16.msra.mxu0 0
  %4344 = vmatprep.subr.bf16.mxu0 0
  %4345 = vmatpush2.bf16.msra.mxu0 0
  %4346 = vmatprep.subr.bf16.mxu0 0
  %4347 = vmatpush2.bf16.msra.mxu0 0
  %4348 = vmatprep.subr.bf16.mxu0 0
  %4349 = vmatpush2.bf16.msra.mxu0 0
  %4350 = vmatprep.subr.bf16.mxu0 0
  %4351 = vmatpush2.bf16.msra.mxu0 0
  %4352 = vmatprep.mubr.bf16.mxu0 0
  %4353 = vmatmul.mubr.bf16.gmra.mxu0 %v4318
  %v4354 = vpop.f32.mrf.mxu0
  %v4355 = vadd.f32 %v4304, %v4354
  %v4356 = vpop.f32.mrf.mxu0
  %v4357 = vpop.f32.mrf.mxu0
  %v4358 = vadd.f32 %v4304, %v4357
  %v4359 = vpop.f32.mrf.mxu0
  %4360 = vdwg.mxu0
  %s4361 = scalar_lea.vmem %s10, 32
  %4362 = vst [vmem:[%s4361] sm:$0xff] %v4355
  %4363 = vst [vmem:[%s4361 + $0x8] sm:$0xff] %v4358
  // Predicated region
  $region42: #{multiple_bert_forward.1} parent=0 // pred_check
    _
  $region43: #{multiple_bert_forward.1} parent=0 // pred_check_branch
    %4365 = sbr.rel (0) target = $region45
  $region44: #{multiple_bert_forward.1} parent=0 // pred_region
    _
  $region45: #{multiple_bert_forward.1} parent=0 // pred_fallthru
    _
  // Predicated region
  $region46: #{multiple_bert_forward.1} parent=0 // pred_check
    _
  $region47: #{multiple_bert_forward.1} parent=0 // pred_check_branch
    %4367 = sbr.rel (0) target = $region49
  $region48: #{multiple_bert_forward.1} parent=0 // pred_region
    _
  $region49: #{multiple_bert_forward.1} parent=0 // pred_fallthru
    _

</llo_original>
